<compile_context>
chip_gen: v6e
topology: v6e:2x2x1
jax: 0.10.0
libtpu: 0.0.40
codegen_flags: <defaults>
</compile_context>

<pallas_src>
import jax
import jax.numpy as jnp
from jax import lax
from jax.experimental import pallas as pl
from jax.experimental.pallas import tpu as pltpu


# ----------------------------------------------------------------------------
# Kernel: one (batch, row-tile) step of
#   BN1 -> ReLU -> Conv3x3(pad=1, no bias) -> BN2 -> ReLU -> Conv1x1(+bias)
# ----------------------------------------------------------------------------
def _segmenthead_kernel(xm_ref, xt_ref, xb_ref, s1_ref, t1_ref, w1_ref,
                        s2_ref, t2_ref, w2t_ref, b2_ref, out_ref, y_ref):
    # xm_ref : (1, TH, W, Cin) bf16  main TH input rows of this tile
    # xt_ref : (1, 1,  W, Cin) bf16  row above the tile (index clamped at h==0)
    # xb_ref : (1, 1,  W, Cin) bf16  row below the tile (index clamped at last)
    # y_ref  : VMEM scratch (TH+2, W+2, Cin) bf16  padded relu(bn1(x)) window
    # out_ref: (1, Cout, TH*W)       channels-first, lane-dense store
    h = pl.program_id(1)
    last_h = pl.num_programs(1) - 1
    _, TH, W, Cin = xm_ref.shape
    Cmid = w1_ref.shape[1]

    s1 = s1_ref[...]                      # (1, Cin) f32
    t1 = t1_ref[...]

    def bn1_relu(x):
        return jnp.maximum(x.astype(jnp.float32) * s1 + t1,
                           0.0).astype(jnp.bfloat16)

    # Zero pad columns of the window.  Written every step (cheap strided
    # stores) so the kernel stays correct when the "parallel" grid is sharded
    # across v7x TensorCores (no reliance on a one-time init step).
    zero_col = jnp.zeros((TH + 2, Cin), jnp.bfloat16)
    y_ref[:, 0, :] = zero_col
    y_ref[:, W + 1, :] = zero_col

    # Main rows: folded BN1 + ReLU in f32 on the VPU, stored bf16 for the MXU.
    y_ref[1:TH + 1, 1:W + 1, :] = bn1_relu(xm_ref[0])

    # Top / bottom halo rows: real neighbour row, or the conv's zero-pad row at
    # the image border (PyTorch pads AFTER bn1+relu, so the pad value is 0).
    zero_row = jnp.zeros((W, Cin), jnp.bfloat16)

    @pl.when(h == 0)
    def _():
        y_ref[0, 1:W + 1, :] = zero_row

    @pl.when(h != 0)
    def _():
        y_ref[0, 1:W + 1, :] = bn1_relu(xt_ref[0, 0])

    @pl.when(h == last_h)
    def _():
        y_ref[TH + 1, 1:W + 1, :] = zero_row

    @pl.when(h != last_h)
    def _():
        y_ref[TH + 1, 1:W + 1, :] = bn1_relu(xb_ref[0, 0])

    # ---- Conv1 (3x3): 9 accumulating matmuls on shifted views of the window.
    # w1_ref rows are tap-major (dy, dx, cin); f32 accumulation on the MXU.
    acc = jnp.zeros((TH * W, Cmid), jnp.float32)
    for tap in range(9):
        dy, dx = divmod(tap, 3)
        lhs = y_ref[dy:dy + TH, dx:dx + W, :].reshape(TH * W, Cin)
        acc = acc + jnp.dot(lhs, w1_ref[tap * Cin:(tap + 1) * Cin, :],
                            preferred_element_type=jnp.float32)

    # ---- BN2 (folded) + ReLU directly in the (TH*W, Cmid) matmul layout.
    h2 = jnp.maximum(acc * s2_ref[...] + t2_ref[...], 0.0).astype(jnp.bfloat16)

    # ---- Conv2 (1x1 + bias): contract the Cmid axes so the result comes out
    #      as (Cout, TH*W) -- no big f32 transpose on the XLU.
    out = lax.dot_general(w2t_ref[...], h2,
                          dimension_numbers=(((1,), (1,)), ((), ())),
                          preferred_element_type=jnp.float32)
    out_ref[0] = (out + b2_ref[...]).astype(out_ref.dtype)


# ----------------------------------------------------------------------------
# Generation-aware VMEM budgets and tile picker
# ----------------------------------------------------------------------------
def _pad(v, m):
    return -(-v // m) * m


def _vmem_config():
    """Returns (vmem_limit_bytes, per_step_footprint_budget_bytes)."""
    try:
        cap = pltpu.get_tpu_info().vmem_capacity_bytes
    except Exception:
        cap = 64 << 20                      # be conservative (v7x-class)
    if cap <= (64 << 20):                   # v7x: 64 MiB physical VMEM
        return 48 << 20, 20 << 20
    return 80 << 20, 28 << 20               # v5e / v6e: 128 MiB physical VMEM


def _footprint_bytes(TH, W, Cin, Cmid, Cout):
    """Per-step VMEM working set incl. (8,128) lane/sublane padding."""
    ci, cm = _pad(Cin, 128), _pad(Cmid, 128)
    w8, wp8, m8 = _pad(W, 8), _pad(W + 2, 8), _pad(TH * W, 8)
    b = 0
    b += 2 * TH * w8 * ci * 2                     # main input block (2 bufs, bf16)
    b += 2 * 2 * w8 * ci * 2                      # two 1-row halo blocks (2 bufs)
    b += (TH + 2) * wp8 * ci * 2                  # padded activation window scratch
    b += m8 * ci * 2                              # per-tap matmul LHS copy (bf16)
    b += 2 * m8 * cm * 4                          # conv1 acc + bn2/relu result (f32)
    b += 2 * _pad(Cout, 8) * _pad(TH * W, 128) * 4   # output block (2 bufs, f32)
    b += 2 * (_pad(9 * Cin, 8) * cm + _pad(Cout, 8) * cm) * 2   # weights
    return b


def _pick_tile_h(N, H, W, Cin, Cmid, Cout, budget):
    cands = [th for th in range(1, H + 1)
             if H % th == 0 and ((th * W) % 128 == 0 or th == H)]
    fitting = [th for th in cands
               if _footprint_bytes(th, W, Cin, Cmid, Cout) <= budget]
    if not fitting:
        fitting = [min(cands)]
    # v7x megacore: prefer an even total grid so both TensorCores stay busy.
    even = [th for th in fitting if (N * (H // th)) % 2 == 0]
    return max(even) if even else max(fitting)


# ----------------------------------------------------------------------------
# Wrapper (PyTorch-facing: NCHW in, NCHW out)
# ----------------------------------------------------------------------------
def segmenthead_forward_nchw(x_nchw, params, scale_factor=None, tile_h=None):
    N, Cin, H, W = x_nchw.shape
    w1 = params["w1"]                             # (3, 3, Cin, Cmid) HWIO
    Cmid = w1.shape[3]
    w2 = params["w2"]                             # (Cmid, Cout)
    Cout = w2.shape[1]

    vmem_limit, budget = _vmem_config()
    TH = _pick_tile_h(N, H, W, Cin, Cmid, Cout, budget) if tile_h is None else tile_h
    assert H % TH == 0
    nH = H // TH
    assert (TH * W) % 128 == 0 or nH == 1         # lane-dense output blocks

    # Single fused XLA pass: NCHW f32 -> NHWC bf16 (channels on lanes).  No
    # materialized zero-pad copy; halo comes from BlockSpec + in-kernel scratch.
    x_nhwc = jnp.transpose(x_nchw, (0, 2, 3, 1)).astype(jnp.bfloat16)

    w1r = w1.reshape(9 * Cin, Cmid).astype(jnp.bfloat16)   # tap-major im2col weight
    w2t = jnp.transpose(w2).astype(jnp.bfloat16)           # (Cout, Cmid)
    b2 = params["bias2"].reshape(Cout, 1).astype(jnp.float32)

    flops = 2 * N * H * W * (9 * Cin * Cmid + Cmid * Cout)
    bytes_accessed = int(N * H * W * Cin * 2 * (1.0 + 2.0 / TH)   # input + halo rereads
                         + N * Cout * H * W * 4
                         + w1r.size * 2 + w2t.size * 2
                         + (2 * Cin + 2 * Cmid + Cout) * 4)

    # Row-halo index maps on the UNPADDED array: clamp at the image border;
    # the clamped (garbage) row is replaced by the zero pad row in-kernel.
    def top_map(n, h):
        return (n, jnp.maximum(h * TH - 1, 0), 0, 0)

    def bot_map(n, h):
        return (n, jnp.minimum(h * TH + TH, H - 1), 0, 0)

    out_flat = pl.pallas_call(
        _segmenthead_kernel,
        out_shape=jax.ShapeDtypeStruct((N, Cout, H * W), x_nchw.dtype),
        grid_spec=pltpu.PrefetchScalarGridSpec(
            num_scalar_prefetch=0,
            grid=(N, nH),
            in_specs=[
                # main TH rows of this tile
                # TODO(synk): if input DMA shows up exposed after the compute
                # fixes, bump this spec to pipeline_mode=pl.Buffered(3).
                pl.BlockSpec((1, TH, W, Cin), lambda n, h: (n, h, 0, 0)),
                pl.BlockSpec((1, 1, W, Cin), top_map),                # top halo row
                pl.BlockSpec((1, 1, W, Cin), bot_map),                # bottom halo row
                pl.BlockSpec((1, Cin), lambda n, h: (0, 0)),          # bn1 scale
                pl.BlockSpec((1, Cin), lambda n, h: (0, 0)),          # bn1 shift
                pl.BlockSpec((9 * Cin, Cmid), lambda n, h: (0, 0)),   # conv1 W (tap-major)
                pl.BlockSpec((1, Cmid), lambda n, h: (0, 0)),         # bn2 scale
                pl.BlockSpec((1, Cmid), lambda n, h: (0, 0)),         # bn2 shift
                pl.BlockSpec((Cout, Cmid), lambda n, h: (0, 0)),      # conv2 W^T
                pl.BlockSpec((Cout, 1), lambda n, h: (0, 0)),         # conv2 bias
            ],
            out_specs=pl.BlockSpec((1, Cout, TH * W), lambda n, h: (n, 0, h)),
            scratch_shapes=[pltpu.VMEM((TH + 2, W + 2, Cin), jnp.bfloat16)],
        ),
        compiler_params=pltpu.CompilerParams(
            dimension_semantics=("parallel", "parallel"),
            vmem_limit_bytes=vmem_limit),
        cost_estimate=pl.CostEstimate(flops=flops, transcendentals=0,
                                      bytes_accessed=bytes_accessed),
    )(x_nhwc, x_nhwc, x_nhwc, params["s1"], params["t1"], w1r,
      params["s2"], params["t2"], w2t, b2)

    out = out_flat.reshape(N, Cout, H, W)         # already NCHW, no transpose

    if scale_factor is not None:
        # F.interpolate(mode='bilinear', align_corners=False) equivalent.
        # TODO(synk): fuse the bilinear upsample into the kernel epilogue (emit
        # upsampled rows per tile) to avoid this extra HBM round trip.
        out = jax.image.resize(
            out, (N, Cout, H * scale_factor, W * scale_factor), method="bilinear")
    return out


# ----------------------------------------------------------------------------
# Deterministic parameter construction (eval-mode BN folded to scale/shift)
# ----------------------------------------------------------------------------
def make_params(key, inplanes, interplanes, outplanes):
    ks = jax.random.split(key, 12)
    eps = 1e-5

    def fold_bn(kg, kb, km, kv, c):
        gamma = 1.0 + 0.1 * jax.random.normal(kg, (c,), jnp.float32)
        beta = 0.1 * jax.random.normal(kb, (c,), jnp.float32)
        mean = 0.1 * jax.random.normal(km, (c,), jnp.float32)
        var = jax.random.uniform(kv, (c,), jnp.float32, 0.5, 1.5)
        scale = gamma / jnp.sqrt(var + eps)
        shift = beta - mean * scale
        return scale.reshape(1, c), shift.reshape(1, c)

    s1, t1 = fold_bn(ks[0], ks[1], ks[2], ks[3], inplanes)
    s2, t2 = fold_bn(ks[4], ks[5], ks[6], ks[7], interplanes)

    w1 = (jax.random.normal(ks[8], (3, 3, inplanes, interplanes), jnp.float32)
          * (1.0 / jnp.sqrt(9.0 * inplanes)))                  # HWIO
    w2 = (jax.random.normal(ks[9], (interplanes, outplanes), jnp.float32)
          * (1.0 / jnp.sqrt(float(interplanes))))
    bias2 = 0.05 * jax.random.normal(ks[10], (1, outplanes), jnp.float32)

    return {"s1": s1, "t1": t1, "w1": w1,
            "s2": s2, "t2": t2, "w2": w2, "bias2": bias2}


# ----------------------------------------------------------------------------
# Pure-JAX reference (f32, HIGHEST precision) for correctness check
# ----------------------------------------------------------------------------
def reference_forward_nchw(x_nchw, params, scale_factor=None):
    x = jnp.transpose(x_nchw, (0, 2, 3, 1))                    # NHWC
    y = jnp.maximum(x * params["s1"] + params["t1"], 0.0)
    h = lax.conv_general_dilated(
        y, params["w1"], window_strides=(1, 1), padding="SAME",
        dimension_numbers=("NHWC", "HWIO", "NHWC"),
        precision=lax.Precision.HIGHEST)
    h = jnp.maximum(h * params["s2"] + params["t2"], 0.0)
    out = jnp.einsum("nhwc,co->nhwo", h, params["w2"],
                     precision=lax.Precision.HIGHEST) + params["bias2"]
    out = jnp.transpose(out, (0, 3, 1, 2))                     # NCHW
    if scale_factor is not None:
        N, C, H, W = out.shape
        out = jax.image.resize(
            out, (N, C, H * scale_factor, W * scale_factor), method="bilinear")
    return out


if __name__ == "__main__":
    key = jax.random.PRNGKey(0)
    k_x, k_p = jax.random.split(key)

    # Small shapes consistent with the module: inplanes=8, interplanes=16, outplanes=4
    N, Cin, Cmid, Cout, H, W = 2, 8, 16, 4, 16, 16
    x = jax.random.normal(k_x, (N, Cin, H, W), jnp.float32)    # NCHW, like PyTorch
    params = make_params(k_p, Cin, Cmid, Cout)

    # Multi-row-tile path (grid = (N, 2)) exercising the halo logic.
    # bf16 HBM input + bf16 MXU operands (f32 accumulation) -> 3e-2 tolerance
    # vs the pure-f32 reference.
    out = segmenthead_forward_nchw(x, params, scale_factor=None, tile_h=8)
    out = jax.block_until_ready(out)
    ref = reference_forward_nchw(x, params, scale_factor=None)
    assert out.shape == (N, Cout, H, W)
    assert jnp.allclose(out, ref, atol=3e-2, rtol=3e-2), (
        float(jnp.max(jnp.abs(out - ref))))

    # Auto tile pick (single tile here) + bilinear upsample (scale_factor) path.
    out_up = segmenthead_forward_nchw(x, params, scale_factor=2)
    out_up = jax.block_until_ready(out_up)
    ref_up = reference_forward_nchw(x, params, scale_factor=2)
    assert out_up.shape == (N, Cout, 2 * H, 2 * W)
    assert jnp.allclose(out_up, ref_up, atol=3e-2, rtol=3e-2), (
        float(jnp.max(jnp.abs(out_up - ref_up))))

    print("KERNEL_OK")
</pallas_src>

<mosaic_0001>
module attributes {stable_mosaic.version = 11 : i64} {
  func.func @_segmenthead_kernel(%arg0: i32, %arg1: i32, %arg2: memref<1x8x16x8xbf16, #tpu.memory_space<vmem>>, %arg3: memref<1x1x16x8xbf16, #tpu.memory_space<vmem>>, %arg4: memref<1x1x16x8xbf16, #tpu.memory_space<vmem>>, %arg5: memref<1x8xf32, #tpu.memory_space<vmem>>, %arg6: memref<1x8xf32, #tpu.memory_space<vmem>>, %arg7: memref<72x16xbf16, #tpu.memory_space<vmem>>, %arg8: memref<1x16xf32, #tpu.memory_space<vmem>>, %arg9: memref<1x16xf32, #tpu.memory_space<vmem>>, %arg10: memref<4x16xbf16, #tpu.memory_space<vmem>>, %arg11: memref<4x1xf32, #tpu.memory_space<vmem>>, %arg12: memref<1x4x128xf32, #tpu.memory_space<vmem>>, %arg13: memref<10x18x8xbf16, #tpu.memory_space<vmem>>) attributes {dimension_semantics = [#tpu.dimension_semantics<parallel>, #tpu.dimension_semantics<parallel>], iteration_bounds = array<i64: 2, 2>, scalar_prefetch = 0 : i64, scratch_operands = 1 : i64, tpu.core_type = #tpu.core_type<tc>, window_params = [{transform_indices = @transform_0, window_bounds = array<i64: 1, 8, 16, 8>}, {transform_indices = @transform_1, window_bounds = array<i64: 1, 1, 16, 8>}, {transform_indices = @transform_2, window_bounds = array<i64: 1, 1, 16, 8>}, {pipeline_mode = #tpu.pipeline_mode<synchronous>, transform_indices = @transform_3, window_bounds = array<i64: 1, 8>}, {pipeline_mode = #tpu.pipeline_mode<synchronous>, transform_indices = @transform_4, window_bounds = array<i64: 1, 8>}, {pipeline_mode = #tpu.pipeline_mode<synchronous>, transform_indices = @transform_5, window_bounds = array<i64: 72, 16>}, {pipeline_mode = #tpu.pipeline_mode<synchronous>, transform_indices = @transform_6, window_bounds = array<i64: 1, 16>}, {pipeline_mode = #tpu.pipeline_mode<synchronous>, transform_indices = @transform_7, window_bounds = array<i64: 1, 16>}, {pipeline_mode = #tpu.pipeline_mode<synchronous>, transform_indices = @transform_8, window_bounds = array<i64: 4, 16>}, {pipeline_mode = #tpu.pipeline_mode<synchronous>, transform_indices = @transform_9, window_bounds = array<i64: 4, 1>}, {transform_indices = @transform_10, window_bounds = array<i64: 1, 4, 128>}]} {
    %c0 = arith.constant 0 : index
    %c0_0 = arith.constant 0 : index
    %0 = vector.load %arg5[%c0, %c0_0] : memref<1x8xf32, #tpu.memory_space<vmem>>, vector<1x8xf32>
    %c0_1 = arith.constant 0 : index
    %c0_2 = arith.constant 0 : index
    %1 = vector.load %arg6[%c0_1, %c0_2] : memref<1x8xf32, #tpu.memory_space<vmem>>, vector<1x8xf32>
    %cst = arith.constant 0.000000e+00 : bf16
    %2 = vector.broadcast %cst : bf16 to vector<10x8xbf16>
    %c0_3 = arith.constant 0 : index
    %c0_4 = arith.constant 0 : index
    %c0_5 = arith.constant 0 : index
    %3 = vector.load %arg13[%c0_3, %c0_4, %c0_5] : memref<10x18x8xbf16, #tpu.memory_space<vmem>>, vector<10x1x8xbf16>
    %4 = vector.shape_cast %3 : vector<10x1x8xbf16> to vector<10x8xbf16>
    %5 = vector.shape_cast %2 : vector<10x8xbf16> to vector<10x1x8xbf16>
    tpu.vector_store %arg13[%c0_3, %c0_4, %c0_5], %5 {strides = array<i32>} : memref<10x18x8xbf16, #tpu.memory_space<vmem>>, vector<10x1x8xbf16>,
    %c0_6 = arith.constant 0 : index
    %c17 = arith.constant 17 : index
    %c0_7 = arith.constant 0 : index
    %6 = vector.load %arg13[%c0_6, %c17, %c0_7] : memref<10x18x8xbf16, #tpu.memory_space<vmem>>, vector<10x1x8xbf16>
    %7 = vector.shape_cast %6 : vector<10x1x8xbf16> to vector<10x8xbf16>
    %8 = vector.shape_cast %2 : vector<10x8xbf16> to vector<10x1x8xbf16>
    tpu.vector_store %arg13[%c0_6, %c17, %c0_7], %8 {strides = array<i32>} : memref<10x18x8xbf16, #tpu.memory_space<vmem>>, vector<10x1x8xbf16>,
    %c0_8 = arith.constant 0 : index
    %c0_9 = arith.constant 0 : index
    %c0_10 = arith.constant 0 : index
    %c0_11 = arith.constant 0 : index
    %9 = vector.load %arg2[%c0_8, %c0_9, %c0_10, %c0_11] : memref<1x8x16x8xbf16, #tpu.memory_space<vmem>>, vector<1x8x16x8xbf16>
    %10 = vector.shape_cast %9 : vector<1x8x16x8xbf16> to vector<8x16x8xbf16>
    %11 = arith.extf %10 : vector<8x16x8xbf16> to vector<8x16x8xf32>
    %12 = vector.shape_cast %0 : vector<1x8xf32> to vector<1x1x8xf32>
    %13 = vector.broadcast %12 : vector<1x1x8xf32> to vector<8x16x8xf32>
    %14 = arith.mulf %11, %13 : vector<8x16x8xf32>
    %15 = vector.shape_cast %1 : vector<1x8xf32> to vector<1x1x8xf32>
    %16 = vector.broadcast %15 : vector<1x1x8xf32> to vector<8x16x8xf32>
    %17 = arith.addf %14, %16 : vector<8x16x8xf32>
    %cst_12 = arith.constant 0.000000e+00 : f32
    %18 = vector.broadcast %cst_12 : f32 to vector<8x16x8xf32>
    %19 = arith.maximumf %17, %18 : vector<8x16x8xf32>
    %20 = arith.truncf %19 : vector<8x16x8xf32> to vector<8x16x8xbf16>
    %c1 = arith.constant 1 : index
    %c1_13 = arith.constant 1 : index
    %c0_14 = arith.constant 0 : index
    %21 = vector.load %arg13[%c1, %c1_13, %c0_14] : memref<10x18x8xbf16, #tpu.memory_space<vmem>>, vector<8x16x8xbf16>
    tpu.vector_store %arg13[%c1, %c1_13, %c0_14], %20 {strides = array<i32>} : memref<10x18x8xbf16, #tpu.memory_space<vmem>>, vector<8x16x8xbf16>,
    %cst_15 = arith.constant 0.000000e+00 : bf16
    %22 = vector.broadcast %cst_15 : bf16 to vector<16x8xbf16>
    %c0_i32 = arith.constant 0 : i32
    %23 = arith.cmpi eq, %arg1, %c0_i32 : i32
    %24 = arith.extui %23 : i1 to i32
    %c0_i32_16 = arith.constant 0 : i32
    %25 = arith.cmpi ne, %24, %c0_i32_16 : i32
    scf.if %25 {
      %c0_81 = arith.constant 0 : index
      %c1_82 = arith.constant 1 : index
      %c0_83 = arith.constant 0 : index
      %98 = vector.load %arg13[%c0_81, %c1_82, %c0_83] : memref<10x18x8xbf16, #tpu.memory_space<vmem>>, vector<1x16x8xbf16>
      %99 = vector.shape_cast %98 : vector<1x16x8xbf16> to vector<16x8xbf16>
      %100 = vector.shape_cast %22 : vector<16x8xbf16> to vector<1x16x8xbf16>
      tpu.vector_store %arg13[%c0_81, %c1_82, %c0_83], %100 {strides = array<i32>} : memref<10x18x8xbf16, #tpu.memory_space<vmem>>, vector<1x16x8xbf16>,
    } else {
    }
    %c0_i32_17 = arith.constant 0 : i32
    %26 = arith.cmpi ne, %arg1, %c0_i32_17 : i32
    %27 = arith.extui %26 : i1 to i32
    %c0_i32_18 = arith.constant 0 : i32
    %28 = arith.cmpi ne, %27, %c0_i32_18 : i32
    scf.if %28 {
      %c0_81 = arith.constant 0 : index
      %c0_82 = arith.constant 0 : index
      %c0_83 = arith.constant 0 : index
      %c0_84 = arith.constant 0 : index
      %98 = vector.load %arg3[%c0_81, %c0_82, %c0_83, %c0_84] : memref<1x1x16x8xbf16, #tpu.memory_space<vmem>>, vector<1x1x16x8xbf16>
      %99 = vector.shape_cast %98 : vector<1x1x16x8xbf16> to vector<16x8xbf16>
      %100 = arith.extf %99 : vector<16x8xbf16> to vector<16x8xf32>
      %101 = vector.broadcast %0 : vector<1x8xf32> to vector<16x8xf32>
      %102 = arith.mulf %100, %101 : vector<16x8xf32>
      %103 = vector.broadcast %1 : vector<1x8xf32> to vector<16x8xf32>
      %104 = arith.addf %102, %103 : vector<16x8xf32>
      %cst_85 = arith.constant 0.000000e+00 : f32
      %105 = vector.broadcast %cst_85 : f32 to vector<16x8xf32>
      %106 = arith.maximumf %104, %105 : vector<16x8xf32>
      %107 = arith.truncf %106 : vector<16x8xf32> to vector<16x8xbf16>
      %c0_86 = arith.constant 0 : index
      %c1_87 = arith.constant 1 : index
      %c0_88 = arith.constant 0 : index
      %108 = vector.load %arg13[%c0_86, %c1_87, %c0_88] : memref<10x18x8xbf16, #tpu.memory_space<vmem>>, vector<1x16x8xbf16>
      %109 = vector.shape_cast %108 : vector<1x16x8xbf16> to vector<16x8xbf16>
      %110 = vector.shape_cast %107 : vector<16x8xbf16> to vector<1x16x8xbf16>
      tpu.vector_store %arg13[%c0_86, %c1_87, %c0_88], %110 {strides = array<i32>} : memref<10x18x8xbf16, #tpu.memory_space<vmem>>, vector<1x16x8xbf16>,
    } else {
    }
    %c1_i32 = arith.constant 1 : i32
    %29 = arith.cmpi eq, %arg1, %c1_i32 : i32
    %30 = arith.extui %29 : i1 to i32
    %c0_i32_19 = arith.constant 0 : i32
    %31 = arith.cmpi ne, %30, %c0_i32_19 : i32
    scf.if %31 {
      %c9 = arith.constant 9 : index
      %c1_81 = arith.constant 1 : index
      %c0_82 = arith.constant 0 : index
      %98 = vector.load %arg13[%c9, %c1_81, %c0_82] : memref<10x18x8xbf16, #tpu.memory_space<vmem>>, vector<1x16x8xbf16>
      %99 = vector.shape_cast %98 : vector<1x16x8xbf16> to vector<16x8xbf16>
      %100 = vector.shape_cast %22 : vector<16x8xbf16> to vector<1x16x8xbf16>
      tpu.vector_store %arg13[%c9, %c1_81, %c0_82], %100 {strides = array<i32>} : memref<10x18x8xbf16, #tpu.memory_space<vmem>>, vector<1x16x8xbf16>,
    } else {
    }
    %c1_i32_20 = arith.constant 1 : i32
    %32 = arith.cmpi ne, %arg1, %c1_i32_20 : i32
    %33 = arith.extui %32 : i1 to i32
    %c0_i32_21 = arith.constant 0 : i32
    %34 = arith.cmpi ne, %33, %c0_i32_21 : i32
    scf.if %34 {
      %c0_81 = arith.constant 0 : index
      %c0_82 = arith.constant 0 : index
      %c0_83 = arith.constant 0 : index
      %c0_84 = arith.constant 0 : index
      %98 = vector.load %arg4[%c0_81, %c0_82, %c0_83, %c0_84] : memref<1x1x16x8xbf16, #tpu.memory_space<vmem>>, vector<1x1x16x8xbf16>
      %99 = vector.shape_cast %98 : vector<1x1x16x8xbf16> to vector<16x8xbf16>
      %100 = arith.extf %99 : vector<16x8xbf16> to vector<16x8xf32>
      %101 = vector.broadcast %0 : vector<1x8xf32> to vector<16x8xf32>
      %102 = arith.mulf %100, %101 : vector<16x8xf32>
      %103 = vector.broadcast %1 : vector<1x8xf32> to vector<16x8xf32>
      %104 = arith.addf %102, %103 : vector<16x8xf32>
      %cst_85 = arith.constant 0.000000e+00 : f32
      %105 = vector.broadcast %cst_85 : f32 to vector<16x8xf32>
      %106 = arith.maximumf %104, %105 : vector<16x8xf32>
      %107 = arith.truncf %106 : vector<16x8xf32> to vector<16x8xbf16>
      %c9 = arith.constant 9 : index
      %c1_86 = arith.constant 1 : index
      %c0_87 = arith.constant 0 : index
      %108 = vector.load %arg13[%c9, %c1_86, %c0_87] : memref<10x18x8xbf16, #tpu.memory_space<vmem>>, vector<1x16x8xbf16>
      %109 = vector.shape_cast %108 : vector<1x16x8xbf16> to vector<16x8xbf16>
      %110 = vector.shape_cast %107 : vector<16x8xbf16> to vector<1x16x8xbf16>
      tpu.vector_store %arg13[%c9, %c1_86, %c0_87], %110 {strides = array<i32>} : memref<10x18x8xbf16, #tpu.memory_space<vmem>>, vector<1x16x8xbf16>,
    } else {
    }
    %cst_22 = arith.constant 0.000000e+00 : f32
    %35 = vector.broadcast %cst_22 : f32 to vector<128x16xf32>
    %c0_23 = arith.constant 0 : index
    %c0_24 = arith.constant 0 : index
    %c0_25 = arith.constant 0 : index
    %36 = vector.load %arg13[%c0_23, %c0_24, %c0_25] : memref<10x18x8xbf16, #tpu.memory_space<vmem>>, vector<8x16x8xbf16>
    %37 = vector.shape_cast %36 : vector<8x16x8xbf16> to vector<128x8xbf16>
    %c0_26 = arith.constant 0 : index
    %c0_27 = arith.constant 0 : index
    %38 = vector.load %arg7[%c0_26, %c0_27] : memref<72x16xbf16, #tpu.memory_space<vmem>>, vector<8x16xbf16>
    %cst_28 = arith.constant dense<0.000000e+00> : vector<128x16xf32>
    %39 = tpu.matmul %37, %38, %cst_28 {dimension_numbers = #tpu.dot_dimension_numbers<[1], [0], [0], [1], [0, 0, 1, 1], [], []>} : vector<128x8xbf16>, vector<8x16xbf16>, vector<128x16xf32> -> vector<128x16xf32>
    %40 = arith.addf %35, %39 : vector<128x16xf32>
    %c0_29 = arith.constant 0 : index
    %c1_30 = arith.constant 1 : index
    %c0_31 = arith.constant 0 : index
    %41 = vector.load %arg13[%c0_29, %c1_30, %c0_31] : memref<10x18x8xbf16, #tpu.memory_space<vmem>>, vector<8x16x8xbf16>
    %42 = vector.shape_cast %41 : vector<8x16x8xbf16> to vector<128x8xbf16>
    %c8 = arith.constant 8 : index
    %c0_32 = arith.constant 0 : index
    %43 = vector.load %arg7[%c8, %c0_32] : memref<72x16xbf16, #tpu.memory_space<vmem>>, vector<8x16xbf16>
    %cst_33 = arith.constant dense<0.000000e+00> : vector<128x16xf32>
    %44 = tpu.matmul %42, %43, %cst_33 {dimension_numbers = #tpu.dot_dimension_numbers<[1], [0], [0], [1], [0, 0, 1, 1], [], []>} : vector<128x8xbf16>, vector<8x16xbf16>, vector<128x16xf32> -> vector<128x16xf32>
    %45 = arith.addf %40, %44 : vector<128x16xf32>
    %c0_34 = arith.constant 0 : index
    %c2 = arith.constant 2 : index
    %c0_35 = arith.constant 0 : index
    %46 = vector.load %arg13[%c0_34, %c2, %c0_35] : memref<10x18x8xbf16, #tpu.memory_space<vmem>>, vector<8x16x8xbf16>
    %47 = vector.shape_cast %46 : vector<8x16x8xbf16> to vector<128x8xbf16>
    %c16 = arith.constant 16 : index
    %c0_36 = arith.constant 0 : index
    %48 = vector.load %arg7[%c16, %c0_36] : memref<72x16xbf16, #tpu.memory_space<vmem>>, vector<8x16xbf16>
    %cst_37 = arith.constant dense<0.000000e+00> : vector<128x16xf32>
    %49 = tpu.matmul %47, %48, %cst_37 {dimension_numbers = #tpu.dot_dimension_numbers<[1], [0], [0], [1], [0, 0, 1, 1], [], []>} : vector<128x8xbf16>, vector<8x16xbf16>, vector<128x16xf32> -> vector<128x16xf32>
    %50 = arith.addf %45, %49 : vector<128x16xf32>
    %c1_38 = arith.constant 1 : index
    %c0_39 = arith.constant 0 : index
    %c0_40 = arith.constant 0 : index
    %51 = vector.load %arg13[%c1_38, %c0_39, %c0_40] : memref<10x18x8xbf16, #tpu.memory_space<vmem>>, vector<8x16x8xbf16>
    %52 = vector.shape_cast %51 : vector<8x16x8xbf16> to vector<128x8xbf16>
    %c24 = arith.constant 24 : index
    %c0_41 = arith.constant 0 : index
    %53 = vector.load %arg7[%c24, %c0_41] : memref<72x16xbf16, #tpu.memory_space<vmem>>, vector<8x16xbf16>
    %cst_42 = arith.constant dense<0.000000e+00> : vector<128x16xf32>
    %54 = tpu.matmul %52, %53, %cst_42 {dimension_numbers = #tpu.dot_dimension_numbers<[1], [0], [0], [1], [0, 0, 1, 1], [], []>} : vector<128x8xbf16>, vector<8x16xbf16>, vector<128x16xf32> -> vector<128x16xf32>
    %55 = arith.addf %50, %54 : vector<128x16xf32>
    %c1_43 = arith.constant 1 : index
    %c1_44 = arith.constant 1 : index
    %c0_45 = arith.constant 0 : index
    %56 = vector.load %arg13[%c1_43, %c1_44, %c0_45] : memref<10x18x8xbf16, #tpu.memory_space<vmem>>, vector<8x16x8xbf16>
    %57 = vector.shape_cast %56 : vector<8x16x8xbf16> to vector<128x8xbf16>
    %c32 = arith.constant 32 : index
    %c0_46 = arith.constant 0 : index
    %58 = vector.load %arg7[%c32, %c0_46] : memref<72x16xbf16, #tpu.memory_space<vmem>>, vector<8x16xbf16>
    %cst_47 = arith.constant dense<0.000000e+00> : vector<128x16xf32>
    %59 = tpu.matmul %57, %58, %cst_47 {dimension_numbers = #tpu.dot_dimension_numbers<[1], [0], [0], [1], [0, 0, 1, 1], [], []>} : vector<128x8xbf16>, vector<8x16xbf16>, vector<128x16xf32> -> vector<128x16xf32>
    %60 = arith.addf %55, %59 : vector<128x16xf32>
    %c1_48 = arith.constant 1 : index
    %c2_49 = arith.constant 2 : index
    %c0_50 = arith.constant 0 : index
    %61 = vector.load %arg13[%c1_48, %c2_49, %c0_50] : memref<10x18x8xbf16, #tpu.memory_space<vmem>>, vector<8x16x8xbf16>
    %62 = vector.shape_cast %61 : vector<8x16x8xbf16> to vector<128x8xbf16>
    %c40 = arith.constant 40 : index
    %c0_51 = arith.constant 0 : index
    %63 = vector.load %arg7[%c40, %c0_51] : memref<72x16xbf16, #tpu.memory_space<vmem>>, vector<8x16xbf16>
    %cst_52 = arith.constant dense<0.000000e+00> : vector<128x16xf32>
    %64 = tpu.matmul %62, %63, %cst_52 {dimension_numbers = #tpu.dot_dimension_numbers<[1], [0], [0], [1], [0, 0, 1, 1], [], []>} : vector<128x8xbf16>, vector<8x16xbf16>, vector<128x16xf32> -> vector<128x16xf32>
    %65 = arith.addf %60, %64 : vector<128x16xf32>
    %c2_53 = arith.constant 2 : index
    %c0_54 = arith.constant 0 : index
    %c0_55 = arith.constant 0 : index
    %66 = vector.load %arg13[%c2_53, %c0_54, %c0_55] : memref<10x18x8xbf16, #tpu.memory_space<vmem>>, vector<8x16x8xbf16>
    %67 = vector.shape_cast %66 : vector<8x16x8xbf16> to vector<128x8xbf16>
    %c48 = arith.constant 48 : index
    %c0_56 = arith.constant 0 : index
    %68 = vector.load %arg7[%c48, %c0_56] : memref<72x16xbf16, #tpu.memory_space<vmem>>, vector<8x16xbf16>
    %cst_57 = arith.constant dense<0.000000e+00> : vector<128x16xf32>
    %69 = tpu.matmul %67, %68, %cst_57 {dimension_numbers = #tpu.dot_dimension_numbers<[1], [0], [0], [1], [0, 0, 1, 1], [], []>} : vector<128x8xbf16>, vector<8x16xbf16>, vector<128x16xf32> -> vector<128x16xf32>
    %70 = arith.addf %65, %69 : vector<128x16xf32>
    %c2_58 = arith.constant 2 : index
    %c1_59 = arith.constant 1 : index
    %c0_60 = arith.constant 0 : index
    %71 = vector.load %arg13[%c2_58, %c1_59, %c0_60] : memref<10x18x8xbf16, #tpu.memory_space<vmem>>, vector<8x16x8xbf16>
    %72 = vector.shape_cast %71 : vector<8x16x8xbf16> to vector<128x8xbf16>
    %c56 = arith.constant 56 : index
    %c0_61 = arith.constant 0 : index
    %73 = vector.load %arg7[%c56, %c0_61] : memref<72x16xbf16, #tpu.memory_space<vmem>>, vector<8x16xbf16>
    %cst_62 = arith.constant dense<0.000000e+00> : vector<128x16xf32>
    %74 = tpu.matmul %72, %73, %cst_62 {dimension_numbers = #tpu.dot_dimension_numbers<[1], [0], [0], [1], [0, 0, 1, 1], [], []>} : vector<128x8xbf16>, vector<8x16xbf16>, vector<128x16xf32> -> vector<128x16xf32>
    %75 = arith.addf %70, %74 : vector<128x16xf32>
    %c2_63 = arith.constant 2 : index
    %c2_64 = arith.constant 2 : index
    %c0_65 = arith.constant 0 : index
    %76 = vector.load %arg13[%c2_63, %c2_64, %c0_65] : memref<10x18x8xbf16, #tpu.memory_space<vmem>>, vector<8x16x8xbf16>
    %77 = vector.shape_cast %76 : vector<8x16x8xbf16> to vector<128x8xbf16>
    %c64 = arith.constant 64 : index
    %c0_66 = arith.constant 0 : index
    %78 = vector.load %arg7[%c64, %c0_66] : memref<72x16xbf16, #tpu.memory_space<vmem>>, vector<8x16xbf16>
    %cst_67 = arith.constant dense<0.000000e+00> : vector<128x16xf32>
    %79 = tpu.matmul %77, %78, %cst_67 {dimension_numbers = #tpu.dot_dimension_numbers<[1], [0], [0], [1], [0, 0, 1, 1], [], []>} : vector<128x8xbf16>, vector<8x16xbf16>, vector<128x16xf32> -> vector<128x16xf32>
    %80 = arith.addf %75, %79 : vector<128x16xf32>
    %c0_68 = arith.constant 0 : index
    %c0_69 = arith.constant 0 : index
    %81 = vector.load %arg8[%c0_68, %c0_69] : memref<1x16xf32, #tpu.memory_space<vmem>>, vector<1x16xf32>
    %82 = vector.broadcast %81 : vector<1x16xf32> to vector<128x16xf32>
    %83 = arith.mulf %80, %82 : vector<128x16xf32>
    %c0_70 = arith.constant 0 : index
    %c0_71 = arith.constant 0 : index
    %84 = vector.load %arg9[%c0_70, %c0_71] : memref<1x16xf32, #tpu.memory_space<vmem>>, vector<1x16xf32>
    %85 = vector.broadcast %84 : vector<1x16xf32> to vector<128x16xf32>
    %86 = arith.addf %83, %85 : vector<128x16xf32>
    %cst_72 = arith.constant 0.000000e+00 : f32
    %87 = vector.broadcast %cst_72 : f32 to vector<128x16xf32>
    %88 = arith.maximumf %86, %87 : vector<128x16xf32>
    %89 = arith.truncf %88 : vector<128x16xf32> to vector<128x16xbf16>
    %c0_73 = arith.constant 0 : index
    %c0_74 = arith.constant 0 : index
    %90 = vector.load %arg10[%c0_73, %c0_74] : memref<4x16xbf16, #tpu.memory_space<vmem>>, vector<4x16xbf16>
    %cst_75 = arith.constant dense<0.000000e+00> : vector<4x128xf32>
    %91 = tpu.matmul %90, %89, %cst_75 {dimension_numbers = #tpu.dot_dimension_numbers<[1], [1], [0], [0], [0, 0, 1, 0], [], []>} : vector<4x16xbf16>, vector<128x16xbf16>, vector<4x128xf32> -> vector<4x128xf32>
    %c0_76 = arith.constant 0 : index
    %c0_77 = arith.constant 0 : index
    %92 = vector.load %arg11[%c0_76, %c0_77] : memref<4x1xf32, #tpu.memory_space<vmem>>, vector<4x1xf32>
    %93 = vector.broadcast %92 : vector<4x1xf32> to vector<4x128xf32>
    %94 = arith.addf %91, %93 : vector<4x128xf32>
    %c0_78 = arith.constant 0 : index
    %c0_79 = arith.constant 0 : index
    %c0_80 = arith.constant 0 : index
    %95 = vector.load %arg12[%c0_78, %c0_79, %c0_80] : memref<1x4x128xf32, #tpu.memory_space<vmem>>, vector<1x4x128xf32>
    %96 = vector.shape_cast %95 : vector<1x4x128xf32> to vector<4x128xf32>
    %97 = vector.shape_cast %94 : vector<4x128xf32> to vector<1x4x128xf32>
    tpu.vector_store %arg12[%c0_78, %c0_79, %c0_80], %97 {strides = array<i32>} : memref<1x4x128xf32, #tpu.memory_space<vmem>>, vector<1x4x128xf32>,
    return
  }
  func.func @transform_0(%arg0: i32, %arg1: i32) -> (i32, i32, i32, i32) {
    %c0_i32 = arith.constant 0 : i32
    %c0_i32_0 = arith.constant 0 : i32
    %c0_i32_1 = arith.constant 0 : i32
    return %arg0, %arg1, %c0_i32, %c0_i32_0 : i32, i32, i32, i32
  }
  func.func @transform_1(%arg0: i32, %arg1: i32) -> (i32, i32, i32, i32) {
    %c8_i32 = arith.constant 8 : i32
    %0 = arith.muli %arg1, %c8_i32 : i32
    %c1_i32 = arith.constant 1 : i32
    %1 = arith.subi %0, %c1_i32 : i32
    %c0_i32 = arith.constant 0 : i32
    %2 = arith.maxsi %1, %c0_i32 : i32
    %c0_i32_0 = arith.constant 0 : i32
    %c0_i32_1 = arith.constant 0 : i32
    %c0_i32_2 = arith.constant 0 : i32
    return %arg0, %2, %c0_i32_0, %c0_i32_1 : i32, i32, i32, i32
  }
  func.func @transform_2(%arg0: i32, %arg1: i32) -> (i32, i32, i32, i32) {
    %c8_i32 = arith.constant 8 : i32
    %0 = arith.muli %arg1, %c8_i32 : i32
    %c8_i32_0 = arith.constant 8 : i32
    %1 = arith.addi %0, %c8_i32_0 : i32
    %c15_i32 = arith.constant 15 : i32
    %2 = arith.minsi %1, %c15_i32 : i32
    %c0_i32 = arith.constant 0 : i32
    %c0_i32_1 = arith.constant 0 : i32
    %c0_i32_2 = arith.constant 0 : i32
    return %arg0, %2, %c0_i32, %c0_i32_1 : i32, i32, i32, i32
  }
  func.func @transform_3(%arg0: i32, %arg1: i32) -> (i32, i32) {
    %c0_i32 = arith.constant 0 : i32
    %c0_i32_0 = arith.constant 0 : i32
    %c0_i32_1 = arith.constant 0 : i32
    return %c0_i32, %c0_i32_0 : i32, i32
  }
  func.func @transform_4(%arg0: i32, %arg1: i32) -> (i32, i32) {
    %c0_i32 = arith.constant 0 : i32
    %c0_i32_0 = arith.constant 0 : i32
    %c0_i32_1 = arith.constant 0 : i32
    return %c0_i32, %c0_i32_0 : i32, i32
  }
  func.func @transform_5(%arg0: i32, %arg1: i32) -> (i32, i32) {
    %c0_i32 = arith.constant 0 : i32
    %c0_i32_0 = arith.constant 0 : i32
    %c0_i32_1 = arith.constant 0 : i32
    return %c0_i32, %c0_i32_0 : i32, i32
  }
  func.func @transform_6(%arg0: i32, %arg1: i32) -> (i32, i32) {
    %c0_i32 = arith.constant 0 : i32
    %c0_i32_0 = arith.constant 0 : i32
    %c0_i32_1 = arith.constant 0 : i32
    return %c0_i32, %c0_i32_0 : i32, i32
  }
  func.func @transform_7(%arg0: i32, %arg1: i32) -> (i32, i32) {
    %c0_i32 = arith.constant 0 : i32
    %c0_i32_0 = arith.constant 0 : i32
    %c0_i32_1 = arith.constant 0 : i32
    return %c0_i32, %c0_i32_0 : i32, i32
  }
  func.func @transform_8(%arg0: i32, %arg1: i32) -> (i32, i32) {
    %c0_i32 = arith.constant 0 : i32
    %c0_i32_0 = arith.constant 0 : i32
    %c0_i32_1 = arith.constant 0 : i32
    return %c0_i32, %c0_i32_0 : i32, i32
  }
  func.func @transform_9(%arg0: i32, %arg1: i32) -> (i32, i32) {
    %c0_i32 = arith.constant 0 : i32
    %c0_i32_0 = arith.constant 0 : i32
    %c0_i32_1 = arith.constant 0 : i32
    return %c0_i32, %c0_i32_0 : i32, i32
  }
  func.func @transform_10(%arg0: i32, %arg1: i32) -> (i32, i32, i32) {
    %c0_i32 = arith.constant 0 : i32
    %c0_i32_0 = arith.constant 0 : i32
    return %arg0, %c0_i32, %arg1 : i32, i32, i32
  }
}

</mosaic_0001>

<llo_original>
// kernel: tpu_custom_call.1
$region0: #{tpu_custom_call.1}
  #allocation0 [shape = 'u32[]', space=smem, size = 0x4, offset = 0x4, fixed_abs, tag = 'smem constant byte address 0x4 - core index']
  #allocation1 [shape = 'u32[144,128]{1,0:T(1,128)}', space=vmem, size = 0x12000, scoped, tag = 'internal scratch']
  #allocation2 [shape = 'bf16[10,18,8]{2,1,0:T(8,128)(2,1)}', space=vmem, size = 0xf000, scoped, tag = 'scratch operand']
  %s0 = inlined_call_operand.vmem [shape: bf16[2,16,16,8], index: 0, kind: input, shape index: {}]
  %s1 = inlined_call_operand.vmem [shape: bf16[2,16,16,8], index: 1, kind: input, shape index: {}]
  %s2 = inlined_call_operand.vmem [shape: bf16[2,16,16,8], index: 2, kind: input, shape index: {}]
  %s3 = inlined_call_operand.vmem [shape: f32[1,8], index: 3, kind: input, shape index: {}]
  %s4 = inlined_call_operand.vmem [shape: f32[1,8], index: 4, kind: input, shape index: {}]
  %s5 = inlined_call_operand.vmem [shape: bf16[72,16], index: 5, kind: input, shape index: {}]
  %s6 = inlined_call_operand.vmem [shape: f32[1,16], index: 6, kind: input, shape index: {}]
  %s7 = inlined_call_operand.vmem [shape: f32[1,16], index: 7, kind: input, shape index: {}]
  %s8 = inlined_call_operand.vmem [shape: bf16[4,16], index: 8, kind: input, shape index: {}]
  %s9 = inlined_call_operand.vmem [shape: f32[4,1], index: 9, kind: input, shape index: {}]
  %s10 = inlined_call_operand.hbm [shape: f32[2,4,256], index: 10, kind: output, shape index: {}]
  %s11 = sld [smem:[#allocation0]]
  $region89: #{tpu_custom_call.1} parent=0
    _
  %s13 = ssub.s32 1, %s11
  %s14 = scalar_select 0, %s13, %s11
  $region1: #{tpu_custom_call.1} parent=0
    #allocation3 [shape = 'u8[4096]{0}', space=vmem, size = 0x1000, scoped, tag = 'output window, operand 0']
    #allocation4 [shape = 's32[2]{0}', space=sflag, size = 0x8, scoped, tag = 'scoped memory for tpu_custom_call.1']
    %15 = vsyncpa [#allocation4], 0
    %s16 = scalar_lea.sflag [#allocation4], 1
    %17 = vsyncpa %s16, 0
    loop: start=0, step=1, limit=6
    $region2: #{tpu_custom_call.1} parent=1 // loop_pre_header
      _
    $region3: #{tpu_custom_call.1} parent=1 // loop_header
      %s19 = sphi 0, %s23
      %p20 = scmp.ge.s32.totalorder %s19, 6
      %s26 = sphi 0, %s38
      %s27 = sphi 0, %s34
      %s28 = sphi 0, %s26
      %s29 = sphi 0, %s27
      %s30 = sphi 0, %s28
      %s31 = sphi 0, %s29
      %s43 = sphi 0, %s45
      %s46 = sphi 0, %s43
      %s47 = sphi 0, %s46
      %s63 = sphi 0, %s47
      %s79 = sphi 0, %s81
      %s82 = sphi 0, %s79
      %s83 = sphi 0, %s82
      %s99 = sphi 0, %s83
      %s115 = sphi 0, %s117
      %s118 = sphi 0, %s115
      %s119 = sphi 0, %s118
      %s135 = sphi 0, %s119
      %s139 = sphi 0, %s139
      %s141 = sphi 0, %s139
      %s142 = sphi 0, %s141
      %s156 = sphi 0, %s142
      %s160 = sphi 0, %s160
      %s162 = sphi 0, %s160
      %s163 = sphi 0, %s162
      %s177 = sphi 0, %s163
      %s181 = sphi 0, %s181
      %s183 = sphi 0, %s181
      %s184 = sphi 0, %s183
      %s198 = sphi 0, %s184
      %s202 = sphi 0, %s202
      %s204 = sphi 0, %s202
      %s205 = sphi 0, %s204
      %s219 = sphi 0, %s205
      %s223 = sphi 0, %s223
      %s225 = sphi 0, %s223
      %s226 = sphi 0, %s225
      %s240 = sphi 0, %s226
      %s244 = sphi 0, %s244
      %s246 = sphi 0, %s244
      %s247 = sphi 0, %s246
      %s261 = sphi 0, %s247
      %s265 = sphi 0, %s265
      %s267 = sphi 0, %s265
      %s268 = sphi 0, %s267
      %s282 = sphi 0, %s268
      %s290 = sphi 0, %s292
      %s293 = sphi 0, %s290
      %s294 = sphi 0, %s293
      %s310 = sphi 0, %s294
    $region4: #{tpu_custom_call.1} parent=1 // loop_header_branch
      %22 = sbr.rel (%p20) target = $region8
    $region5: #{tpu_custom_call.1} parent=1 // loop_body
      %s24 = ssub.s32 %s19, 1
      %s25 = ssub.s32 %s19, 2
      %s32 = sadd.s32 1, %s27
      %p33 = scmp.ge.s32.totalorder %s32, 2
      %s34 = scalar_select %p33, 0, %s32
      %s35 = sadd.s32 1, %s26
      %s36 = scalar_select %p33, %s35, %s26
      %p37 = scmp.ge.s32.totalorder %s36, 2
      %s38 = scalar_select %p37, 0, %s36
      %s39 = ssub.s32 %s26, %s38
      %s40 = ssub.s32 %s27, %s34
      %s41 = sor.u32 %s39, %s40
      %p42 = scmp.eq.s32.totalorder %s41, 0
      %s44 = sadd.s32 %s43, 1
      %s45 = scalar_select %p42, %s43, %s44
      %p48 = pneg %p42
      %p49 = scmp.eq.s32.totalorder %s19, 3
      %p50 = por %p48, %p49
      %p51 = scmp.ne.s32.totalorder %s43, %s46
      %p52 = scmp.eq.s32.totalorder %s19, 0
      %p53 = por %p51, %p52
      %p54 = scmp.ne.s32.totalorder %s43, %s46
      %p55 = scmp.eq.s32.totalorder %s24, 3
      %p56 = por %p54, %p55
      %p57 = scmp.ne.s32.totalorder %s46, %s47
      %p58 = scmp.eq.s32.totalorder %s24, 0
      %p59 = por %p57, %p58
      %p60 = scmp.ne.s32.totalorder %s46, %s47
      %p61 = scmp.eq.s32.totalorder %s25, 3
      %p62 = por %p60, %p61
      %p64 = scmp.ne.s32.totalorder %s47, %s63
      %p65 = scmp.eq.s32.totalorder %s25, 0
      %p66 = por %p64, %p65
      %s67 = smul.u32 %s27, 8
      %s68 = ssub.s32 %s67, 1
      %p69 = scmp.gt.s32.totalorder %s68, 0
      %s70 = scalar_select %p69, %s68, 0
      %s71 = smul.u32 %s34, 8
      %s72 = ssub.s32 %s71, 1
      %p73 = scmp.gt.s32.totalorder %s72, 0
      %s74 = scalar_select %p73, %s72, 0
      %s75 = ssub.s32 %s26, %s38
      %s76 = ssub.s32 %s70, %s74
      %s77 = sor.u32 %s75, %s76
      %p78 = scmp.eq.s32.totalorder %s77, 0
      %s80 = sadd.s32 %s79, 1
      %s81 = scalar_select %p78, %s79, %s80
      %p84 = pneg %p78
      %p85 = scmp.eq.s32.totalorder %s19, 3
      %p86 = por %p84, %p85
      %p87 = scmp.ne.s32.totalorder %s79, %s82
      %p88 = scmp.eq.s32.totalorder %s19, 0
      %p89 = por %p87, %p88
      %p90 = scmp.ne.s32.totalorder %s79, %s82
      %p91 = scmp.eq.s32.totalorder %s24, 3
      %p92 = por %p90, %p91
      %p93 = scmp.ne.s32.totalorder %s82, %s83
      %p94 = scmp.eq.s32.totalorder %s24, 0
      %p95 = por %p93, %p94
      %p96 = scmp.ne.s32.totalorder %s82, %s83
      %p97 = scmp.eq.s32.totalorder %s25, 3
      %p98 = por %p96, %p97
      %p100 = scmp.ne.s32.totalorder %s83, %s99
      %p101 = scmp.eq.s32.totalorder %s25, 0
      %p102 = por %p100, %p101
      %s103 = smul.u32 %s27, 8
      %s104 = sadd.s32 %s103, 8
      %p105 = scmp.lt.s32.totalorder %s104, 15
      %s106 = scalar_select %p105, %s104, 15
      %s107 = smul.u32 %s34, 8
      %s108 = sadd.s32 %s107, 8
      %p109 = scmp.lt.s32.totalorder %s108, 15
      %s110 = scalar_select %p109, %s108, 15
      %s111 = ssub.s32 %s26, %s38
      %s112 = ssub.s32 %s106, %s110
      %s113 = sor.u32 %s111, %s112
      %p114 = scmp.eq.s32.totalorder %s113, 0
      %s116 = sadd.s32 %s115, 1
      %s117 = scalar_select %p114, %s115, %s116
      %p120 = pneg %p114
      %p121 = scmp.eq.s32.totalorder %s19, 3
      %p122 = por %p120, %p121
      %p123 = scmp.ne.s32.totalorder %s115, %s118
      %p124 = scmp.eq.s32.totalorder %s19, 0
      %p125 = por %p123, %p124
      %p126 = scmp.ne.s32.totalorder %s115, %s118
      %p127 = scmp.eq.s32.totalorder %s24, 3
      %p128 = por %p126, %p127
      %p129 = scmp.ne.s32.totalorder %s118, %s119
      %p130 = scmp.eq.s32.totalorder %s24, 0
      %p131 = por %p129, %p130
      %p132 = scmp.ne.s32.totalorder %s118, %s119
      %p133 = scmp.eq.s32.totalorder %s25, 3
      %p134 = por %p132, %p133
      %p136 = scmp.ne.s32.totalorder %s119, %s135
      %p137 = scmp.eq.s32.totalorder %s25, 0
      %p138 = por %p136, %p137
      %s140 = sadd.s32 %s139, 1
      %p143 = scmp.eq.s32.totalorder %s19, 3
      %p144 = scmp.ne.s32.totalorder %s139, %s141
      %p145 = scmp.eq.s32.totalorder %s19, 0
      %p146 = por %p144, %p145
      %p147 = scmp.ne.s32.totalorder %s139, %s141
      %p148 = scmp.eq.s32.totalorder %s24, 3
      %p149 = por %p147, %p148
      %p150 = scmp.ne.s32.totalorder %s141, %s142
      %p151 = scmp.eq.s32.totalorder %s24, 0
      %p152 = por %p150, %p151
      %p153 = scmp.ne.s32.totalorder %s141, %s142
      %p154 = scmp.eq.s32.totalorder %s25, 3
      %p155 = por %p153, %p154
      %p157 = scmp.ne.s32.totalorder %s142, %s156
      %p158 = scmp.eq.s32.totalorder %s25, 0
      %p159 = por %p157, %p158
      %s161 = sadd.s32 %s160, 1
      %p164 = scmp.eq.s32.totalorder %s19, 3
      %p165 = scmp.ne.s32.totalorder %s160, %s162
      %p166 = scmp.eq.s32.totalorder %s19, 0
      %p167 = por %p165, %p166
      %p168 = scmp.ne.s32.totalorder %s160, %s162
      %p169 = scmp.eq.s32.totalorder %s24, 3
      %p170 = por %p168, %p169
      %p171 = scmp.ne.s32.totalorder %s162, %s163
      %p172 = scmp.eq.s32.totalorder %s24, 0
      %p173 = por %p171, %p172
      %p174 = scmp.ne.s32.totalorder %s162, %s163
      %p175 = scmp.eq.s32.totalorder %s25, 3
      %p176 = por %p174, %p175
      %p178 = scmp.ne.s32.totalorder %s163, %s177
      %p179 = scmp.eq.s32.totalorder %s25, 0
      %p180 = por %p178, %p179
      %s182 = sadd.s32 %s181, 1
      %p185 = scmp.eq.s32.totalorder %s19, 3
      %p186 = scmp.ne.s32.totalorder %s181, %s183
      %p187 = scmp.eq.s32.totalorder %s19, 0
      %p188 = por %p186, %p187
      %p189 = scmp.ne.s32.totalorder %s181, %s183
      %p190 = scmp.eq.s32.totalorder %s24, 3
      %p191 = por %p189, %p190
      %p192 = scmp.ne.s32.totalorder %s183, %s184
      %p193 = scmp.eq.s32.totalorder %s24, 0
      %p194 = por %p192, %p193
      %p195 = scmp.ne.s32.totalorder %s183, %s184
      %p196 = scmp.eq.s32.totalorder %s25, 3
      %p197 = por %p195, %p196
      %p199 = scmp.ne.s32.totalorder %s184, %s198
      %p200 = scmp.eq.s32.totalorder %s25, 0
      %p201 = por %p199, %p200
      %s203 = sadd.s32 %s202, 1
      %p206 = scmp.eq.s32.totalorder %s19, 3
      %p207 = scmp.ne.s32.totalorder %s202, %s204
      %p208 = scmp.eq.s32.totalorder %s19, 0
      %p209 = por %p207, %p208
      %p210 = scmp.ne.s32.totalorder %s202, %s204
      %p211 = scmp.eq.s32.totalorder %s24, 3
      %p212 = por %p210, %p211
      %p213 = scmp.ne.s32.totalorder %s204, %s205
      %p214 = scmp.eq.s32.totalorder %s24, 0
      %p215 = por %p213, %p214
      %p216 = scmp.ne.s32.totalorder %s204, %s205
      %p217 = scmp.eq.s32.totalorder %s25, 3
      %p218 = por %p216, %p217
      %p220 = scmp.ne.s32.totalorder %s205, %s219
      %p221 = scmp.eq.s32.totalorder %s25, 0
      %p222 = por %p220, %p221
      %s224 = sadd.s32 %s223, 1
      %p227 = scmp.eq.s32.totalorder %s19, 3
      %p228 = scmp.ne.s32.totalorder %s223, %s225
      %p229 = scmp.eq.s32.totalorder %s19, 0
      %p230 = por %p228, %p229
      %p231 = scmp.ne.s32.totalorder %s223, %s225
      %p232 = scmp.eq.s32.totalorder %s24, 3
      %p233 = por %p231, %p232
      %p234 = scmp.ne.s32.totalorder %s225, %s226
      %p235 = scmp.eq.s32.totalorder %s24, 0
      %p236 = por %p234, %p235
      %p237 = scmp.ne.s32.totalorder %s225, %s226
      %p238 = scmp.eq.s32.totalorder %s25, 3
      %p239 = por %p237, %p238
      %p241 = scmp.ne.s32.totalorder %s226, %s240
      %p242 = scmp.eq.s32.totalorder %s25, 0
      %p243 = por %p241, %p242
      %s245 = sadd.s32 %s244, 1
      %p248 = scmp.eq.s32.totalorder %s19, 3
      %p249 = scmp.ne.s32.totalorder %s244, %s246
      %p250 = scmp.eq.s32.totalorder %s19, 0
      %p251 = por %p249, %p250
      %p252 = scmp.ne.s32.totalorder %s244, %s246
      %p253 = scmp.eq.s32.totalorder %s24, 3
      %p254 = por %p252, %p253
      %p255 = scmp.ne.s32.totalorder %s246, %s247
      %p256 = scmp.eq.s32.totalorder %s24, 0
      %p257 = por %p255, %p256
      %p258 = scmp.ne.s32.totalorder %s246, %s247
      %p259 = scmp.eq.s32.totalorder %s25, 3
      %p260 = por %p258, %p259
      %p262 = scmp.ne.s32.totalorder %s247, %s261
      %p263 = scmp.eq.s32.totalorder %s25, 0
      %p264 = por %p262, %p263
      %s266 = sadd.s32 %s265, 1
      %p269 = scmp.eq.s32.totalorder %s19, 3
      %p270 = scmp.ne.s32.totalorder %s265, %s267
      %p271 = scmp.eq.s32.totalorder %s19, 0
      %p272 = por %p270, %p271
      %p273 = scmp.ne.s32.totalorder %s265, %s267
      %p274 = scmp.eq.s32.totalorder %s24, 3
      %p275 = por %p273, %p274
      %p276 = scmp.ne.s32.totalorder %s267, %s268
      %p277 = scmp.eq.s32.totalorder %s24, 0
      %p278 = por %p276, %p277
      %p279 = scmp.ne.s32.totalorder %s267, %s268
      %p280 = scmp.eq.s32.totalorder %s25, 3
      %p281 = por %p279, %p280
      %p283 = scmp.ne.s32.totalorder %s268, %s282
      %p284 = scmp.eq.s32.totalorder %s25, 0
      %p285 = por %p283, %p284
      %s286 = ssub.s32 %s26, %s38
      %s287 = ssub.s32 %s27, %s34
      %s288 = sor.u32 %s286, %s287
      %p289 = scmp.eq.s32.totalorder %s288, 0
      %s291 = sadd.s32 %s290, 1
      %s292 = scalar_select %p289, %s290, %s291
      %p295 = pneg %p289
      %p296 = scmp.eq.s32.totalorder %s19, 3
      %p297 = por %p295, %p296
      %p298 = scmp.ne.s32.totalorder %s290, %s293
      %p299 = scmp.eq.s32.totalorder %s19, 0
      %p300 = por %p298, %p299
      %p301 = scmp.ne.s32.totalorder %s290, %s293
      %p302 = scmp.eq.s32.totalorder %s24, 3
      %p303 = por %p301, %p302
      %p304 = scmp.ne.s32.totalorder %s293, %s294
      %p305 = scmp.eq.s32.totalorder %s24, 0
      %p306 = por %p304, %p305
      %p307 = scmp.ne.s32.totalorder %s293, %s294
      %p308 = scmp.eq.s32.totalorder %s25, 3
      %p309 = por %p307, %p308
      %p311 = scmp.ne.s32.totalorder %s294, %s310
      %p312 = scmp.eq.s32.totalorder %s25, 0
      %p313 = por %p311, %p312
      %p314 = scmp.le.s32.totalorder 1, %s19
      %p315 = scmp.lt.s32.totalorder %s19, 5
      %p316 = pnand %p314, %p315
      %p317 = pneg %p316
      // Predicated region
      $region9: #{tpu_custom_call.1} parent=5 // pred_check
        _
      $region10: #{tpu_custom_call.1} parent=5 // pred_check_branch
        %319 = sbr.rel (%p316) target = $region12
      $region11: #{tpu_custom_call.1} parent=5 // pred_region
        %s320 = ssub.s32 %s19, 1
        // Predicated region
        $region13: #{tpu_custom_call.1} parent=11 // pred_check
          %p321 = pneg %p152
        $region14: #{tpu_custom_call.1} parent=11 // pred_check_branch
          %323 = sbr.rel (%p321) target = $region16
        $region15: #{tpu_custom_call.1} parent=11 // pred_region
          _
        $region16: #{tpu_custom_call.1} parent=11 // pred_fallthru
          _
        // Predicated region
        $region17: #{tpu_custom_call.1} parent=11 // pred_check
          %p324 = pneg %p173
        $region18: #{tpu_custom_call.1} parent=11 // pred_check_branch
          %326 = sbr.rel (%p324) target = $region20
        $region19: #{tpu_custom_call.1} parent=11 // pred_region
          _
        $region20: #{tpu_custom_call.1} parent=11 // pred_fallthru
          _
        // Predicated region
        $region21: #{tpu_custom_call.1} parent=11 // pred_check
          %p327 = pneg %p194
        $region22: #{tpu_custom_call.1} parent=11 // pred_check_branch
          %329 = sbr.rel (%p327) target = $region24
        $region23: #{tpu_custom_call.1} parent=11 // pred_region
          _
        $region24: #{tpu_custom_call.1} parent=11 // pred_fallthru
          _
        // Predicated region
        $region25: #{tpu_custom_call.1} parent=11 // pred_check
          %p330 = pneg %p215
        $region26: #{tpu_custom_call.1} parent=11 // pred_check_branch
          %332 = sbr.rel (%p330) target = $region28
        $region27: #{tpu_custom_call.1} parent=11 // pred_region
          _
        $region28: #{tpu_custom_call.1} parent=11 // pred_fallthru
          _
        // Predicated region
        $region29: #{tpu_custom_call.1} parent=11 // pred_check
          %p333 = pneg %p236
        $region30: #{tpu_custom_call.1} parent=11 // pred_check_branch
          %335 = sbr.rel (%p333) target = $region32
        $region31: #{tpu_custom_call.1} parent=11 // pred_region
          _
        $region32: #{tpu_custom_call.1} parent=11 // pred_fallthru
          _
        // Predicated region
        $region33: #{tpu_custom_call.1} parent=11 // pred_check
          %p336 = pneg %p257
        $region34: #{tpu_custom_call.1} parent=11 // pred_check_branch
          %338 = sbr.rel (%p336) target = $region36
        $region35: #{tpu_custom_call.1} parent=11 // pred_region
          _
        $region36: #{tpu_custom_call.1} parent=11 // pred_fallthru
          _
        // Predicated region
        $region37: #{tpu_custom_call.1} parent=11 // pred_check
          %p339 = pneg %p278
        $region38: #{tpu_custom_call.1} parent=11 // pred_check_branch
          %341 = sbr.rel (%p339) target = $region40
        $region39: #{tpu_custom_call.1} parent=11 // pred_region
          _
        $region40: #{tpu_custom_call.1} parent=11 // pred_fallthru
          _
      $region12: #{tpu_custom_call.1} parent=5 // pred_fallthru
        _
      %p342 = scmp.lt.s32.totalorder %s19, 4
      // Predicated region
      $region41: #{tpu_custom_call.1} parent=5 // pred_check
        %p343 = pneg %p342
      $region42: #{tpu_custom_call.1} parent=5 // pred_check_branch
        %345 = sbr.rel (%p343) target = $region44
      $region43: #{tpu_custom_call.1} parent=5 // pred_region
        // Predicated region
        $region45: #{tpu_custom_call.1} parent=43 // pred_check
          %p346 = pneg %p53
        $region46: #{tpu_custom_call.1} parent=43 // pred_check_branch
          %348 = sbr.rel (%p346) target = $region48
        $region47: #{tpu_custom_call.1} parent=43 // pred_region
          %s349 = smul.u32 8, %s27
          %p350 = scmp.lt.s32.totalorder %s26, 1
          %s351 = scalar_select %p350, %s26, 1
          %p352 = scmp.lt.s32.totalorder %s349, 15
          %s353 = scalar_select %p352, %s349, 15
          %s354 = smul.addr %s353, 2
          %s355 = smul.addr %s351, 32
          %s356 = sadd.s32 %s354, %s355
          %s357 = smul.addr %s356, 4
          %s358 = scalar_lea.vmem %s0, %s357
          %s359 = smul.u32 8, %s27
        $region48: #{tpu_custom_call.1} parent=43 // pred_fallthru
          _
        // Predicated region
        $region49: #{tpu_custom_call.1} parent=43 // pred_check
          %p360 = pneg %p89
        $region50: #{tpu_custom_call.1} parent=43 // pred_check_branch
          %362 = sbr.rel (%p360) target = $region52
        $region51: #{tpu_custom_call.1} parent=43 // pred_region
          %s363 = smul.u32 %s27, 8
          %s364 = ssub.s32 %s363, 1
          %p365 = scmp.gt.s32.totalorder %s364, 0
          %s366 = scalar_select %p365, %s364, 0
          %p367 = scmp.lt.s32.totalorder %s26, 1
          %s368 = scalar_select %p367, %s26, 1
          %p369 = scmp.lt.s32.totalorder %s366, 15
          %s370 = scalar_select %p369, %s366, 15
          %s371 = smul.addr %s370, 2
          %s372 = smul.addr %s368, 32
          %s373 = sadd.s32 %s371, %s372
          %s374 = smul.addr %s373, 4
          %s375 = scalar_lea.vmem %s1, %s374
          %s376 = smul.u32 %s27, 8
          %s377 = ssub.s32 %s376, 1
          %p378 = scmp.gt.s32.totalorder %s377, 0
          %s379 = scalar_select %p378, %s377, 0
        $region52: #{tpu_custom_call.1} parent=43 // pred_fallthru
          _
        // Predicated region
        $region53: #{tpu_custom_call.1} parent=43 // pred_check
          %p380 = pneg %p125
        $region54: #{tpu_custom_call.1} parent=43 // pred_check_branch
          %382 = sbr.rel (%p380) target = $region56
        $region55: #{tpu_custom_call.1} parent=43 // pred_region
          %s383 = smul.u32 %s27, 8
          %s384 = sadd.s32 %s383, 8
          %p385 = scmp.lt.s32.totalorder %s384, 15
          %s386 = scalar_select %p385, %s384, 15
          %p387 = scmp.lt.s32.totalorder %s26, 1
          %s388 = scalar_select %p387, %s26, 1
          %p389 = scmp.lt.s32.totalorder %s386, 15
          %s390 = scalar_select %p389, %s386, 15
          %s391 = smul.addr %s390, 2
          %s392 = smul.addr %s388, 32
          %s393 = sadd.s32 %s391, %s392
          %s394 = smul.addr %s393, 4
          %s395 = scalar_lea.vmem %s2, %s394
          %s396 = smul.u32 %s27, 8
          %s397 = sadd.s32 %s396, 8
          %p398 = scmp.lt.s32.totalorder %s397, 15
          %s399 = scalar_select %p398, %s397, 15
        $region56: #{tpu_custom_call.1} parent=43 // pred_fallthru
          _
      $region44: #{tpu_custom_call.1} parent=5 // pred_fallthru
        _
      %p400 = scmp.le.s32.totalorder 1, %s19
      %p401 = scmp.lt.s32.totalorder %s19, 5
      %p402 = pnand %p400, %p401
      %p403 = pneg %p402
      // Predicated region
      $region57: #{tpu_custom_call.1} parent=5 // pred_check
        _
      $region58: #{tpu_custom_call.1} parent=5 // pred_check_branch
        %405 = sbr.rel (%p402) target = $region60
      $region59: #{tpu_custom_call.1} parent=5 // pred_region
        %s406 = ssub.s32 %s19, 1
        %s407 = smul.u32 8, %s29
        %p408 = scmp.lt.s32.totalorder %s28, 1
        %s409 = scalar_select %p408, %s28, 1
        %p410 = scmp.lt.s32.totalorder %s407, 15
        %s411 = scalar_select %p410, %s407, 15
        %s412 = smul.addr %s411, 2
        %s413 = smul.addr %s409, 32
        %s414 = sadd.s32 %s412, %s413
        %s415 = smul.addr %s414, 4
        %s416 = scalar_lea.vmem %s0, %s415
        %p417 = pneg %p59
        %p418 = pneg %p56
        %s419 = smul.u32 %s29, 8
        %s420 = ssub.s32 %s419, 1
        %p421 = scmp.gt.s32.totalorder %s420, 0
        %s422 = scalar_select %p421, %s420, 0
        %p423 = scmp.lt.s32.totalorder %s28, 1
        %s424 = scalar_select %p423, %s28, 1
        %p425 = scmp.lt.s32.totalorder %s422, 15
        %s426 = scalar_select %p425, %s422, 15
        %s427 = smul.addr %s426, 2
        %s428 = smul.addr %s424, 32
        %s429 = sadd.s32 %s427, %s428
        %s430 = smul.addr %s429, 4
        %s431 = scalar_lea.vmem %s1, %s430
        %p432 = pneg %p95
        %p433 = pneg %p92
        %s434 = smul.u32 %s29, 8
        %s435 = sadd.s32 %s434, 8
        %p436 = scmp.lt.s32.totalorder %s435, 15
        %s437 = scalar_select %p436, %s435, 15
        %p438 = scmp.lt.s32.totalorder %s28, 1
        %s439 = scalar_select %p438, %s28, 1
        %p440 = scmp.lt.s32.totalorder %s437, 15
        %s441 = scalar_select %p440, %s437, 15
        %s442 = smul.addr %s441, 2
        %s443 = smul.addr %s439, 32
        %s444 = sadd.s32 %s442, %s443
        %s445 = smul.addr %s444, 4
        %s446 = scalar_lea.vmem %s2, %s445
        %p447 = pneg %p131
        %p448 = pneg %p128
        %p449 = pneg %p152
        %p450 = pneg %p149
        %p451 = pneg %p173
        %p452 = pneg %p170
        %p453 = pneg %p194
        %p454 = pneg %p191
        %p455 = pneg %p215
        %p456 = pneg %p212
        %p457 = pneg %p236
        %p458 = pneg %p233
        %p459 = pneg %p257
        %p460 = pneg %p254
        %p461 = pneg %p278
        %p462 = pneg %p275
        %p463 = pneg %p306
        %p464 = pneg %p303
        %s465 = sand.u32 %s293, 1
        %s466 = scalar_lea.sflag [#allocation4], %s465
        %s467 = sand.u32 %s293, 1
        %s468 = smul.addr %s467, 4
        %s469 = scalar_lea.vmem [#allocation3], %s468
        %s470 = smul.u32 8, %s29
        %p471 = scmp.lt.s32.totalorder %s28, 1
        %s472 = scalar_select %p471, %s28, 1
        %p473 = scmp.lt.s32.totalorder %s470, 15
        %s474 = scalar_select %p473, %s470, 15
        %s475 = smul.addr %s474, 2
        %s476 = smul.addr %s472, 32
        %s477 = sadd.s32 %s475, %s476
        %s478 = smul.addr %s477, 4
        %s479 = scalar_lea.vmem %s0, %s478
        %s480 = smul.u32 8, %s29
        %s481 = smul.u32 %s29, 8
        %s482 = ssub.s32 %s481, 1
        %p483 = scmp.gt.s32.totalorder %s482, 0
        %s484 = scalar_select %p483, %s482, 0
        %p485 = scmp.lt.s32.totalorder %s28, 1
        %s486 = scalar_select %p485, %s28, 1
        %p487 = scmp.lt.s32.totalorder %s484, 15
        %s488 = scalar_select %p487, %s484, 15
        %s489 = smul.addr %s488, 2
        %s490 = smul.addr %s486, 32
        %s491 = sadd.s32 %s489, %s490
        %s492 = smul.addr %s491, 4
        %s493 = scalar_lea.vmem %s1, %s492
        %s494 = smul.u32 %s29, 8
        %s495 = ssub.s32 %s494, 1
        %p496 = scmp.gt.s32.totalorder %s495, 0
        %s497 = scalar_select %p496, %s495, 0
        %s498 = smul.u32 %s29, 8
        %s499 = sadd.s32 %s498, 8
        %p500 = scmp.lt.s32.totalorder %s499, 15
        %s501 = scalar_select %p500, %s499, 15
        %p502 = scmp.lt.s32.totalorder %s28, 1
        %s503 = scalar_select %p502, %s28, 1
        %p504 = scmp.lt.s32.totalorder %s501, 15
        %s505 = scalar_select %p504, %s501, 15
        %s506 = smul.addr %s505, 2
        %s507 = smul.addr %s503, 32
        %s508 = sadd.s32 %s506, %s507
        %s509 = smul.addr %s508, 4
        %s510 = scalar_lea.vmem %s2, %s509
        %s511 = smul.u32 %s29, 8
        %s512 = sadd.s32 %s511, 8
        %p513 = scmp.lt.s32.totalorder %s512, 15
        %s514 = scalar_select %p513, %s512, 15
        %v516 = vld [vmem:[%s3] sm:$0x1]
        %v517 = vld [vmem:[%s4] sm:$0x1]
        %vm518 = vcmask 57344
        %vm519 = vsmask.f32 256
        %vm520 = vmand %vm518, %vm519
        %v521 = vld [vmem:[#allocation2] sm:$0x1]
        %v522 = vsel %vm520, 0, %v521
        %523 = vst [vmem:[#allocation2] sm:$0x1] %v522
        %v524 = vld [vmem:[#allocation2 + $0xc] sm:$0x1]
        %v525 = vsel %vm520, 0, %v524
        %526 = vst [vmem:[#allocation2 + $0xc] sm:$0x1] %v525
        %v527 = vld [vmem:[#allocation2 + $0x18] sm:$0x1]
        %v528 = vsel %vm520, 0, %v527
        %529 = vst [vmem:[#allocation2 + $0x18] sm:$0x1] %v528
        %v530 = vld [vmem:[#allocation2 + $0x24] sm:$0x1]
        %v531 = vsel %vm520, 0, %v530
        %532 = vst [vmem:[#allocation2 + $0x24] sm:$0x1] %v531
        %v533 = vld [vmem:[#allocation2 + $0x30] sm:$0x1]
        %v534 = vsel %vm520, 0, %v533
        %535 = vst [vmem:[#allocation2 + $0x30] sm:$0x1] %v534
        %v536 = vld [vmem:[#allocation2 + $0x3c] sm:$0x1]
        %v537 = vsel %vm520, 0, %v536
        %538 = vst [vmem:[#allocation2 + $0x3c] sm:$0x1] %v537
        %v539 = vld [vmem:[#allocation2 + $0x48] sm:$0x1]
        %v540 = vsel %vm520, 0, %v539
        %541 = vst [vmem:[#allocation2 + $0x48] sm:$0x1] %v540
        %v542 = vld [vmem:[#allocation2 + $0x54] sm:$0x1]
        %v543 = vsel %vm520, 0, %v542
        %544 = vst [vmem:[#allocation2 + $0x54] sm:$0x1] %v543
        %v545 = vld [vmem:[#allocation2 + $0x60] sm:$0x1]
        %v546 = vsel %vm520, 0, %v545
        %547 = vst [vmem:[#allocation2 + $0x60] sm:$0x1] %v546
        %v548 = vld [vmem:[#allocation2 + $0x6c] sm:$0x1]
        %v549 = vsel %vm520, 0, %v548
        %550 = vst [vmem:[#allocation2 + $0x6c] sm:$0x1] %v549
        %vm551 = vsmask.f32 7938
        %vm552 = vmand %vm518, %vm551
        %v553 = vld [vmem:[#allocation2 + $0x8] sm:$0x1]
        %v554 = vsel %vm552, 0, %v553
        %555 = vst [vmem:[#allocation2 + $0x8] sm:$0x1] %v554
        %v556 = vld [vmem:[#allocation2 + $0x14] sm:$0x1]
        %v557 = vsel %vm552, 0, %v556
        %558 = vst [vmem:[#allocation2 + $0x14] sm:$0x1] %v557
        %v559 = vld [vmem:[#allocation2 + $0x20] sm:$0x1]
        %v560 = vsel %vm552, 0, %v559
        %561 = vst [vmem:[#allocation2 + $0x20] sm:$0x1] %v560
        %v562 = vld [vmem:[#allocation2 + $0x2c] sm:$0x1]
        %v563 = vsel %vm552, 0, %v562
        %564 = vst [vmem:[#allocation2 + $0x2c] sm:$0x1] %v563
        %v565 = vld [vmem:[#allocation2 + $0x38] sm:$0x1]
        %v566 = vsel %vm552, 0, %v565
        %567 = vst [vmem:[#allocation2 + $0x38] sm:$0x1] %v566
        %v568 = vld [vmem:[#allocation2 + $0x44] sm:$0x1]
        %v569 = vsel %vm552, 0, %v568
        %570 = vst [vmem:[#allocation2 + $0x44] sm:$0x1] %v569
        %v571 = vld [vmem:[#allocation2 + $0x50] sm:$0x1]
        %v572 = vsel %vm552, 0, %v571
        %573 = vst [vmem:[#allocation2 + $0x50] sm:$0x1] %v572
        %v574 = vld [vmem:[#allocation2 + $0x5c] sm:$0x1]
        %v575 = vsel %vm552, 0, %v574
        %576 = vst [vmem:[#allocation2 + $0x5c] sm:$0x1] %v575
        %v577 = vld [vmem:[#allocation2 + $0x68] sm:$0x1]
        %v578 = vsel %vm552, 0, %v577
        %579 = vst [vmem:[#allocation2 + $0x68] sm:$0x1] %v578
        %v580 = vld [vmem:[#allocation2 + $0x74] sm:$0x1]
        %v581 = vsel %vm552, 0, %v580
        %582 = vst [vmem:[#allocation2 + $0x74] sm:$0x1] %v581
        %v583 = vld [vmem:[%s479] sm:$0xf]
        %v584 = vld [vmem:[%s479 + $0x4] sm:$0xf]
        %v585 = vld [vmem:[%s479 + $0x8] sm:$0xf]
        %v586 = vld [vmem:[%s479 + $0xc] sm:$0xf]
        %v587 = vld [vmem:[%s479 + $0x10] sm:$0xf]
        %v588 = vld [vmem:[%s479 + $0x14] sm:$0xf]
        %v589 = vld [vmem:[%s479 + $0x18] sm:$0xf]
        %v590 = vld [vmem:[%s479 + $0x1c] sm:$0xf]
        %v591 = vld [vmem:[%s479 + $0x20] sm:$0xf]
        %v592 = vld [vmem:[%s479 + $0x24] sm:$0xf]
        %v593 = vld [vmem:[%s479 + $0x28] sm:$0xf]
        %v594 = vld [vmem:[%s479 + $0x2c] sm:$0xf]
        %v595 = vld [vmem:[%s479 + $0x30] sm:$0xf]
        %v596 = vld [vmem:[%s479 + $0x34] sm:$0xf]
        %v597 = vld [vmem:[%s479 + $0x38] sm:$0xf]
        %v598 = vld [vmem:[%s479 + $0x3c] sm:$0xf]
        %v599 = vunpack.c.l.bf16 %v583
        %v600 = vunpack.c.l.bf16 %v584
        %v601 = vunpack.c.l.bf16 %v585
        %v602 = vunpack.c.l.bf16 %v586
        %v603 = vunpack.c.l.bf16 %v587
        %v604 = vunpack.c.l.bf16 %v588
        %v605 = vunpack.c.l.bf16 %v589
        %v606 = vunpack.c.l.bf16 %v590
        %v607 = vunpack.c.l.bf16 %v591
        %v608 = vunpack.c.l.bf16 %v592
        %v609 = vunpack.c.l.bf16 %v593
        %v610 = vunpack.c.l.bf16 %v594
        %v611 = vunpack.c.l.bf16 %v595
        %v612 = vunpack.c.l.bf16 %v596
        %v613 = vunpack.c.l.bf16 %v597
        %v614 = vunpack.c.l.bf16 %v598
        %v616 = vlaneseq
        %v617 = vshrl.u32 %v616, 7
        %v618 = vsub.s32 0, %v617
        %v619 = vrot.slane %v516, %v618
        %v621 = vmul.f32 %v599, %v619
        %v622 = vmul.f32 %v600, %v619
        %v623 = vmul.f32 %v601, %v619
        %v624 = vmul.f32 %v602, %v619
        %v625 = vmul.f32 %v603, %v619
        %v626 = vmul.f32 %v604, %v619
        %v627 = vmul.f32 %v605, %v619
        %v628 = vmul.f32 %v606, %v619
        %v629 = vmul.f32 %v607, %v619
        %v630 = vmul.f32 %v608, %v619
        %v631 = vmul.f32 %v609, %v619
        %v632 = vmul.f32 %v610, %v619
        %v633 = vmul.f32 %v611, %v619
        %v634 = vmul.f32 %v612, %v619
        %v635 = vmul.f32 %v613, %v619
        %v636 = vmul.f32 %v614, %v619
        %v638 = vlaneseq
        %v639 = vshrl.u32 %v638, 7
        %v640 = vsub.s32 0, %v639
        %v641 = vrot.slane %v517, %v640
        %v643 = vadd.f32 %v621, %v641
        %v644 = vadd.f32 %v622, %v641
        %v645 = vadd.f32 %v623, %v641
        %v646 = vadd.f32 %v624, %v641
        %v647 = vadd.f32 %v625, %v641
        %v648 = vadd.f32 %v626, %v641
        %v649 = vadd.f32 %v627, %v641
        %v650 = vadd.f32 %v628, %v641
        %v651 = vadd.f32 %v629, %v641
        %v652 = vadd.f32 %v630, %v641
        %v653 = vadd.f32 %v631, %v641
        %v654 = vadd.f32 %v632, %v641
        %v655 = vadd.f32 %v633, %v641
        %v656 = vadd.f32 %v634, %v641
        %v657 = vadd.f32 %v635, %v641
        %v658 = vadd.f32 %v636, %v641
        %v659 = vmax.f32 %v643, 0.0
        %v660 = vmax.f32 %v644, 0.0
        %v661 = vmax.f32 %v645, 0.0
        %v662 = vmax.f32 %v646, 0.0
        %v663 = vmax.f32 %v647, 0.0
        %v664 = vmax.f32 %v648, 0.0
        %v665 = vmax.f32 %v649, 0.0
        %v666 = vmax.f32 %v650, 0.0
        %v667 = vmax.f32 %v651, 0.0
        %v668 = vmax.f32 %v652, 0.0
        %v669 = vmax.f32 %v653, 0.0
        %v670 = vmax.f32 %v654, 0.0
        %v671 = vmax.f32 %v655, 0.0
        %v672 = vmax.f32 %v656, 0.0
        %v673 = vmax.f32 %v657, 0.0
        %v674 = vmax.f32 %v658, 0.0
        %v675 = vpack.c.bf16 %v660, %v659
        %v676 = vpack.c.bf16 %v662, %v661
        %v677 = vpack.c.bf16 %v664, %v663
        %v678 = vpack.c.bf16 %v666, %v665
        %v679 = vpack.c.bf16 %v668, %v667
        %v680 = vpack.c.bf16 %v670, %v669
        %v681 = vpack.c.bf16 %v672, %v671
        %v682 = vpack.c.bf16 %v674, %v673
        %v691 = vunpack.c.l.b16 %v675
        %v692 = vunpack.c.h.b16 %v675
        %v693 = vunpack.c.l.b16 %v676
        %v694 = vunpack.c.h.b16 %v676
        %v695 = vunpack.c.l.b16 %v677
        %v696 = vunpack.c.h.b16 %v677
        %v697 = vunpack.c.l.b16 %v678
        %v698 = vunpack.c.h.b16 %v678
        %v699 = vunpack.c.l.b16 %v679
        %v700 = vunpack.c.h.b16 %v679
        %v701 = vunpack.c.l.b16 %v680
        %v702 = vunpack.c.h.b16 %v680
        %v703 = vunpack.c.l.b16 %v681
        %v704 = vunpack.c.h.b16 %v681
        %v705 = vunpack.c.l.b16 %v682
        %v706 = vunpack.c.h.b16 %v682
        %v707 = vpack.c.b16 %v691, %v691
        %v708 = vpack.c.b16 %v692, %v692
        %v709 = vpack.c.b16 %v693, %v693
        %v710 = vpack.c.b16 %v694, %v694
        %v711 = vpack.c.b16 %v695, %v695
        %v712 = vpack.c.b16 %v696, %v696
        %v713 = vpack.c.b16 %v697, %v697
        %v714 = vpack.c.b16 %v698, %v698
        %v715 = vpack.c.b16 %v699, %v699
        %v716 = vpack.c.b16 %v700, %v700
        %v717 = vpack.c.b16 %v701, %v701
        %v718 = vpack.c.b16 %v702, %v702
        %v719 = vpack.c.b16 %v703, %v703
        %v720 = vpack.c.b16 %v704, %v704
        %v721 = vpack.c.b16 %v705, %v705
        %v722 = vpack.c.b16 %v706, %v706
        %vm723 = vsmask.f32 4368
        %vm724 = vmor %vm519, %vm723
        %v726 = vshrl.u32 %v707, 16
        %v728 = vrot.slane %v726, 7
        %v729 = vshll.u32 %v707, 16
        %v731 = vor.u32 %v728, %v729
        %v732 = vrot.slane %v728, 4
        %v734 = vshrl.u32 %v708, 16
        %v736 = vrot.slane %v734, 7
        %v737 = vshll.u32 %v708, 16
        %v739 = vor.u32 %v736, %v737
        %v740 = vsel %vm724, %v732, %v739
        %v741 = vrot.slane %v736, 4
        %v743 = vshrl.u32 %v709, 16
        %v745 = vrot.slane %v743, 7
        %v746 = vshll.u32 %v709, 16
        %v748 = vor.u32 %v745, %v746
        %v749 = vrot.slane %v745, 4
        %v751 = vshrl.u32 %v710, 16
        %v753 = vrot.slane %v751, 7
        %v754 = vshll.u32 %v710, 16
        %v756 = vor.u32 %v753, %v754
        %v757 = vsel %vm724, %v749, %v756
        %v758 = vrot.slane %v753, 4
        %v760 = vshrl.u32 %v711, 16
        %v762 = vrot.slane %v760, 7
        %v763 = vshll.u32 %v711, 16
        %v765 = vor.u32 %v762, %v763
        %v766 = vrot.slane %v762, 4
        %v768 = vshrl.u32 %v712, 16
        %v770 = vrot.slane %v768, 7
        %v771 = vshll.u32 %v712, 16
        %v773 = vor.u32 %v770, %v771
        %v774 = vsel %vm724, %v766, %v773
        %v775 = vrot.slane %v770, 4
        %v777 = vshrl.u32 %v713, 16
        %v779 = vrot.slane %v777, 7
        %v780 = vshll.u32 %v713, 16
        %v782 = vor.u32 %v779, %v780
        %v783 = vrot.slane %v779, 4
        %v785 = vshrl.u32 %v714, 16
        %v787 = vrot.slane %v785, 7
        %v788 = vshll.u32 %v714, 16
        %v790 = vor.u32 %v787, %v788
        %v791 = vsel %vm724, %v783, %v790
        %v792 = vrot.slane %v787, 4
        %v794 = vshrl.u32 %v715, 16
        %v796 = vrot.slane %v794, 7
        %v797 = vshll.u32 %v715, 16
        %v799 = vor.u32 %v796, %v797
        %v800 = vrot.slane %v796, 4
        %v802 = vshrl.u32 %v716, 16
        %v804 = vrot.slane %v802, 7
        %v805 = vshll.u32 %v716, 16
        %v807 = vor.u32 %v804, %v805
        %v808 = vsel %vm724, %v800, %v807
        %v809 = vrot.slane %v804, 4
        %v811 = vshrl.u32 %v717, 16
        %v813 = vrot.slane %v811, 7
        %v814 = vshll.u32 %v717, 16
        %v816 = vor.u32 %v813, %v814
        %v817 = vrot.slane %v813, 4
        %v819 = vshrl.u32 %v718, 16
        %v821 = vrot.slane %v819, 7
        %v822 = vshll.u32 %v718, 16
        %v824 = vor.u32 %v821, %v822
        %v825 = vsel %vm724, %v817, %v824
        %v826 = vrot.slane %v821, 4
        %v828 = vshrl.u32 %v719, 16
        %v830 = vrot.slane %v828, 7
        %v831 = vshll.u32 %v719, 16
        %v833 = vor.u32 %v830, %v831
        %v834 = vrot.slane %v830, 4
        %v836 = vshrl.u32 %v720, 16
        %v838 = vrot.slane %v836, 7
        %v839 = vshll.u32 %v720, 16
        %v841 = vor.u32 %v838, %v839
        %v842 = vsel %vm724, %v834, %v841
        %v843 = vrot.slane %v838, 4
        %v845 = vshrl.u32 %v721, 16
        %v847 = vrot.slane %v845, 7
        %v848 = vshll.u32 %v721, 16
        %v850 = vor.u32 %v847, %v848
        %v851 = vrot.slane %v847, 4
        %v853 = vshrl.u32 %v722, 16
        %v855 = vrot.slane %v853, 7
        %v856 = vshll.u32 %v722, 16
        %v858 = vor.u32 %v855, %v856
        %v859 = vsel %vm724, %v851, %v858
        %v860 = vrot.slane %v855, 4
        %s885 = scalar_lea.vmem [#allocation2], 12
        %vm886 = vcmask 60416
        %vm887 = vmand %vm886, %vm551
        %v888 = vld [vmem:[%s885] sm:$0xf]
        %v889 = vsel %vm887, %v731, %v888
        %890 = vst [vmem:[%s885] sm:$0xf] %v889
        %vm891 = vcmask 60416
        %892 = vst.msk [vmem:[%s885 + $0x4] sm:$0xf] %vm891, %v740
        %v893 = vld [vmem:[%s885 + $0x8] sm:$0x1]
        %v894 = vsel %vm520, %v741, %v893
        %895 = vst [vmem:[%s885 + $0x8] sm:$0x1] %v894
        %v896 = vld [vmem:[%s885 + $0xc] sm:$0xf]
        %v897 = vsel %vm887, %v748, %v896
        %898 = vst [vmem:[%s885 + $0xc] sm:$0xf] %v897
        %899 = vst.msk [vmem:[%s885 + $0x10] sm:$0xf] %vm891, %v757
        %v900 = vld [vmem:[%s885 + $0x14] sm:$0x1]
        %v901 = vsel %vm520, %v758, %v900
        %902 = vst [vmem:[%s885 + $0x14] sm:$0x1] %v901
        %v903 = vld [vmem:[%s885 + $0x18] sm:$0xf]
        %v904 = vsel %vm887, %v765, %v903
        %905 = vst [vmem:[%s885 + $0x18] sm:$0xf] %v904
        %906 = vst.msk [vmem:[%s885 + $0x1c] sm:$0xf] %vm891, %v774
        %v907 = vld [vmem:[%s885 + $0x20] sm:$0x1]
        %v908 = vsel %vm520, %v775, %v907
        %909 = vst [vmem:[%s885 + $0x20] sm:$0x1] %v908
        %v910 = vld [vmem:[%s885 + $0x24] sm:$0xf]
        %v911 = vsel %vm887, %v782, %v910
        %912 = vst [vmem:[%s885 + $0x24] sm:$0xf] %v911
        %913 = vst.msk [vmem:[%s885 + $0x28] sm:$0xf] %vm891, %v791
        %v914 = vld [vmem:[%s885 + $0x2c] sm:$0x1]
        %v915 = vsel %vm520, %v792, %v914
        %916 = vst [vmem:[%s885 + $0x2c] sm:$0x1] %v915
        %v917 = vld [vmem:[%s885 + $0x30] sm:$0xf]
        %v918 = vsel %vm887, %v799, %v917
        %919 = vst [vmem:[%s885 + $0x30] sm:$0xf] %v918
        %920 = vst.msk [vmem:[%s885 + $0x34] sm:$0xf] %vm891, %v808
        %v921 = vld [vmem:[%s885 + $0x38] sm:$0x1]
        %v922 = vsel %vm520, %v809, %v921
        %923 = vst [vmem:[%s885 + $0x38] sm:$0x1] %v922
        %v924 = vld [vmem:[%s885 + $0x3c] sm:$0xf]
        %v925 = vsel %vm887, %v816, %v924
        %926 = vst [vmem:[%s885 + $0x3c] sm:$0xf] %v925
        %927 = vst.msk [vmem:[%s885 + $0x40] sm:$0xf] %vm891, %v825
        %v928 = vld [vmem:[%s885 + $0x44] sm:$0x1]
        %v929 = vsel %vm520, %v826, %v928
        %930 = vst [vmem:[%s885 + $0x44] sm:$0x1] %v929
        %v931 = vld [vmem:[%s885 + $0x48] sm:$0xf]
        %v932 = vsel %vm887, %v833, %v931
        %933 = vst [vmem:[%s885 + $0x48] sm:$0xf] %v932
        %934 = vst.msk [vmem:[%s885 + $0x4c] sm:$0xf] %vm891, %v842
        %v935 = vld [vmem:[%s885 + $0x50] sm:$0x1]
        %v936 = vsel %vm520, %v843, %v935
        %937 = vst [vmem:[%s885 + $0x50] sm:$0x1] %v936
        %v938 = vld [vmem:[%s885 + $0x54] sm:$0xf]
        %v939 = vsel %vm887, %v850, %v938
        %940 = vst [vmem:[%s885 + $0x54] sm:$0xf] %v939
        %941 = vst.msk [vmem:[%s885 + $0x58] sm:$0xf] %vm891, %v859
        %v942 = vld [vmem:[%s885 + $0x5c] sm:$0x1]
        %v943 = vsel %vm520, %v860, %v942
        %944 = vst [vmem:[%s885 + $0x5c] sm:$0x1] %v943
        %p945 = scmp.eq.s32.totalorder %s29, 0
        // Predicated region
        $region61: #{tpu_custom_call.1} parent=59 // pred_check
          %p946 = pneg %p945
        $region62: #{tpu_custom_call.1} parent=59 // pred_check_branch
          %948 = sbr.rel (%p946) target = $region64
        $region63: #{tpu_custom_call.1} parent=59 // pred_region
          %v949 = vld [vmem:[#allocation2] sm:$0xf]
          %v950 = vsel %vm887, 0, %v949
          %951 = vst [vmem:[#allocation2] sm:$0xf] %v950
          %952 = vst.msk [vmem:[#allocation2 + $0x4] sm:$0xf] %vm891, 0
          %v953 = vld [vmem:[#allocation2 + $0x8] sm:$0x1]
          %v954 = vsel %vm520, 0, %v953
          %955 = vst [vmem:[#allocation2 + $0x8] sm:$0x1] %v954
        $region64: #{tpu_custom_call.1} parent=59 // pred_fallthru
          _
        %p956 = scmp.ne.s32.totalorder %s29, 0
        // Predicated region
        $region65: #{tpu_custom_call.1} parent=59 // pred_check
          %p957 = pneg %p956
        $region66: #{tpu_custom_call.1} parent=59 // pred_check_branch
          %959 = sbr.rel (%p957) target = $region68
        $region67: #{tpu_custom_call.1} parent=59 // pred_region
          %v960 = vld [vmem:[%s493] sm:$0xf]
          %v961 = vld [vmem:[%s493 + $0x4] sm:$0xf]
          %v962 = vunpack.c.l.bf16 %v960
          %v963 = vunpack.c.l.bf16 %v961
          %v964 = vmul.f32 %v962, %v619
          %v965 = vmul.f32 %v963, %v619
          %v966 = vadd.f32 %v964, %v641
          %v967 = vadd.f32 %v965, %v641
          %v968 = vmax.f32 %v966, 0.0
          %v969 = vmax.f32 %v967, 0.0
          %v970 = vpack.c.bf16 %v969, %v968
          %v972 = vunpack.c.l.b16 %v970
          %v973 = vunpack.c.h.b16 %v970
          %v974 = vpack.c.b16 %v972, %v972
          %v975 = vpack.c.b16 %v973, %v973
          %v977 = vshrl.u32 %v974, 16
          %v979 = vrot.slane %v977, 7
          %v980 = vshll.u32 %v974, 16
          %v982 = vor.u32 %v979, %v980
          %v983 = vrot.slane %v979, 4
          %v985 = vshrl.u32 %v975, 16
          %v987 = vrot.slane %v985, 7
          %v988 = vshll.u32 %v975, 16
          %v990 = vor.u32 %v987, %v988
          %v991 = vsel %vm724, %v983, %v990
          %v992 = vrot.slane %v987, 4
          %v996 = vld [vmem:[#allocation2] sm:$0xf]
          %v997 = vsel %vm887, %v982, %v996
          %998 = vst [vmem:[#allocation2] sm:$0xf] %v997
          %999 = vst.msk [vmem:[#allocation2 + $0x4] sm:$0xf] %vm891, %v991
          %v1000 = vld [vmem:[#allocation2 + $0x8] sm:$0x1]
          %v1001 = vsel %vm520, %v992, %v1000
          %1002 = vst [vmem:[#allocation2 + $0x8] sm:$0x1] %v1001
        $region68: #{tpu_custom_call.1} parent=59 // pred_fallthru
          _
        %p1003 = scmp.eq.s32.totalorder %s29, 1
        // Predicated region
        $region69: #{tpu_custom_call.1} parent=59 // pred_check
          %p1004 = pneg %p1003
        $region70: #{tpu_custom_call.1} parent=59 // pred_check_branch
          %1006 = sbr.rel (%p1004) target = $region72
        $region71: #{tpu_custom_call.1} parent=59 // pred_region
          %s1007 = scalar_lea.vmem [#allocation2], 108
          %v1008 = vld [vmem:[%s1007] sm:$0xf]
          %v1009 = vsel %vm887, 0, %v1008
          %1010 = vst [vmem:[%s1007] sm:$0xf] %v1009
          %1011 = vst.msk [vmem:[%s1007 + $0x4] sm:$0xf] %vm891, 0
          %v1012 = vld [vmem:[%s1007 + $0x8] sm:$0x1]
          %v1013 = vsel %vm520, 0, %v1012
          %1014 = vst [vmem:[%s1007 + $0x8] sm:$0x1] %v1013
        $region72: #{tpu_custom_call.1} parent=59 // pred_fallthru
          _
        %p1015 = scmp.ne.s32.totalorder %s29, 1
        // Predicated region
        $region73: #{tpu_custom_call.1} parent=59 // pred_check
          %p1016 = pneg %p1015
        $region74: #{tpu_custom_call.1} parent=59 // pred_check_branch
          %1018 = sbr.rel (%p1016) target = $region76
        $region75: #{tpu_custom_call.1} parent=59 // pred_region
          %v1019 = vld [vmem:[%s510] sm:$0xf]
          %v1020 = vld [vmem:[%s510 + $0x4] sm:$0xf]
          %v1021 = vunpack.c.l.bf16 %v1019
          %v1022 = vunpack.c.l.bf16 %v1020
          %v1023 = vmul.f32 %v1021, %v619
          %v1024 = vmul.f32 %v1022, %v619
          %v1025 = vadd.f32 %v1023, %v641
          %v1026 = vadd.f32 %v1024, %v641
          %v1027 = vmax.f32 %v1025, 0.0
          %v1028 = vmax.f32 %v1026, 0.0
          %v1029 = vpack.c.bf16 %v1028, %v1027
          %v1031 = vunpack.c.l.b16 %v1029
          %v1032 = vunpack.c.h.b16 %v1029
          %v1033 = vpack.c.b16 %v1031, %v1031
          %v1034 = vpack.c.b16 %v1032, %v1032
          %v1036 = vshrl.u32 %v1033, 16
          %v1038 = vrot.slane %v1036, 7
          %v1039 = vshll.u32 %v1033, 16
          %v1041 = vor.u32 %v1038, %v1039
          %v1042 = vrot.slane %v1038, 4
          %v1044 = vshrl.u32 %v1034, 16
          %v1046 = vrot.slane %v1044, 7
          %v1047 = vshll.u32 %v1034, 16
          %v1049 = vor.u32 %v1046, %v1047
          %v1050 = vsel %vm724, %v1042, %v1049
          %v1051 = vrot.slane %v1046, 4
          %s1055 = scalar_lea.vmem [#allocation2], 108
          %v1056 = vld [vmem:[%s1055] sm:$0xf]
          %v1057 = vsel %vm887, %v1041, %v1056
          %1058 = vst [vmem:[%s1055] sm:$0xf] %v1057
          %1059 = vst.msk [vmem:[%s1055 + $0x4] sm:$0xf] %vm891, %v1050
          %v1060 = vld [vmem:[%s1055 + $0x8] sm:$0x1]
          %v1061 = vsel %vm520, %v1051, %v1060
          %1062 = vst [vmem:[%s1055 + $0x8] sm:$0x1] %v1061
        $region76: #{tpu_custom_call.1} parent=59 // pred_fallthru
          _
        %v1063 = vld [vmem:[#allocation2] sm:$0xf]
        %v1064 = vld [vmem:[#allocation2 + $0x4] sm:$0xf]
        %v1065 = vld [vmem:[#allocation2 + $0xc] sm:$0xf]
        %v1066 = vld [vmem:[#allocation2 + $0x10] sm:$0xf]
        %v1067 = vld [vmem:[#allocation2 + $0x18] sm:$0xf]
        %v1068 = vld [vmem:[#allocation2 + $0x1c] sm:$0xf]
        %v1069 = vld [vmem:[#allocation2 + $0x24] sm:$0xf]
        %v1070 = vld [vmem:[#allocation2 + $0x28] sm:$0xf]
        %v1071 = vld [vmem:[#allocation2 + $0x30] sm:$0xf]
        %v1072 = vld [vmem:[#allocation2 + $0x34] sm:$0xf]
        %v1073 = vld [vmem:[#allocation2 + $0x3c] sm:$0xf]
        %v1074 = vld [vmem:[#allocation2 + $0x40] sm:$0xf]
        %v1075 = vld [vmem:[#allocation2 + $0x48] sm:$0xf]
        %v1076 = vld [vmem:[#allocation2 + $0x4c] sm:$0xf]
        %v1077 = vld [vmem:[#allocation2 + $0x54] sm:$0xf]
        %v1078 = vld [vmem:[#allocation2 + $0x58] sm:$0xf]
        %v1079 = vld [vmem:[%s5] sm:$0xf]
        %v1080 = vld [vmem:[#allocation2 + $0x8] sm:$0x1]
        %v1081 = vld [vmem:[#allocation2 + $0x14] sm:$0x1]
        %v1082 = vld [vmem:[#allocation2 + $0x20] sm:$0x1]
        %v1083 = vld [vmem:[#allocation2 + $0x2c] sm:$0x1]
        %v1084 = vld [vmem:[#allocation2 + $0x38] sm:$0x1]
        %v1085 = vld [vmem:[#allocation2 + $0x44] sm:$0x1]
        %v1086 = vld [vmem:[#allocation2 + $0x50] sm:$0x1]
        %v1087 = vld [vmem:[#allocation2 + $0x5c] sm:$0x1]
        %vm1088 = vsmask.f32 3328
        %vm1089 = vsmask.f32 7440
        %vm1090 = vmor %vm1088, %vm1089
        %v1092 = vshrl.u32 %v1063, 16
        %v1094 = vrot.slane %v1092, 4
        %v1095 = vshll.u32 %v1063, 16
        %v1097 = vrot.slane %v1095, 5
        %v1098 = vor.u32 %v1094, %v1097
        %v1099 = vrot.slane %v1098, 4
        %v1101 = vshll.u32 %v1064, 16
        %v1103 = vrot.slane %v1101, 5
        %v1104 = vsel %vm1090, %v1099, %v1103
        %v1105 = vshrl.u32 %v1064, 16
        %v1107 = vrot.slane %v1105, 4
        %v1108 = vor.u32 %v1107, %v1103
        %v1109 = vrot.slane %v1108, 4
        %v1111 = vshll.u32 %v1080, 16
        %v1113 = vrot.slane %v1111, 5
        %v1114 = vsel %vm1090, %v1109, %v1113
        %v1116 = vshrl.u32 %v1065, 16
        %v1118 = vrot.slane %v1116, 4
        %v1119 = vshll.u32 %v1065, 16
        %v1121 = vrot.slane %v1119, 5
        %v1122 = vor.u32 %v1118, %v1121
        %v1123 = vrot.slane %v1122, 4
        %v1125 = vshll.u32 %v1066, 16
        %v1127 = vrot.slane %v1125, 5
        %v1128 = vsel %vm1090, %v1123, %v1127
        %v1129 = vshrl.u32 %v1066, 16
        %v1131 = vrot.slane %v1129, 4
        %v1132 = vor.u32 %v1131, %v1127
        %v1133 = vrot.slane %v1132, 4
        %v1135 = vshll.u32 %v1081, 16
        %v1137 = vrot.slane %v1135, 5
        %v1138 = vsel %vm1090, %v1133, %v1137
        %v1140 = vshrl.u32 %v1067, 16
        %v1142 = vrot.slane %v1140, 4
        %v1143 = vshll.u32 %v1067, 16
        %v1145 = vrot.slane %v1143, 5
        %v1146 = vor.u32 %v1142, %v1145
        %v1147 = vrot.slane %v1146, 4
        %v1149 = vshll.u32 %v1068, 16
        %v1151 = vrot.slane %v1149, 5
        %v1152 = vsel %vm1090, %v1147, %v1151
        %v1153 = vshrl.u32 %v1068, 16
        %v1155 = vrot.slane %v1153, 4
        %v1156 = vor.u32 %v1155, %v1151
        %v1157 = vrot.slane %v1156, 4
        %v1159 = vshll.u32 %v1082, 16
        %v1161 = vrot.slane %v1159, 5
        %v1162 = vsel %vm1090, %v1157, %v1161
        %v1164 = vshrl.u32 %v1069, 16
        %v1166 = vrot.slane %v1164, 4
        %v1167 = vshll.u32 %v1069, 16
        %v1169 = vrot.slane %v1167, 5
        %v1170 = vor.u32 %v1166, %v1169
        %v1171 = vrot.slane %v1170, 4
        %v1173 = vshll.u32 %v1070, 16
        %v1175 = vrot.slane %v1173, 5
        %v1176 = vsel %vm1090, %v1171, %v1175
        %v1177 = vshrl.u32 %v1070, 16
        %v1179 = vrot.slane %v1177, 4
        %v1180 = vor.u32 %v1179, %v1175
        %v1181 = vrot.slane %v1180, 4
        %v1183 = vshll.u32 %v1083, 16
        %v1185 = vrot.slane %v1183, 5
        %v1186 = vsel %vm1090, %v1181, %v1185
        %v1188 = vshrl.u32 %v1071, 16
        %v1190 = vrot.slane %v1188, 4
        %v1191 = vshll.u32 %v1071, 16
        %v1193 = vrot.slane %v1191, 5
        %v1194 = vor.u32 %v1190, %v1193
        %v1195 = vrot.slane %v1194, 4
        %v1197 = vshll.u32 %v1072, 16
        %v1199 = vrot.slane %v1197, 5
        %v1200 = vsel %vm1090, %v1195, %v1199
        %v1201 = vshrl.u32 %v1072, 16
        %v1203 = vrot.slane %v1201, 4
        %v1204 = vor.u32 %v1203, %v1199
        %v1205 = vrot.slane %v1204, 4
        %v1207 = vshll.u32 %v1084, 16
        %v1209 = vrot.slane %v1207, 5
        %v1210 = vsel %vm1090, %v1205, %v1209
        %v1212 = vshrl.u32 %v1073, 16
        %v1214 = vrot.slane %v1212, 4
        %v1215 = vshll.u32 %v1073, 16
        %v1217 = vrot.slane %v1215, 5
        %v1218 = vor.u32 %v1214, %v1217
        %v1219 = vrot.slane %v1218, 4
        %v1221 = vshll.u32 %v1074, 16
        %v1223 = vrot.slane %v1221, 5
        %v1224 = vsel %vm1090, %v1219, %v1223
        %v1225 = vshrl.u32 %v1074, 16
        %v1227 = vrot.slane %v1225, 4
        %v1228 = vor.u32 %v1227, %v1223
        %v1229 = vrot.slane %v1228, 4
        %v1231 = vshll.u32 %v1085, 16
        %v1233 = vrot.slane %v1231, 5
        %v1234 = vsel %vm1090, %v1229, %v1233
        %v1236 = vshrl.u32 %v1075, 16
        %v1238 = vrot.slane %v1236, 4
        %v1239 = vshll.u32 %v1075, 16
        %v1241 = vrot.slane %v1239, 5
        %v1242 = vor.u32 %v1238, %v1241
        %v1243 = vrot.slane %v1242, 4
        %v1245 = vshll.u32 %v1076, 16
        %v1247 = vrot.slane %v1245, 5
        %v1248 = vsel %vm1090, %v1243, %v1247
        %v1249 = vshrl.u32 %v1076, 16
        %v1251 = vrot.slane %v1249, 4
        %v1252 = vor.u32 %v1251, %v1247
        %v1253 = vrot.slane %v1252, 4
        %v1255 = vshll.u32 %v1086, 16
        %v1257 = vrot.slane %v1255, 5
        %v1258 = vsel %vm1090, %v1253, %v1257
        %v1260 = vshrl.u32 %v1077, 16
        %v1262 = vrot.slane %v1260, 4
        %v1263 = vshll.u32 %v1077, 16
        %v1265 = vrot.slane %v1263, 5
        %v1266 = vor.u32 %v1262, %v1265
        %v1267 = vrot.slane %v1266, 4
        %v1269 = vshll.u32 %v1078, 16
        %v1271 = vrot.slane %v1269, 5
        %v1272 = vsel %vm1090, %v1267, %v1271
        %v1273 = vshrl.u32 %v1078, 16
        %v1275 = vrot.slane %v1273, 4
        %v1276 = vor.u32 %v1275, %v1271
        %v1277 = vrot.slane %v1276, 4
        %v1279 = vshll.u32 %v1087, 16
        %v1281 = vrot.slane %v1279, 5
        %v1282 = vsel %vm1090, %v1277, %v1281
        %v1283 = vld [vmem:[%s5 + $0x4] sm:$0xf]
        %v1284 = vunpack.c.l.b16 %v1104
        %v1285 = vunpack.c.l.b16 %v1114
        %v1286 = vunpack.c.l.b16 %v1128
        %v1287 = vunpack.c.l.b16 %v1138
        %v1288 = vunpack.c.l.b16 %v1152
        %v1289 = vunpack.c.l.b16 %v1162
        %v1290 = vunpack.c.l.b16 %v1176
        %v1291 = vunpack.c.l.b16 %v1186
        %v1292 = vunpack.c.l.b16 %v1200
        %v1293 = vunpack.c.l.b16 %v1210
        %v1294 = vunpack.c.l.b16 %v1224
        %v1295 = vunpack.c.l.b16 %v1234
        %v1296 = vunpack.c.l.b16 %v1248
        %v1297 = vunpack.c.l.b16 %v1258
        %v1298 = vunpack.c.l.b16 %v1272
        %v1299 = vunpack.c.l.b16 %v1282
        %v1300 = vpack.c.b16 %v1285, %v1284
        %v1301 = vpack.c.b16 %v1287, %v1286
        %v1302 = vpack.c.b16 %v1289, %v1288
        %v1303 = vpack.c.b16 %v1291, %v1290
        %v1304 = vpack.c.b16 %v1293, %v1292
        %v1305 = vpack.c.b16 %v1295, %v1294
        %v1306 = vpack.c.b16 %v1297, %v1296
        %v1307 = vpack.c.b16 %v1299, %v1298
        %vm1308 = vcmask 64512
        %v1310 = vsel %vm1308, %v1300, 0
        %v1313 = vsel %vm1308, %v1301, 0
        %v1316 = vsel %vm1308, %v1302, 0
        %v1319 = vsel %vm1308, %v1303, 0
        %v1322 = vsel %vm1308, %v1304, 0
        %v1325 = vsel %vm1308, %v1305, 0
        %v1328 = vsel %vm1308, %v1306, 0
        %v1331 = vsel %vm1308, %v1307, 0
        %vm1333 = vcmask 1043456
        %v1335 = vsel %vm1333, %v1283, 0
        %1337 = vmatprep.subr.bf16.mxu0 0
        %1338 = vmatpush1.bf16.msra.mxu0 0
        %1339 = vmatprep.subr.bf16.mxu0 0
        %1340 = vmatpush1.bf16.msra.mxu0 0
        %1341 = vmatprep.subr.bf16.mxu0 0
        %1342 = vmatpush1.bf16.msra.mxu0 0
        %1343 = vmatprep.subr.bf16.mxu0 0
        %1344 = vmatpush1.bf16.msra.mxu0 0
        %1345 = vmatprep.subr.bf16.mxu0 0
        %1346 = vmatpush1.bf16.msra.mxu0 0
        %1347 = vmatprep.subr.bf16.mxu0 0
        %1348 = vmatpush1.bf16.msra.mxu0 0
        %1349 = vmatprep.subr.bf16.mxu0 0
        %1350 = vmatpush1.bf16.msra.mxu0 0
        %1351 = vmatprep.subr.bf16.mxu0 0
        %1352 = vmatpush1.bf16.msra.mxu0 %v1335
        %1353 = vmatprep.subr.bf16.mxu0 0
        %1354 = vmatpush2.bf16.msra.mxu0 0
        %1355 = vmatprep.subr.bf16.mxu0 0
        %1356 = vmatpush2.bf16.msra.mxu0 0
        %1357 = vmatprep.subr.bf16.mxu0 0
        %1358 = vmatpush2.bf16.msra.mxu0 0
        %1359 = vmatprep.subr.bf16.mxu0 0
        %1360 = vmatpush2.bf16.msra.mxu0 0
        %1361 = vmatprep.subr.bf16.mxu0 0
        %1362 = vmatpush2.bf16.msra.mxu0 0
        %1363 = vmatprep.subr.bf16.mxu0 0
        %1364 = vmatpush2.bf16.msra.mxu0 0
        %1365 = vmatprep.subr.bf16.mxu0 0
        %1366 = vmatpush2.bf16.msra.mxu0 0
        %1367 = vmatprep.subr.bf16.mxu0 0
        %1368 = vmatpush2.bf16.msra.mxu0 0
        %1369 = vmatprep.mubr.bf16.mxu0 0
        %1370 = vmatmul.mubr.bf16.gmra.mxu0 %v1310
        %v1371 = vpop.f32.mrf.mxu0
        %v1372 = vadd.f32 0.0, %v1371
        %v1373 = vpop.f32.mrf.mxu0
        %v1374 = vpop.f32.mrf.mxu0
        %v1375 = vadd.f32 0.0, %v1374
        %v1376 = vpop.f32.mrf.mxu0
        %1377 = vmatprep.mubr.bf16.mxu0 0
        %1378 = vmatmul.mubr.bf16.gmra.mxu0 %v1313
        %v1379 = vpop.f32.mrf.mxu0
        %v1380 = vadd.f32 0.0, %v1379
        %v1381 = vpop.f32.mrf.mxu0
        %v1382 = vpop.f32.mrf.mxu0
        %v1383 = vadd.f32 0.0, %v1382
        %v1384 = vpop.f32.mrf.mxu0
        %1385 = vmatprep.mubr.bf16.mxu0 0
        %1386 = vmatmul.mubr.bf16.gmra.mxu0 %v1316
        %v1387 = vpop.f32.mrf.mxu0
        %v1388 = vadd.f32 0.0, %v1387
        %v1389 = vpop.f32.mrf.mxu0
        %v1390 = vpop.f32.mrf.mxu0
        %v1391 = vadd.f32 0.0, %v1390
        %v1392 = vpop.f32.mrf.mxu0
        %1393 = vmatprep.mubr.bf16.mxu0 0
        %1394 = vmatmul.mubr.bf16.gmra.mxu0 %v1319
        %v1395 = vpop.f32.mrf.mxu0
        %v1396 = vadd.f32 0.0, %v1395
        %v1397 = vpop.f32.mrf.mxu0
        %v1398 = vpop.f32.mrf.mxu0
        %v1399 = vadd.f32 0.0, %v1398
        %v1400 = vpop.f32.mrf.mxu0
        %1401 = vmatprep.mubr.bf16.mxu0 0
        %1402 = vmatmul.mubr.bf16.gmra.mxu0 %v1322
        %v1403 = vpop.f32.mrf.mxu0
        %v1404 = vadd.f32 0.0, %v1403
        %v1405 = vpop.f32.mrf.mxu0
        %v1406 = vpop.f32.mrf.mxu0
        %v1407 = vadd.f32 0.0, %v1406
        %v1408 = vpop.f32.mrf.mxu0
        %1409 = vmatprep.mubr.bf16.mxu0 0
        %1410 = vmatmul.mubr.bf16.gmra.mxu0 %v1325
        %v1411 = vpop.f32.mrf.mxu0
        %v1412 = vadd.f32 0.0, %v1411
        %v1413 = vpop.f32.mrf.mxu0
        %v1414 = vpop.f32.mrf.mxu0
        %v1415 = vadd.f32 0.0, %v1414
        %v1416 = vpop.f32.mrf.mxu0
        %1417 = vmatprep.mubr.bf16.mxu0 0
        %1418 = vmatmul.mubr.bf16.gmra.mxu0 %v1328
        %v1419 = vpop.f32.mrf.mxu0
        %v1420 = vadd.f32 0.0, %v1419
        %v1421 = vpop.f32.mrf.mxu0
        %v1422 = vpop.f32.mrf.mxu0
        %v1423 = vadd.f32 0.0, %v1422
        %v1424 = vpop.f32.mrf.mxu0
        %1425 = vmatprep.mubr.bf16.mxu0 0
        %1426 = vmatmul.mubr.bf16.gmra.mxu0 %v1331
        %v1427 = vpop.f32.mrf.mxu0
        %v1428 = vadd.f32 0.0, %v1427
        %v1429 = vpop.f32.mrf.mxu0
        %v1430 = vpop.f32.mrf.mxu0
        %v1431 = vadd.f32 0.0, %v1430
        %v1432 = vpop.f32.mrf.mxu0
        %1433 = vdwg.mxu0
        %v1450 = vunpack.c.l.b16 %v1063
        %v1451 = vunpack.c.l.b16 %v1064
        %v1452 = vunpack.c.l.b16 %v1065
        %v1453 = vunpack.c.l.b16 %v1066
        %v1454 = vunpack.c.l.b16 %v1067
        %v1455 = vunpack.c.l.b16 %v1068
        %v1456 = vunpack.c.l.b16 %v1069
        %v1457 = vunpack.c.l.b16 %v1070
        %v1458 = vunpack.c.l.b16 %v1071
        %v1459 = vunpack.c.l.b16 %v1072
        %v1460 = vunpack.c.l.b16 %v1073
        %v1461 = vunpack.c.l.b16 %v1074
        %v1462 = vunpack.c.l.b16 %v1075
        %v1463 = vunpack.c.l.b16 %v1076
        %v1464 = vunpack.c.l.b16 %v1077
        %v1465 = vunpack.c.l.b16 %v1078
        %v1466 = vpack.c.b16 %v1451, %v1450
        %v1467 = vpack.c.b16 %v1453, %v1452
        %v1468 = vpack.c.b16 %v1455, %v1454
        %v1469 = vpack.c.b16 %v1457, %v1456
        %v1470 = vpack.c.b16 %v1459, %v1458
        %v1471 = vpack.c.b16 %v1461, %v1460
        %v1472 = vpack.c.b16 %v1463, %v1462
        %v1473 = vpack.c.b16 %v1465, %v1464
        %v1475 = vsel %vm1308, %v1466, 0
        %v1478 = vsel %vm1308, %v1467, 0
        %v1481 = vsel %vm1308, %v1468, 0
        %v1484 = vsel %vm1308, %v1469, 0
        %v1487 = vsel %vm1308, %v1470, 0
        %v1490 = vsel %vm1308, %v1471, 0
        %v1493 = vsel %vm1308, %v1472, 0
        %v1496 = vsel %vm1308, %v1473, 0
        %v1499 = vsel %vm1333, %v1079, 0
        %1501 = vmatprep.subr.bf16.mxu0 0
        %1502 = vmatpush1.bf16.msra.mxu0 0
        %1503 = vmatprep.subr.bf16.mxu0 0
        %1504 = vmatpush1.bf16.msra.mxu0 0
        %1505 = vmatprep.subr.bf16.mxu0 0
        %1506 = vmatpush1.bf16.msra.mxu0 0
        %1507 = vmatprep.subr.bf16.mxu0 0
        %1508 = vmatpush1.bf16.msra.mxu0 0
        %1509 = vmatprep.subr.bf16.mxu0 0
        %1510 = vmatpush1.bf16.msra.mxu0 0
        %1511 = vmatprep.subr.bf16.mxu0 0
        %1512 = vmatpush1.bf16.msra.mxu0 0
        %1513 = vmatprep.subr.bf16.mxu0 0
        %1514 = vmatpush1.bf16.msra.mxu0 0
        %1515 = vmatprep.subr.bf16.mxu0 0
        %1516 = vmatpush1.bf16.msra.mxu0 %v1499
        %1517 = vmatprep.subr.bf16.mxu0 0
        %1518 = vmatpush2.bf16.msra.mxu0 0
        %1519 = vmatprep.subr.bf16.mxu0 0
        %1520 = vmatpush2.bf16.msra.mxu0 0
        %1521 = vmatprep.subr.bf16.mxu0 0
        %1522 = vmatpush2.bf16.msra.mxu0 0
        %1523 = vmatprep.subr.bf16.mxu0 0
        %1524 = vmatpush2.bf16.msra.mxu0 0
        %1525 = vmatprep.subr.bf16.mxu0 0
        %1526 = vmatpush2.bf16.msra.mxu0 0
        %1527 = vmatprep.subr.bf16.mxu0 0
        %1528 = vmatpush2.bf16.msra.mxu0 0
        %1529 = vmatprep.subr.bf16.mxu0 0
        %1530 = vmatpush2.bf16.msra.mxu0 0
        %1531 = vmatprep.subr.bf16.mxu0 0
        %1532 = vmatpush2.bf16.msra.mxu0 0
        %1533 = vmatprep.mubr.bf16.mxu0 0
        %1534 = vmatmul.mubr.bf16.gmra.mxu0 %v1475
        %v1535 = vpop.f32.mrf.mxu0
        %v1536 = vadd.f32 %v1372, %v1535
        %v1537 = vpop.f32.mrf.mxu0
        %v1538 = vpop.f32.mrf.mxu0
        %v1539 = vadd.f32 %v1375, %v1538
        %v1540 = vpop.f32.mrf.mxu0
        %1541 = vmatprep.mubr.bf16.mxu0 0
        %1542 = vmatmul.mubr.bf16.gmra.mxu0 %v1478
        %v1543 = vpop.f32.mrf.mxu0
        %v1544 = vadd.f32 %v1380, %v1543
        %v1545 = vpop.f32.mrf.mxu0
        %v1546 = vpop.f32.mrf.mxu0
        %v1547 = vadd.f32 %v1383, %v1546
        %v1548 = vpop.f32.mrf.mxu0
        %1549 = vmatprep.mubr.bf16.mxu0 0
        %1550 = vmatmul.mubr.bf16.gmra.mxu0 %v1481
        %v1551 = vpop.f32.mrf.mxu0
        %v1552 = vadd.f32 %v1388, %v1551
        %v1553 = vpop.f32.mrf.mxu0
        %v1554 = vpop.f32.mrf.mxu0
        %v1555 = vadd.f32 %v1391, %v1554
        %v1556 = vpop.f32.mrf.mxu0
        %1557 = vmatprep.mubr.bf16.mxu0 0
        %1558 = vmatmul.mubr.bf16.gmra.mxu0 %v1484
        %v1559 = vpop.f32.mrf.mxu0
        %v1560 = vadd.f32 %v1396, %v1559
        %v1561 = vpop.f32.mrf.mxu0
        %v1562 = vpop.f32.mrf.mxu0
        %v1563 = vadd.f32 %v1399, %v1562
        %v1564 = vpop.f32.mrf.mxu0
        %1565 = vmatprep.mubr.bf16.mxu0 0
        %1566 = vmatmul.mubr.bf16.gmra.mxu0 %v1487
        %v1567 = vpop.f32.mrf.mxu0
        %v1568 = vadd.f32 %v1404, %v1567
        %v1569 = vpop.f32.mrf.mxu0
        %v1570 = vpop.f32.mrf.mxu0
        %v1571 = vadd.f32 %v1407, %v1570
        %v1572 = vpop.f32.mrf.mxu0
        %1573 = vmatprep.mubr.bf16.mxu0 0
        %1574 = vmatmul.mubr.bf16.gmra.mxu0 %v1490
        %v1575 = vpop.f32.mrf.mxu0
        %v1576 = vadd.f32 %v1412, %v1575
        %v1577 = vpop.f32.mrf.mxu0
        %v1578 = vpop.f32.mrf.mxu0
        %v1579 = vadd.f32 %v1415, %v1578
        %v1580 = vpop.f32.mrf.mxu0
        %1581 = vmatprep.mubr.bf16.mxu0 0
        %1582 = vmatmul.mubr.bf16.gmra.mxu0 %v1493
        %v1583 = vpop.f32.mrf.mxu0
        %v1584 = vadd.f32 %v1420, %v1583
        %v1585 = vpop.f32.mrf.mxu0
        %v1586 = vpop.f32.mrf.mxu0
        %v1587 = vadd.f32 %v1423, %v1586
        %v1588 = vpop.f32.mrf.mxu0
        %1589 = vmatprep.mubr.bf16.mxu0 0
        %1590 = vmatmul.mubr.bf16.gmra.mxu0 %v1496
        %v1591 = vpop.f32.mrf.mxu0
        %v1592 = vadd.f32 %v1428, %v1591
        %v1593 = vpop.f32.mrf.mxu0
        %v1594 = vpop.f32.mrf.mxu0
        %v1595 = vadd.f32 %v1431, %v1594
        %v1596 = vpop.f32.mrf.mxu0
        %1597 = vdwg.mxu0
        %v1598 = vld [vmem:[#allocation2] sm:$0xe]
        %v1599 = vld [vmem:[#allocation2 + $0xc] sm:$0xe]
        %v1600 = vld [vmem:[#allocation2 + $0x18] sm:$0xe]
        %v1601 = vld [vmem:[#allocation2 + $0x24] sm:$0xe]
        %v1602 = vld [vmem:[#allocation2 + $0x30] sm:$0xe]
        %v1603 = vld [vmem:[#allocation2 + $0x3c] sm:$0xe]
        %v1604 = vld [vmem:[#allocation2 + $0x48] sm:$0xe]
        %v1605 = vld [vmem:[#allocation2 + $0x54] sm:$0xe]
        %vm1622 = vcmask 1042432
        %vm1623 = vcmask 1046532
        %vm1624 = vmor %vm1622, %vm1623
        %v1625 = vrot.slane %v1598, 5
        %v1626 = vrot.slane %v1625, 4
        %v1627 = vrot.slane %v1064, 5
        %v1628 = vsel %vm1624, %v1626, %v1627
        %v1629 = vrot.slane %v1627, 4
        %v1630 = vrot.slane %v1080, 5
        %v1631 = vsel %vm1624, %v1629, %v1630
        %v1632 = vrot.slane %v1599, 5
        %v1633 = vrot.slane %v1632, 4
        %v1634 = vrot.slane %v1066, 5
        %v1635 = vsel %vm1624, %v1633, %v1634
        %v1636 = vrot.slane %v1634, 4
        %v1637 = vrot.slane %v1081, 5
        %v1638 = vsel %vm1624, %v1636, %v1637
        %v1639 = vrot.slane %v1600, 5
        %v1640 = vrot.slane %v1639, 4
        %v1641 = vrot.slane %v1068, 5
        %v1642 = vsel %vm1624, %v1640, %v1641
        %v1643 = vrot.slane %v1641, 4
        %v1644 = vrot.slane %v1082, 5
        %v1645 = vsel %vm1624, %v1643, %v1644
        %v1646 = vrot.slane %v1601, 5
        %v1647 = vrot.slane %v1646, 4
        %v1648 = vrot.slane %v1070, 5
        %v1649 = vsel %vm1624, %v1647, %v1648
        %v1650 = vrot.slane %v1648, 4
        %v1651 = vrot.slane %v1083, 5
        %v1652 = vsel %vm1624, %v1650, %v1651
        %v1653 = vrot.slane %v1602, 5
        %v1654 = vrot.slane %v1653, 4
        %v1655 = vrot.slane %v1072, 5
        %v1656 = vsel %vm1624, %v1654, %v1655
        %v1657 = vrot.slane %v1655, 4
        %v1658 = vrot.slane %v1084, 5
        %v1659 = vsel %vm1624, %v1657, %v1658
        %v1660 = vrot.slane %v1603, 5
        %v1661 = vrot.slane %v1660, 4
        %v1662 = vrot.slane %v1074, 5
        %v1663 = vsel %vm1624, %v1661, %v1662
        %v1664 = vrot.slane %v1662, 4
        %v1665 = vrot.slane %v1085, 5
        %v1666 = vsel %vm1624, %v1664, %v1665
        %v1667 = vrot.slane %v1604, 5
        %v1668 = vrot.slane %v1667, 4
        %v1669 = vrot.slane %v1076, 5
        %v1670 = vsel %vm1624, %v1668, %v1669
        %v1671 = vrot.slane %v1669, 4
        %v1672 = vrot.slane %v1086, 5
        %v1673 = vsel %vm1624, %v1671, %v1672
        %v1674 = vrot.slane %v1605, 5
        %v1675 = vrot.slane %v1674, 4
        %v1676 = vrot.slane %v1078, 5
        %v1677 = vsel %vm1624, %v1675, %v1676
        %v1678 = vrot.slane %v1676, 4
        %v1679 = vrot.slane %v1087, 5
        %v1680 = vsel %vm1624, %v1678, %v1679
        %v1681 = vld [vmem:[%s5 + $0x8] sm:$0xf]
        %v1682 = vunpack.c.l.b16 %v1628
        %v1683 = vunpack.c.l.b16 %v1631
        %v1684 = vunpack.c.l.b16 %v1635
        %v1685 = vunpack.c.l.b16 %v1638
        %v1686 = vunpack.c.l.b16 %v1642
        %v1687 = vunpack.c.l.b16 %v1645
        %v1688 = vunpack.c.l.b16 %v1649
        %v1689 = vunpack.c.l.b16 %v1652
        %v1690 = vunpack.c.l.b16 %v1656
        %v1691 = vunpack.c.l.b16 %v1659
        %v1692 = vunpack.c.l.b16 %v1663
        %v1693 = vunpack.c.l.b16 %v1666
        %v1694 = vunpack.c.l.b16 %v1670
        %v1695 = vunpack.c.l.b16 %v1673
        %v1696 = vunpack.c.l.b16 %v1677
        %v1697 = vunpack.c.l.b16 %v1680
        %v1698 = vpack.c.b16 %v1683, %v1682
        %v1699 = vpack.c.b16 %v1685, %v1684
        %v1700 = vpack.c.b16 %v1687, %v1686
        %v1701 = vpack.c.b16 %v1689, %v1688
        %v1702 = vpack.c.b16 %v1691, %v1690
        %v1703 = vpack.c.b16 %v1693, %v1692
        %v1704 = vpack.c.b16 %v1695, %v1694
        %v1705 = vpack.c.b16 %v1697, %v1696
        %v1707 = vsel %vm1308, %v1698, 0
        %v1710 = vsel %vm1308, %v1699, 0
        %v1713 = vsel %vm1308, %v1700, 0
        %v1716 = vsel %vm1308, %v1701, 0
        %v1719 = vsel %vm1308, %v1702, 0
        %v1722 = vsel %vm1308, %v1703, 0
        %v1725 = vsel %vm1308, %v1704, 0
        %v1728 = vsel %vm1308, %v1705, 0
        %v1731 = vsel %vm1333, %v1681, 0
        %1733 = vmatprep.subr.bf16.mxu0 0
        %1734 = vmatpush1.bf16.msra.mxu0 0
        %1735 = vmatprep.subr.bf16.mxu0 0
        %1736 = vmatpush1.bf16.msra.mxu0 0
        %1737 = vmatprep.subr.bf16.mxu0 0
        %1738 = vmatpush1.bf16.msra.mxu0 0
        %1739 = vmatprep.subr.bf16.mxu0 0
        %1740 = vmatpush1.bf16.msra.mxu0 0
        %1741 = vmatprep.subr.bf16.mxu0 0
        %1742 = vmatpush1.bf16.msra.mxu0 0
        %1743 = vmatprep.subr.bf16.mxu0 0
        %1744 = vmatpush1.bf16.msra.mxu0 0
        %1745 = vmatprep.subr.bf16.mxu0 0
        %1746 = vmatpush1.bf16.msra.mxu0 0
        %1747 = vmatprep.subr.bf16.mxu0 0
        %1748 = vmatpush1.bf16.msra.mxu0 %v1731
        %1749 = vmatprep.subr.bf16.mxu0 0
        %1750 = vmatpush2.bf16.msra.mxu0 0
        %1751 = vmatprep.subr.bf16.mxu0 0
        %1752 = vmatpush2.bf16.msra.mxu0 0
        %1753 = vmatprep.subr.bf16.mxu0 0
        %1754 = vmatpush2.bf16.msra.mxu0 0
        %1755 = vmatprep.subr.bf16.mxu0 0
        %1756 = vmatpush2.bf16.msra.mxu0 0
        %1757 = vmatprep.subr.bf16.mxu0 0
        %1758 = vmatpush2.bf16.msra.mxu0 0
        %1759 = vmatprep.subr.bf16.mxu0 0
        %1760 = vmatpush2.bf16.msra.mxu0 0
        %1761 = vmatprep.subr.bf16.mxu0 0
        %1762 = vmatpush2.bf16.msra.mxu0 0
        %1763 = vmatprep.subr.bf16.mxu0 0
        %1764 = vmatpush2.bf16.msra.mxu0 0
        %1765 = vmatprep.mubr.bf16.mxu0 0
        %1766 = vmatmul.mubr.bf16.gmra.mxu0 %v1707
        %v1767 = vpop.f32.mrf.mxu0
        %v1768 = vadd.f32 0.0, %v1767
        %v1769 = vpop.f32.mrf.mxu0
        %v1770 = vpop.f32.mrf.mxu0
        %v1771 = vadd.f32 0.0, %v1770
        %v1772 = vpop.f32.mrf.mxu0
        %1773 = vmatprep.mubr.bf16.mxu0 0
        %1774 = vmatmul.mubr.bf16.gmra.mxu0 %v1710
        %v1775 = vpop.f32.mrf.mxu0
        %v1776 = vadd.f32 0.0, %v1775
        %v1777 = vpop.f32.mrf.mxu0
        %v1778 = vpop.f32.mrf.mxu0
        %v1779 = vadd.f32 0.0, %v1778
        %v1780 = vpop.f32.mrf.mxu0
        %1781 = vmatprep.mubr.bf16.mxu0 0
        %1782 = vmatmul.mubr.bf16.gmra.mxu0 %v1713
        %v1783 = vpop.f32.mrf.mxu0
        %v1784 = vadd.f32 0.0, %v1783
        %v1785 = vpop.f32.mrf.mxu0
        %v1786 = vpop.f32.mrf.mxu0
        %v1787 = vadd.f32 0.0, %v1786
        %v1788 = vpop.f32.mrf.mxu0
        %1789 = vmatprep.mubr.bf16.mxu0 0
        %1790 = vmatmul.mubr.bf16.gmra.mxu0 %v1716
        %v1791 = vpop.f32.mrf.mxu0
        %v1792 = vadd.f32 0.0, %v1791
        %v1793 = vpop.f32.mrf.mxu0
        %v1794 = vpop.f32.mrf.mxu0
        %v1795 = vadd.f32 0.0, %v1794
        %v1796 = vpop.f32.mrf.mxu0
        %1797 = vmatprep.mubr.bf16.mxu0 0
        %1798 = vmatmul.mubr.bf16.gmra.mxu0 %v1719
        %v1799 = vpop.f32.mrf.mxu0
        %v1800 = vadd.f32 0.0, %v1799
        %v1801 = vpop.f32.mrf.mxu0
        %v1802 = vpop.f32.mrf.mxu0
        %v1803 = vadd.f32 0.0, %v1802
        %v1804 = vpop.f32.mrf.mxu0
        %1805 = vmatprep.mubr.bf16.mxu0 0
        %1806 = vmatmul.mubr.bf16.gmra.mxu0 %v1722
        %v1807 = vpop.f32.mrf.mxu0
        %v1808 = vadd.f32 0.0, %v1807
        %v1809 = vpop.f32.mrf.mxu0
        %v1810 = vpop.f32.mrf.mxu0
        %v1811 = vadd.f32 0.0, %v1810
        %v1812 = vpop.f32.mrf.mxu0
        %1813 = vmatprep.mubr.bf16.mxu0 0
        %1814 = vmatmul.mubr.bf16.gmra.mxu0 %v1725
        %v1815 = vpop.f32.mrf.mxu0
        %v1816 = vadd.f32 0.0, %v1815
        %v1817 = vpop.f32.mrf.mxu0
        %v1818 = vpop.f32.mrf.mxu0
        %v1819 = vadd.f32 0.0, %v1818
        %v1820 = vpop.f32.mrf.mxu0
        %1821 = vmatprep.mubr.bf16.mxu0 0
        %1822 = vmatmul.mubr.bf16.gmra.mxu0 %v1728
        %v1823 = vpop.f32.mrf.mxu0
        %v1824 = vadd.f32 0.0, %v1823
        %v1825 = vpop.f32.mrf.mxu0
        %v1826 = vpop.f32.mrf.mxu0
        %v1827 = vadd.f32 0.0, %v1826
        %v1828 = vpop.f32.mrf.mxu0
        %1829 = vdwg.mxu0
        %v1830 = vadd.f32 %v1536, %v1768
        %v1831 = vadd.f32 %v1539, %v1771
        %v1832 = vadd.f32 %v1544, %v1776
        %v1833 = vadd.f32 %v1547, %v1779
        %v1834 = vadd.f32 %v1552, %v1784
        %v1835 = vadd.f32 %v1555, %v1787
        %v1836 = vadd.f32 %v1560, %v1792
        %v1837 = vadd.f32 %v1563, %v1795
        %v1838 = vadd.f32 %v1568, %v1800
        %v1839 = vadd.f32 %v1571, %v1803
        %v1840 = vadd.f32 %v1576, %v1808
        %v1841 = vadd.f32 %v1579, %v1811
        %v1842 = vadd.f32 %v1584, %v1816
        %v1843 = vadd.f32 %v1587, %v1819
        %v1844 = vadd.f32 %v1592, %v1824
        %v1845 = vadd.f32 %v1595, %v1827
        %v1846 = vld [vmem:[%s885] sm:$0xf]
        %v1847 = vld [vmem:[%s885 + $0x4] sm:$0xf]
        %v1848 = vld [vmem:[%s885 + $0xc] sm:$0xf]
        %v1849 = vld [vmem:[%s885 + $0x10] sm:$0xf]
        %v1850 = vld [vmem:[%s885 + $0x18] sm:$0xf]
        %v1851 = vld [vmem:[%s885 + $0x1c] sm:$0xf]
        %v1852 = vld [vmem:[%s885 + $0x24] sm:$0xf]
        %v1853 = vld [vmem:[%s885 + $0x28] sm:$0xf]
        %v1854 = vld [vmem:[%s885 + $0x30] sm:$0xf]
        %v1855 = vld [vmem:[%s885 + $0x34] sm:$0xf]
        %v1856 = vld [vmem:[%s885 + $0x3c] sm:$0xf]
        %v1857 = vld [vmem:[%s885 + $0x40] sm:$0xf]
        %v1858 = vld [vmem:[%s885 + $0x48] sm:$0xf]
        %v1859 = vld [vmem:[%s885 + $0x4c] sm:$0xf]
        %v1860 = vld [vmem:[%s885 + $0x54] sm:$0xf]
        %v1861 = vld [vmem:[%s885 + $0x58] sm:$0xf]
        %v1862 = vld [vmem:[%s5 + $0xc] sm:$0xf]
        %v1879 = vunpack.c.l.b16 %v1846
        %v1880 = vunpack.c.l.b16 %v1847
        %v1881 = vunpack.c.l.b16 %v1848
        %v1882 = vunpack.c.l.b16 %v1849
        %v1883 = vunpack.c.l.b16 %v1850
        %v1884 = vunpack.c.l.b16 %v1851
        %v1885 = vunpack.c.l.b16 %v1852
        %v1886 = vunpack.c.l.b16 %v1853
        %v1887 = vunpack.c.l.b16 %v1854
        %v1888 = vunpack.c.l.b16 %v1855
        %v1889 = vunpack.c.l.b16 %v1856
        %v1890 = vunpack.c.l.b16 %v1857
        %v1891 = vunpack.c.l.b16 %v1858
        %v1892 = vunpack.c.l.b16 %v1859
        %v1893 = vunpack.c.l.b16 %v1860
        %v1894 = vunpack.c.l.b16 %v1861
        %v1895 = vpack.c.b16 %v1880, %v1879
        %v1896 = vpack.c.b16 %v1882, %v1881
        %v1897 = vpack.c.b16 %v1884, %v1883
        %v1898 = vpack.c.b16 %v1886, %v1885
        %v1899 = vpack.c.b16 %v1888, %v1887
        %v1900 = vpack.c.b16 %v1890, %v1889
        %v1901 = vpack.c.b16 %v1892, %v1891
        %v1902 = vpack.c.b16 %v1894, %v1893
        %v1904 = vsel %vm1308, %v1895, 0
        %v1907 = vsel %vm1308, %v1896, 0
        %v1910 = vsel %vm1308, %v1897, 0
        %v1913 = vsel %vm1308, %v1898, 0
        %v1916 = vsel %vm1308, %v1899, 0
        %v1919 = vsel %vm1308, %v1900, 0
        %v1922 = vsel %vm1308, %v1901, 0
        %v1925 = vsel %vm1308, %v1902, 0
        %v1928 = vsel %vm1333, %v1862, 0
        %1930 = vmatprep.subr.bf16.mxu0 0
        %1931 = vmatpush1.bf16.msra.mxu0 0
        %1932 = vmatprep.subr.bf16.mxu0 0
        %1933 = vmatpush1.bf16.msra.mxu0 0
        %1934 = vmatprep.subr.bf16.mxu0 0
        %1935 = vmatpush1.bf16.msra.mxu0 0
        %1936 = vmatprep.subr.bf16.mxu0 0
        %1937 = vmatpush1.bf16.msra.mxu0 0
        %1938 = vmatprep.subr.bf16.mxu0 0
        %1939 = vmatpush1.bf16.msra.mxu0 0
        %1940 = vmatprep.subr.bf16.mxu0 0
        %1941 = vmatpush1.bf16.msra.mxu0 0
        %1942 = vmatprep.subr.bf16.mxu0 0
        %1943 = vmatpush1.bf16.msra.mxu0 0
        %1944 = vmatprep.subr.bf16.mxu0 0
        %1945 = vmatpush1.bf16.msra.mxu0 %v1928
        %1946 = vmatprep.subr.bf16.mxu0 0
        %1947 = vmatpush2.bf16.msra.mxu0 0
        %1948 = vmatprep.subr.bf16.mxu0 0
        %1949 = vmatpush2.bf16.msra.mxu0 0
        %1950 = vmatprep.subr.bf16.mxu0 0
        %1951 = vmatpush2.bf16.msra.mxu0 0
        %1952 = vmatprep.subr.bf16.mxu0 0
        %1953 = vmatpush2.bf16.msra.mxu0 0
        %1954 = vmatprep.subr.bf16.mxu0 0
        %1955 = vmatpush2.bf16.msra.mxu0 0
        %1956 = vmatprep.subr.bf16.mxu0 0
        %1957 = vmatpush2.bf16.msra.mxu0 0
        %1958 = vmatprep.subr.bf16.mxu0 0
        %1959 = vmatpush2.bf16.msra.mxu0 0
        %1960 = vmatprep.subr.bf16.mxu0 0
        %1961 = vmatpush2.bf16.msra.mxu0 0
        %1962 = vmatprep.mubr.bf16.mxu0 0
        %1963 = vmatmul.mubr.bf16.gmra.mxu0 %v1904
        %v1964 = vpop.f32.mrf.mxu0
        %v1965 = vadd.f32 0.0, %v1964
        %v1966 = vpop.f32.mrf.mxu0
        %v1967 = vpop.f32.mrf.mxu0
        %v1968 = vadd.f32 0.0, %v1967
        %v1969 = vpop.f32.mrf.mxu0
        %1970 = vmatprep.mubr.bf16.mxu0 0
        %1971 = vmatmul.mubr.bf16.gmra.mxu0 %v1907
        %v1972 = vpop.f32.mrf.mxu0
        %v1973 = vadd.f32 0.0, %v1972
        %v1974 = vpop.f32.mrf.mxu0
        %v1975 = vpop.f32.mrf.mxu0
        %v1976 = vadd.f32 0.0, %v1975
        %v1977 = vpop.f32.mrf.mxu0
        %1978 = vmatprep.mubr.bf16.mxu0 0
        %1979 = vmatmul.mubr.bf16.gmra.mxu0 %v1910
        %v1980 = vpop.f32.mrf.mxu0
        %v1981 = vadd.f32 0.0, %v1980
        %v1982 = vpop.f32.mrf.mxu0
        %v1983 = vpop.f32.mrf.mxu0
        %v1984 = vadd.f32 0.0, %v1983
        %v1985 = vpop.f32.mrf.mxu0
        %1986 = vmatprep.mubr.bf16.mxu0 0
        %1987 = vmatmul.mubr.bf16.gmra.mxu0 %v1913
        %v1988 = vpop.f32.mrf.mxu0
        %v1989 = vadd.f32 0.0, %v1988
        %v1990 = vpop.f32.mrf.mxu0
        %v1991 = vpop.f32.mrf.mxu0
        %v1992 = vadd.f32 0.0, %v1991
        %v1993 = vpop.f32.mrf.mxu0
        %1994 = vmatprep.mubr.bf16.mxu0 0
        %1995 = vmatmul.mubr.bf16.gmra.mxu0 %v1916
        %v1996 = vpop.f32.mrf.mxu0
        %v1997 = vadd.f32 0.0, %v1996
        %v1998 = vpop.f32.mrf.mxu0
        %v1999 = vpop.f32.mrf.mxu0
        %v2000 = vadd.f32 0.0, %v1999
        %v2001 = vpop.f32.mrf.mxu0
        %2002 = vmatprep.mubr.bf16.mxu0 0
        %2003 = vmatmul.mubr.bf16.gmra.mxu0 %v1919
        %v2004 = vpop.f32.mrf.mxu0
        %v2005 = vadd.f32 0.0, %v2004
        %v2006 = vpop.f32.mrf.mxu0
        %v2007 = vpop.f32.mrf.mxu0
        %v2008 = vadd.f32 0.0, %v2007
        %v2009 = vpop.f32.mrf.mxu0
        %2010 = vmatprep.mubr.bf16.mxu0 0
        %2011 = vmatmul.mubr.bf16.gmra.mxu0 %v1922
        %v2012 = vpop.f32.mrf.mxu0
        %v2013 = vadd.f32 0.0, %v2012
        %v2014 = vpop.f32.mrf.mxu0
        %v2015 = vpop.f32.mrf.mxu0
        %v2016 = vadd.f32 0.0, %v2015
        %v2017 = vpop.f32.mrf.mxu0
        %2018 = vmatprep.mubr.bf16.mxu0 0
        %2019 = vmatmul.mubr.bf16.gmra.mxu0 %v1925
        %v2020 = vpop.f32.mrf.mxu0
        %v2021 = vadd.f32 0.0, %v2020
        %v2022 = vpop.f32.mrf.mxu0
        %v2023 = vpop.f32.mrf.mxu0
        %v2024 = vadd.f32 0.0, %v2023
        %v2025 = vpop.f32.mrf.mxu0
        %2026 = vdwg.mxu0
        %v2027 = vadd.f32 %v1830, %v1965
        %v2028 = vadd.f32 %v1831, %v1968
        %v2029 = vadd.f32 %v1832, %v1973
        %v2030 = vadd.f32 %v1833, %v1976
        %v2031 = vadd.f32 %v1834, %v1981
        %v2032 = vadd.f32 %v1835, %v1984
        %v2033 = vadd.f32 %v1836, %v1989
        %v2034 = vadd.f32 %v1837, %v1992
        %v2035 = vadd.f32 %v1838, %v1997
        %v2036 = vadd.f32 %v1839, %v2000
        %v2037 = vadd.f32 %v1840, %v2005
        %v2038 = vadd.f32 %v1841, %v2008
        %v2039 = vadd.f32 %v1842, %v2013
        %v2040 = vadd.f32 %v1843, %v2016
        %v2041 = vadd.f32 %v1844, %v2021
        %v2042 = vadd.f32 %v1845, %v2024
        %v2043 = vld [vmem:[%s885] sm:$0xf]
        %v2044 = vld [vmem:[%s885 + $0x4] sm:$0xf]
        %v2045 = vld [vmem:[%s885 + $0x8] sm:$0x1]
        %v2046 = vld [vmem:[%s885 + $0xc] sm:$0xf]
        %v2047 = vld [vmem:[%s885 + $0x10] sm:$0xf]
        %v2048 = vld [vmem:[%s885 + $0x14] sm:$0x1]
        %v2049 = vld [vmem:[%s885 + $0x18] sm:$0xf]
        %v2050 = vld [vmem:[%s885 + $0x1c] sm:$0xf]
        %v2051 = vld [vmem:[%s885 + $0x20] sm:$0x1]
        %v2052 = vld [vmem:[%s885 + $0x24] sm:$0xf]
        %v2053 = vld [vmem:[%s885 + $0x28] sm:$0xf]
        %v2054 = vld [vmem:[%s885 + $0x2c] sm:$0x1]
        %v2055 = vld [vmem:[%s885 + $0x30] sm:$0xf]
        %v2056 = vld [vmem:[%s885 + $0x34] sm:$0xf]
        %v2057 = vld [vmem:[%s885 + $0x38] sm:$0x1]
        %v2058 = vld [vmem:[%s885 + $0x3c] sm:$0xf]
        %v2059 = vld [vmem:[%s885 + $0x40] sm:$0xf]
        %v2060 = vld [vmem:[%s885 + $0x44] sm:$0x1]
        %v2061 = vld [vmem:[%s885 + $0x48] sm:$0xf]
        %v2062 = vld [vmem:[%s885 + $0x4c] sm:$0xf]
        %v2063 = vld [vmem:[%s885 + $0x50] sm:$0x1]
        %v2064 = vld [vmem:[%s885 + $0x54] sm:$0xf]
        %v2065 = vld [vmem:[%s885 + $0x58] sm:$0xf]
        %v2066 = vld [vmem:[%s885 + $0x5c] sm:$0x1]
        %v2068 = vshrl.u32 %v2043, 16
        %v2070 = vrot.slane %v2068, 4
        %v2071 = vshll.u32 %v2043, 16
        %v2073 = vrot.slane %v2071, 5
        %v2074 = vor.u32 %v2070, %v2073
        %v2075 = vrot.slane %v2074, 4
        %v2077 = vshll.u32 %v2044, 16
        %v2079 = vrot.slane %v2077, 5
        %v2080 = vsel %vm1090, %v2075, %v2079
        %v2081 = vshrl.u32 %v2044, 16
        %v2083 = vrot.slane %v2081, 4
        %v2084 = vor.u32 %v2083, %v2079
        %v2085 = vrot.slane %v2084, 4
        %v2087 = vshll.u32 %v2045, 16
        %v2089 = vrot.slane %v2087, 5
        %v2090 = vsel %vm1090, %v2085, %v2089
        %v2092 = vshrl.u32 %v2046, 16
        %v2094 = vrot.slane %v2092, 4
        %v2095 = vshll.u32 %v2046, 16
        %v2097 = vrot.slane %v2095, 5
        %v2098 = vor.u32 %v2094, %v2097
        %v2099 = vrot.slane %v2098, 4
        %v2101 = vshll.u32 %v2047, 16
        %v2103 = vrot.slane %v2101, 5
        %v2104 = vsel %vm1090, %v2099, %v2103
        %v2105 = vshrl.u32 %v2047, 16
        %v2107 = vrot.slane %v2105, 4
        %v2108 = vor.u32 %v2107, %v2103
        %v2109 = vrot.slane %v2108, 4
        %v2111 = vshll.u32 %v2048, 16
        %v2113 = vrot.slane %v2111, 5
        %v2114 = vsel %vm1090, %v2109, %v2113
        %v2116 = vshrl.u32 %v2049, 16
        %v2118 = vrot.slane %v2116, 4
        %v2119 = vshll.u32 %v2049, 16
        %v2121 = vrot.slane %v2119, 5
        %v2122 = vor.u32 %v2118, %v2121
        %v2123 = vrot.slane %v2122, 4
        %v2125 = vshll.u32 %v2050, 16
        %v2127 = vrot.slane %v2125, 5
        %v2128 = vsel %vm1090, %v2123, %v2127
        %v2129 = vshrl.u32 %v2050, 16
        %v2131 = vrot.slane %v2129, 4
        %v2132 = vor.u32 %v2131, %v2127
        %v2133 = vrot.slane %v2132, 4
        %v2135 = vshll.u32 %v2051, 16
        %v2137 = vrot.slane %v2135, 5
        %v2138 = vsel %vm1090, %v2133, %v2137
        %v2140 = vshrl.u32 %v2052, 16
        %v2142 = vrot.slane %v2140, 4
        %v2143 = vshll.u32 %v2052, 16
        %v2145 = vrot.slane %v2143, 5
        %v2146 = vor.u32 %v2142, %v2145
        %v2147 = vrot.slane %v2146, 4
        %v2149 = vshll.u32 %v2053, 16
        %v2151 = vrot.slane %v2149, 5
        %v2152 = vsel %vm1090, %v2147, %v2151
        %v2153 = vshrl.u32 %v2053, 16
        %v2155 = vrot.slane %v2153, 4
        %v2156 = vor.u32 %v2155, %v2151
        %v2157 = vrot.slane %v2156, 4
        %v2159 = vshll.u32 %v2054, 16
        %v2161 = vrot.slane %v2159, 5
        %v2162 = vsel %vm1090, %v2157, %v2161
        %v2164 = vshrl.u32 %v2055, 16
        %v2166 = vrot.slane %v2164, 4
        %v2167 = vshll.u32 %v2055, 16
        %v2169 = vrot.slane %v2167, 5
        %v2170 = vor.u32 %v2166, %v2169
        %v2171 = vrot.slane %v2170, 4
        %v2173 = vshll.u32 %v2056, 16
        %v2175 = vrot.slane %v2173, 5
        %v2176 = vsel %vm1090, %v2171, %v2175
        %v2177 = vshrl.u32 %v2056, 16
        %v2179 = vrot.slane %v2177, 4
        %v2180 = vor.u32 %v2179, %v2175
        %v2181 = vrot.slane %v2180, 4
        %v2183 = vshll.u32 %v2057, 16
        %v2185 = vrot.slane %v2183, 5
        %v2186 = vsel %vm1090, %v2181, %v2185
        %v2188 = vshrl.u32 %v2058, 16
        %v2190 = vrot.slane %v2188, 4
        %v2191 = vshll.u32 %v2058, 16
        %v2193 = vrot.slane %v2191, 5
        %v2194 = vor.u32 %v2190, %v2193
        %v2195 = vrot.slane %v2194, 4
        %v2197 = vshll.u32 %v2059, 16
        %v2199 = vrot.slane %v2197, 5
        %v2200 = vsel %vm1090, %v2195, %v2199
        %v2201 = vshrl.u32 %v2059, 16
        %v2203 = vrot.slane %v2201, 4
        %v2204 = vor.u32 %v2203, %v2199
        %v2205 = vrot.slane %v2204, 4
        %v2207 = vshll.u32 %v2060, 16
        %v2209 = vrot.slane %v2207, 5
        %v2210 = vsel %vm1090, %v2205, %v2209
        %v2212 = vshrl.u32 %v2061, 16
        %v2214 = vrot.slane %v2212, 4
        %v2215 = vshll.u32 %v2061, 16
        %v2217 = vrot.slane %v2215, 5
        %v2218 = vor.u32 %v2214, %v2217
        %v2219 = vrot.slane %v2218, 4
        %v2221 = vshll.u32 %v2062, 16
        %v2223 = vrot.slane %v2221, 5
        %v2224 = vsel %vm1090, %v2219, %v2223
        %v2225 = vshrl.u32 %v2062, 16
        %v2227 = vrot.slane %v2225, 4
        %v2228 = vor.u32 %v2227, %v2223
        %v2229 = vrot.slane %v2228, 4
        %v2231 = vshll.u32 %v2063, 16
        %v2233 = vrot.slane %v2231, 5
        %v2234 = vsel %vm1090, %v2229, %v2233
        %v2236 = vshrl.u32 %v2064, 16
        %v2238 = vrot.slane %v2236, 4
        %v2239 = vshll.u32 %v2064, 16
        %v2241 = vrot.slane %v2239, 5
        %v2242 = vor.u32 %v2238, %v2241
        %v2243 = vrot.slane %v2242, 4
        %v2245 = vshll.u32 %v2065, 16
        %v2247 = vrot.slane %v2245, 5
        %v2248 = vsel %vm1090, %v2243, %v2247
        %v2249 = vshrl.u32 %v2065, 16
        %v2251 = vrot.slane %v2249, 4
        %v2252 = vor.u32 %v2251, %v2247
        %v2253 = vrot.slane %v2252, 4
        %v2255 = vshll.u32 %v2066, 16
        %v2257 = vrot.slane %v2255, 5
        %v2258 = vsel %vm1090, %v2253, %v2257
        %v2259 = vld [vmem:[%s5 + $0x10] sm:$0xf]
        %v2260 = vunpack.c.l.b16 %v2080
        %v2261 = vunpack.c.l.b16 %v2090
        %v2262 = vunpack.c.l.b16 %v2104
        %v2263 = vunpack.c.l.b16 %v2114
        %v2264 = vunpack.c.l.b16 %v2128
        %v2265 = vunpack.c.l.b16 %v2138
        %v2266 = vunpack.c.l.b16 %v2152
        %v2267 = vunpack.c.l.b16 %v2162
        %v2268 = vunpack.c.l.b16 %v2176
        %v2269 = vunpack.c.l.b16 %v2186
        %v2270 = vunpack.c.l.b16 %v2200
        %v2271 = vunpack.c.l.b16 %v2210
        %v2272 = vunpack.c.l.b16 %v2224
        %v2273 = vunpack.c.l.b16 %v2234
        %v2274 = vunpack.c.l.b16 %v2248
        %v2275 = vunpack.c.l.b16 %v2258
        %v2276 = vpack.c.b16 %v2261, %v2260
        %v2277 = vpack.c.b16 %v2263, %v2262
        %v2278 = vpack.c.b16 %v2265, %v2264
        %v2279 = vpack.c.b16 %v2267, %v2266
        %v2280 = vpack.c.b16 %v2269, %v2268
        %v2281 = vpack.c.b16 %v2271, %v2270
        %v2282 = vpack.c.b16 %v2273, %v2272
        %v2283 = vpack.c.b16 %v2275, %v2274
        %v2285 = vsel %vm1308, %v2276, 0
        %v2288 = vsel %vm1308, %v2277, 0
        %v2291 = vsel %vm1308, %v2278, 0
        %v2294 = vsel %vm1308, %v2279, 0
        %v2297 = vsel %vm1308, %v2280, 0
        %v2300 = vsel %vm1308, %v2281, 0
        %v2303 = vsel %vm1308, %v2282, 0
        %v2306 = vsel %vm1308, %v2283, 0
        %v2309 = vsel %vm1333, %v2259, 0
        %2311 = vmatprep.subr.bf16.mxu0 0
        %2312 = vmatpush1.bf16.msra.mxu0 0
        %2313 = vmatprep.subr.bf16.mxu0 0
        %2314 = vmatpush1.bf16.msra.mxu0 0
        %2315 = vmatprep.subr.bf16.mxu0 0
        %2316 = vmatpush1.bf16.msra.mxu0 0
        %2317 = vmatprep.subr.bf16.mxu0 0
        %2318 = vmatpush1.bf16.msra.mxu0 0
        %2319 = vmatprep.subr.bf16.mxu0 0
        %2320 = vmatpush1.bf16.msra.mxu0 0
        %2321 = vmatprep.subr.bf16.mxu0 0
        %2322 = vmatpush1.bf16.msra.mxu0 0
        %2323 = vmatprep.subr.bf16.mxu0 0
        %2324 = vmatpush1.bf16.msra.mxu0 0
        %2325 = vmatprep.subr.bf16.mxu0 0
        %2326 = vmatpush1.bf16.msra.mxu0 %v2309
        %2327 = vmatprep.subr.bf16.mxu0 0
        %2328 = vmatpush2.bf16.msra.mxu0 0
        %2329 = vmatprep.subr.bf16.mxu0 0
        %2330 = vmatpush2.bf16.msra.mxu0 0
        %2331 = vmatprep.subr.bf16.mxu0 0
        %2332 = vmatpush2.bf16.msra.mxu0 0
        %2333 = vmatprep.subr.bf16.mxu0 0
        %2334 = vmatpush2.bf16.msra.mxu0 0
        %2335 = vmatprep.subr.bf16.mxu0 0
        %2336 = vmatpush2.bf16.msra.mxu0 0
        %2337 = vmatprep.subr.bf16.mxu0 0
        %2338 = vmatpush2.bf16.msra.mxu0 0
        %2339 = vmatprep.subr.bf16.mxu0 0
        %2340 = vmatpush2.bf16.msra.mxu0 0
        %2341 = vmatprep.subr.bf16.mxu0 0
        %2342 = vmatpush2.bf16.msra.mxu0 0
        %2343 = vmatprep.mubr.bf16.mxu0 0
        %2344 = vmatmul.mubr.bf16.gmra.mxu0 %v2285
        %v2345 = vpop.f32.mrf.mxu0
        %v2346 = vadd.f32 0.0, %v2345
        %v2347 = vpop.f32.mrf.mxu0
        %v2348 = vpop.f32.mrf.mxu0
        %v2349 = vadd.f32 0.0, %v2348
        %v2350 = vpop.f32.mrf.mxu0
        %2351 = vmatprep.mubr.bf16.mxu0 0
        %2352 = vmatmul.mubr.bf16.gmra.mxu0 %v2288
        %v2353 = vpop.f32.mrf.mxu0
        %v2354 = vadd.f32 0.0, %v2353
        %v2355 = vpop.f32.mrf.mxu0
        %v2356 = vpop.f32.mrf.mxu0
        %v2357 = vadd.f32 0.0, %v2356
        %v2358 = vpop.f32.mrf.mxu0
        %2359 = vmatprep.mubr.bf16.mxu0 0
        %2360 = vmatmul.mubr.bf16.gmra.mxu0 %v2291
        %v2361 = vpop.f32.mrf.mxu0
        %v2362 = vadd.f32 0.0, %v2361
        %v2363 = vpop.f32.mrf.mxu0
        %v2364 = vpop.f32.mrf.mxu0
        %v2365 = vadd.f32 0.0, %v2364
        %v2366 = vpop.f32.mrf.mxu0
        %2367 = vmatprep.mubr.bf16.mxu0 0
        %2368 = vmatmul.mubr.bf16.gmra.mxu0 %v2294
        %v2369 = vpop.f32.mrf.mxu0
        %v2370 = vadd.f32 0.0, %v2369
        %v2371 = vpop.f32.mrf.mxu0
        %v2372 = vpop.f32.mrf.mxu0
        %v2373 = vadd.f32 0.0, %v2372
        %v2374 = vpop.f32.mrf.mxu0
        %2375 = vmatprep.mubr.bf16.mxu0 0
        %2376 = vmatmul.mubr.bf16.gmra.mxu0 %v2297
        %v2377 = vpop.f32.mrf.mxu0
        %v2378 = vadd.f32 0.0, %v2377
        %v2379 = vpop.f32.mrf.mxu0
        %v2380 = vpop.f32.mrf.mxu0
        %v2381 = vadd.f32 0.0, %v2380
        %v2382 = vpop.f32.mrf.mxu0
        %2383 = vmatprep.mubr.bf16.mxu0 0
        %2384 = vmatmul.mubr.bf16.gmra.mxu0 %v2300
        %v2385 = vpop.f32.mrf.mxu0
        %v2386 = vadd.f32 0.0, %v2385
        %v2387 = vpop.f32.mrf.mxu0
        %v2388 = vpop.f32.mrf.mxu0
        %v2389 = vadd.f32 0.0, %v2388
        %v2390 = vpop.f32.mrf.mxu0
        %2391 = vmatprep.mubr.bf16.mxu0 0
        %2392 = vmatmul.mubr.bf16.gmra.mxu0 %v2303
        %v2393 = vpop.f32.mrf.mxu0
        %v2394 = vadd.f32 0.0, %v2393
        %v2395 = vpop.f32.mrf.mxu0
        %v2396 = vpop.f32.mrf.mxu0
        %v2397 = vadd.f32 0.0, %v2396
        %v2398 = vpop.f32.mrf.mxu0
        %2399 = vmatprep.mubr.bf16.mxu0 0
        %2400 = vmatmul.mubr.bf16.gmra.mxu0 %v2306
        %v2401 = vpop.f32.mrf.mxu0
        %v2402 = vadd.f32 0.0, %v2401
        %v2403 = vpop.f32.mrf.mxu0
        %v2404 = vpop.f32.mrf.mxu0
        %v2405 = vadd.f32 0.0, %v2404
        %v2406 = vpop.f32.mrf.mxu0
        %2407 = vdwg.mxu0
        %v2408 = vadd.f32 %v2027, %v2346
        %v2409 = vadd.f32 %v2028, %v2349
        %v2410 = vadd.f32 %v2029, %v2354
        %v2411 = vadd.f32 %v2030, %v2357
        %v2412 = vadd.f32 %v2031, %v2362
        %v2413 = vadd.f32 %v2032, %v2365
        %v2414 = vadd.f32 %v2033, %v2370
        %v2415 = vadd.f32 %v2034, %v2373
        %v2416 = vadd.f32 %v2035, %v2378
        %v2417 = vadd.f32 %v2036, %v2381
        %v2418 = vadd.f32 %v2037, %v2386
        %v2419 = vadd.f32 %v2038, %v2389
        %v2420 = vadd.f32 %v2039, %v2394
        %v2421 = vadd.f32 %v2040, %v2397
        %v2422 = vadd.f32 %v2041, %v2402
        %v2423 = vadd.f32 %v2042, %v2405
        %v2424 = vld [vmem:[%s885] sm:$0xe]
        %v2425 = vld [vmem:[%s885 + $0xc] sm:$0xe]
        %v2426 = vld [vmem:[%s885 + $0x18] sm:$0xe]
        %v2427 = vld [vmem:[%s885 + $0x24] sm:$0xe]
        %v2428 = vld [vmem:[%s885 + $0x30] sm:$0xe]
        %v2429 = vld [vmem:[%s885 + $0x3c] sm:$0xe]
        %v2430 = vld [vmem:[%s885 + $0x48] sm:$0xe]
        %v2431 = vld [vmem:[%s885 + $0x54] sm:$0xe]
        %v2456 = vrot.slane %v2424, 5
        %v2457 = vrot.slane %v2456, 4
        %v2458 = vrot.slane %v2044, 5
        %v2459 = vsel %vm1624, %v2457, %v2458
        %v2460 = vrot.slane %v2458, 4
        %v2461 = vrot.slane %v2045, 5
        %v2462 = vsel %vm1624, %v2460, %v2461
        %v2463 = vrot.slane %v2425, 5
        %v2464 = vrot.slane %v2463, 4
        %v2465 = vrot.slane %v2047, 5
        %v2466 = vsel %vm1624, %v2464, %v2465
        %v2467 = vrot.slane %v2465, 4
        %v2468 = vrot.slane %v2048, 5
        %v2469 = vsel %vm1624, %v2467, %v2468
        %v2470 = vrot.slane %v2426, 5
        %v2471 = vrot.slane %v2470, 4
        %v2472 = vrot.slane %v2050, 5
        %v2473 = vsel %vm1624, %v2471, %v2472
        %v2474 = vrot.slane %v2472, 4
        %v2475 = vrot.slane %v2051, 5
        %v2476 = vsel %vm1624, %v2474, %v2475
        %v2477 = vrot.slane %v2427, 5
        %v2478 = vrot.slane %v2477, 4
        %v2479 = vrot.slane %v2053, 5
        %v2480 = vsel %vm1624, %v2478, %v2479
        %v2481 = vrot.slane %v2479, 4
        %v2482 = vrot.slane %v2054, 5
        %v2483 = vsel %vm1624, %v2481, %v2482
        %v2484 = vrot.slane %v2428, 5
        %v2485 = vrot.slane %v2484, 4
        %v2486 = vrot.slane %v2056, 5
        %v2487 = vsel %vm1624, %v2485, %v2486
        %v2488 = vrot.slane %v2486, 4
        %v2489 = vrot.slane %v2057, 5
        %v2490 = vsel %vm1624, %v2488, %v2489
        %v2491 = vrot.slane %v2429, 5
        %v2492 = vrot.slane %v2491, 4
        %v2493 = vrot.slane %v2059, 5
        %v2494 = vsel %vm1624, %v2492, %v2493
        %v2495 = vrot.slane %v2493, 4
        %v2496 = vrot.slane %v2060, 5
        %v2497 = vsel %vm1624, %v2495, %v2496
        %v2498 = vrot.slane %v2430, 5
        %v2499 = vrot.slane %v2498, 4
        %v2500 = vrot.slane %v2062, 5
        %v2501 = vsel %vm1624, %v2499, %v2500
        %v2502 = vrot.slane %v2500, 4
        %v2503 = vrot.slane %v2063, 5
        %v2504 = vsel %vm1624, %v2502, %v2503
        %v2505 = vrot.slane %v2431, 5
        %v2506 = vrot.slane %v2505, 4
        %v2507 = vrot.slane %v2065, 5
        %v2508 = vsel %vm1624, %v2506, %v2507
        %v2509 = vrot.slane %v2507, 4
        %v2510 = vrot.slane %v2066, 5
        %v2511 = vsel %vm1624, %v2509, %v2510
        %v2512 = vld [vmem:[%s5 + $0x14] sm:$0xf]
        %v2513 = vunpack.c.l.b16 %v2459
        %v2514 = vunpack.c.l.b16 %v2462
        %v2515 = vunpack.c.l.b16 %v2466
        %v2516 = vunpack.c.l.b16 %v2469
        %v2517 = vunpack.c.l.b16 %v2473
        %v2518 = vunpack.c.l.b16 %v2476
        %v2519 = vunpack.c.l.b16 %v2480
        %v2520 = vunpack.c.l.b16 %v2483
        %v2521 = vunpack.c.l.b16 %v2487
        %v2522 = vunpack.c.l.b16 %v2490
        %v2523 = vunpack.c.l.b16 %v2494
        %v2524 = vunpack.c.l.b16 %v2497
        %v2525 = vunpack.c.l.b16 %v2501
        %v2526 = vunpack.c.l.b16 %v2504
        %v2527 = vunpack.c.l.b16 %v2508
        %v2528 = vunpack.c.l.b16 %v2511
        %v2529 = vpack.c.b16 %v2514, %v2513
        %v2530 = vpack.c.b16 %v2516, %v2515
        %v2531 = vpack.c.b16 %v2518, %v2517
        %v2532 = vpack.c.b16 %v2520, %v2519
        %v2533 = vpack.c.b16 %v2522, %v2521
        %v2534 = vpack.c.b16 %v2524, %v2523
        %v2535 = vpack.c.b16 %v2526, %v2525
        %v2536 = vpack.c.b16 %v2528, %v2527
        %v2538 = vsel %vm1308, %v2529, 0
        %v2541 = vsel %vm1308, %v2530, 0
        %v2544 = vsel %vm1308, %v2531, 0
        %v2547 = vsel %vm1308, %v2532, 0
        %v2550 = vsel %vm1308, %v2533, 0
        %v2553 = vsel %vm1308, %v2534, 0
        %v2556 = vsel %vm1308, %v2535, 0
        %v2559 = vsel %vm1308, %v2536, 0
        %v2562 = vsel %vm1333, %v2512, 0
        %2564 = vmatprep.subr.bf16.mxu0 0
        %2565 = vmatpush1.bf16.msra.mxu0 0
        %2566 = vmatprep.subr.bf16.mxu0 0
        %2567 = vmatpush1.bf16.msra.mxu0 0
        %2568 = vmatprep.subr.bf16.mxu0 0
        %2569 = vmatpush1.bf16.msra.mxu0 0
        %2570 = vmatprep.subr.bf16.mxu0 0
        %2571 = vmatpush1.bf16.msra.mxu0 0
        %2572 = vmatprep.subr.bf16.mxu0 0
        %2573 = vmatpush1.bf16.msra.mxu0 0
        %2574 = vmatprep.subr.bf16.mxu0 0
        %2575 = vmatpush1.bf16.msra.mxu0 0
        %2576 = vmatprep.subr.bf16.mxu0 0
        %2577 = vmatpush1.bf16.msra.mxu0 0
        %2578 = vmatprep.subr.bf16.mxu0 0
        %2579 = vmatpush1.bf16.msra.mxu0 %v2562
        %2580 = vmatprep.subr.bf16.mxu0 0
        %2581 = vmatpush2.bf16.msra.mxu0 0
        %2582 = vmatprep.subr.bf16.mxu0 0
        %2583 = vmatpush2.bf16.msra.mxu0 0
        %2584 = vmatprep.subr.bf16.mxu0 0
        %2585 = vmatpush2.bf16.msra.mxu0 0
        %2586 = vmatprep.subr.bf16.mxu0 0
        %2587 = vmatpush2.bf16.msra.mxu0 0
        %2588 = vmatprep.subr.bf16.mxu0 0
        %2589 = vmatpush2.bf16.msra.mxu0 0
        %2590 = vmatprep.subr.bf16.mxu0 0
        %2591 = vmatpush2.bf16.msra.mxu0 0
        %2592 = vmatprep.subr.bf16.mxu0 0
        %2593 = vmatpush2.bf16.msra.mxu0 0
        %2594 = vmatprep.subr.bf16.mxu0 0
        %2595 = vmatpush2.bf16.msra.mxu0 0
        %2596 = vmatprep.mubr.bf16.mxu0 0
        %2597 = vmatmul.mubr.bf16.gmra.mxu0 %v2538
        %v2598 = vpop.f32.mrf.mxu0
        %v2599 = vadd.f32 0.0, %v2598
        %v2600 = vpop.f32.mrf.mxu0
        %v2601 = vpop.f32.mrf.mxu0
        %v2602 = vadd.f32 0.0, %v2601
        %v2603 = vpop.f32.mrf.mxu0
        %2604 = vmatprep.mubr.bf16.mxu0 0
        %2605 = vmatmul.mubr.bf16.gmra.mxu0 %v2541
        %v2606 = vpop.f32.mrf.mxu0
        %v2607 = vadd.f32 0.0, %v2606
        %v2608 = vpop.f32.mrf.mxu0
        %v2609 = vpop.f32.mrf.mxu0
        %v2610 = vadd.f32 0.0, %v2609
        %v2611 = vpop.f32.mrf.mxu0
        %2612 = vmatprep.mubr.bf16.mxu0 0
        %2613 = vmatmul.mubr.bf16.gmra.mxu0 %v2544
        %v2614 = vpop.f32.mrf.mxu0
        %v2615 = vadd.f32 0.0, %v2614
        %v2616 = vpop.f32.mrf.mxu0
        %v2617 = vpop.f32.mrf.mxu0
        %v2618 = vadd.f32 0.0, %v2617
        %v2619 = vpop.f32.mrf.mxu0
        %2620 = vmatprep.mubr.bf16.mxu0 0
        %2621 = vmatmul.mubr.bf16.gmra.mxu0 %v2547
        %v2622 = vpop.f32.mrf.mxu0
        %v2623 = vadd.f32 0.0, %v2622
        %v2624 = vpop.f32.mrf.mxu0
        %v2625 = vpop.f32.mrf.mxu0
        %v2626 = vadd.f32 0.0, %v2625
        %v2627 = vpop.f32.mrf.mxu0
        %2628 = vmatprep.mubr.bf16.mxu0 0
        %2629 = vmatmul.mubr.bf16.gmra.mxu0 %v2550
        %v2630 = vpop.f32.mrf.mxu0
        %v2631 = vadd.f32 0.0, %v2630
        %v2632 = vpop.f32.mrf.mxu0
        %v2633 = vpop.f32.mrf.mxu0
        %v2634 = vadd.f32 0.0, %v2633
        %v2635 = vpop.f32.mrf.mxu0
        %2636 = vmatprep.mubr.bf16.mxu0 0
        %2637 = vmatmul.mubr.bf16.gmra.mxu0 %v2553
        %v2638 = vpop.f32.mrf.mxu0
        %v2639 = vadd.f32 0.0, %v2638
        %v2640 = vpop.f32.mrf.mxu0
        %v2641 = vpop.f32.mrf.mxu0
        %v2642 = vadd.f32 0.0, %v2641
        %v2643 = vpop.f32.mrf.mxu0
        %2644 = vmatprep.mubr.bf16.mxu0 0
        %2645 = vmatmul.mubr.bf16.gmra.mxu0 %v2556
        %v2646 = vpop.f32.mrf.mxu0
        %v2647 = vadd.f32 0.0, %v2646
        %v2648 = vpop.f32.mrf.mxu0
        %v2649 = vpop.f32.mrf.mxu0
        %v2650 = vadd.f32 0.0, %v2649
        %v2651 = vpop.f32.mrf.mxu0
        %2652 = vmatprep.mubr.bf16.mxu0 0
        %2653 = vmatmul.mubr.bf16.gmra.mxu0 %v2559
        %v2654 = vpop.f32.mrf.mxu0
        %v2655 = vadd.f32 0.0, %v2654
        %v2656 = vpop.f32.mrf.mxu0
        %v2657 = vpop.f32.mrf.mxu0
        %v2658 = vadd.f32 0.0, %v2657
        %v2659 = vpop.f32.mrf.mxu0
        %2660 = vdwg.mxu0
        %v2661 = vadd.f32 %v2408, %v2599
        %v2662 = vadd.f32 %v2409, %v2602
        %v2663 = vadd.f32 %v2410, %v2607
        %v2664 = vadd.f32 %v2411, %v2610
        %v2665 = vadd.f32 %v2412, %v2615
        %v2666 = vadd.f32 %v2413, %v2618
        %v2667 = vadd.f32 %v2414, %v2623
        %v2668 = vadd.f32 %v2415, %v2626
        %v2669 = vadd.f32 %v2416, %v2631
        %v2670 = vadd.f32 %v2417, %v2634
        %v2671 = vadd.f32 %v2418, %v2639
        %v2672 = vadd.f32 %v2419, %v2642
        %v2673 = vadd.f32 %v2420, %v2647
        %v2674 = vadd.f32 %v2421, %v2650
        %v2675 = vadd.f32 %v2422, %v2655
        %v2676 = vadd.f32 %v2423, %v2658
        %s2677 = scalar_lea.vmem [#allocation2], 24
        %v2678 = vld [vmem:[%s2677] sm:$0xf]
        %v2679 = vld [vmem:[%s2677 + $0x4] sm:$0xf]
        %v2680 = vld [vmem:[%s2677 + $0xc] sm:$0xf]
        %v2681 = vld [vmem:[%s2677 + $0x10] sm:$0xf]
        %v2682 = vld [vmem:[%s2677 + $0x18] sm:$0xf]
        %v2683 = vld [vmem:[%s2677 + $0x1c] sm:$0xf]
        %v2684 = vld [vmem:[%s2677 + $0x24] sm:$0xf]
        %v2685 = vld [vmem:[%s2677 + $0x28] sm:$0xf]
        %v2686 = vld [vmem:[%s2677 + $0x30] sm:$0xf]
        %v2687 = vld [vmem:[%s2677 + $0x34] sm:$0xf]
        %v2688 = vld [vmem:[%s2677 + $0x3c] sm:$0xf]
        %v2689 = vld [vmem:[%s2677 + $0x40] sm:$0xf]
        %v2690 = vld [vmem:[%s2677 + $0x48] sm:$0xf]
        %v2691 = vld [vmem:[%s2677 + $0x4c] sm:$0xf]
        %v2692 = vld [vmem:[%s2677 + $0x54] sm:$0xf]
        %v2693 = vld [vmem:[%s2677 + $0x58] sm:$0xf]
        %v2694 = vld [vmem:[%s5 + $0x18] sm:$0xf]
        %v2711 = vunpack.c.l.b16 %v2678
        %v2712 = vunpack.c.l.b16 %v2679
        %v2713 = vunpack.c.l.b16 %v2680
        %v2714 = vunpack.c.l.b16 %v2681
        %v2715 = vunpack.c.l.b16 %v2682
        %v2716 = vunpack.c.l.b16 %v2683
        %v2717 = vunpack.c.l.b16 %v2684
        %v2718 = vunpack.c.l.b16 %v2685
        %v2719 = vunpack.c.l.b16 %v2686
        %v2720 = vunpack.c.l.b16 %v2687
        %v2721 = vunpack.c.l.b16 %v2688
        %v2722 = vunpack.c.l.b16 %v2689
        %v2723 = vunpack.c.l.b16 %v2690
        %v2724 = vunpack.c.l.b16 %v2691
        %v2725 = vunpack.c.l.b16 %v2692
        %v2726 = vunpack.c.l.b16 %v2693
        %v2727 = vpack.c.b16 %v2712, %v2711
        %v2728 = vpack.c.b16 %v2714, %v2713
        %v2729 = vpack.c.b16 %v2716, %v2715
        %v2730 = vpack.c.b16 %v2718, %v2717
        %v2731 = vpack.c.b16 %v2720, %v2719
        %v2732 = vpack.c.b16 %v2722, %v2721
        %v2733 = vpack.c.b16 %v2724, %v2723
        %v2734 = vpack.c.b16 %v2726, %v2725
        %v2736 = vsel %vm1308, %v2727, 0
        %v2739 = vsel %vm1308, %v2728, 0
        %v2742 = vsel %vm1308, %v2729, 0
        %v2745 = vsel %vm1308, %v2730, 0
        %v2748 = vsel %vm1308, %v2731, 0
        %v2751 = vsel %vm1308, %v2732, 0
        %v2754 = vsel %vm1308, %v2733, 0
        %v2757 = vsel %vm1308, %v2734, 0
        %v2760 = vsel %vm1333, %v2694, 0
        %2762 = vmatprep.subr.bf16.mxu0 0
        %2763 = vmatpush1.bf16.msra.mxu0 0
        %2764 = vmatprep.subr.bf16.mxu0 0
        %2765 = vmatpush1.bf16.msra.mxu0 0
        %2766 = vmatprep.subr.bf16.mxu0 0
        %2767 = vmatpush1.bf16.msra.mxu0 0
        %2768 = vmatprep.subr.bf16.mxu0 0
        %2769 = vmatpush1.bf16.msra.mxu0 0
        %2770 = vmatprep.subr.bf16.mxu0 0
        %2771 = vmatpush1.bf16.msra.mxu0 0
        %2772 = vmatprep.subr.bf16.mxu0 0
        %2773 = vmatpush1.bf16.msra.mxu0 0
        %2774 = vmatprep.subr.bf16.mxu0 0
        %2775 = vmatpush1.bf16.msra.mxu0 0
        %2776 = vmatprep.subr.bf16.mxu0 0
        %2777 = vmatpush1.bf16.msra.mxu0 %v2760
        %2778 = vmatprep.subr.bf16.mxu0 0
        %2779 = vmatpush2.bf16.msra.mxu0 0
        %2780 = vmatprep.subr.bf16.mxu0 0
        %2781 = vmatpush2.bf16.msra.mxu0 0
        %2782 = vmatprep.subr.bf16.mxu0 0
        %2783 = vmatpush2.bf16.msra.mxu0 0
        %2784 = vmatprep.subr.bf16.mxu0 0
        %2785 = vmatpush2.bf16.msra.mxu0 0
        %2786 = vmatprep.subr.bf16.mxu0 0
        %2787 = vmatpush2.bf16.msra.mxu0 0
        %2788 = vmatprep.subr.bf16.mxu0 0
        %2789 = vmatpush2.bf16.msra.mxu0 0
        %2790 = vmatprep.subr.bf16.mxu0 0
        %2791 = vmatpush2.bf16.msra.mxu0 0
        %2792 = vmatprep.subr.bf16.mxu0 0
        %2793 = vmatpush2.bf16.msra.mxu0 0
        %2794 = vmatprep.mubr.bf16.mxu0 0
        %2795 = vmatmul.mubr.bf16.gmra.mxu0 %v2736
        %v2796 = vpop.f32.mrf.mxu0
        %v2797 = vadd.f32 0.0, %v2796
        %v2798 = vpop.f32.mrf.mxu0
        %v2799 = vpop.f32.mrf.mxu0
        %v2800 = vadd.f32 0.0, %v2799
        %v2801 = vpop.f32.mrf.mxu0
        %2802 = vmatprep.mubr.bf16.mxu0 0
        %2803 = vmatmul.mubr.bf16.gmra.mxu0 %v2739
        %v2804 = vpop.f32.mrf.mxu0
        %v2805 = vadd.f32 0.0, %v2804
        %v2806 = vpop.f32.mrf.mxu0
        %v2807 = vpop.f32.mrf.mxu0
        %v2808 = vadd.f32 0.0, %v2807
        %v2809 = vpop.f32.mrf.mxu0
        %2810 = vmatprep.mubr.bf16.mxu0 0
        %2811 = vmatmul.mubr.bf16.gmra.mxu0 %v2742
        %v2812 = vpop.f32.mrf.mxu0
        %v2813 = vadd.f32 0.0, %v2812
        %v2814 = vpop.f32.mrf.mxu0
        %v2815 = vpop.f32.mrf.mxu0
        %v2816 = vadd.f32 0.0, %v2815
        %v2817 = vpop.f32.mrf.mxu0
        %2818 = vmatprep.mubr.bf16.mxu0 0
        %2819 = vmatmul.mubr.bf16.gmra.mxu0 %v2745
        %v2820 = vpop.f32.mrf.mxu0
        %v2821 = vadd.f32 0.0, %v2820
        %v2822 = vpop.f32.mrf.mxu0
        %v2823 = vpop.f32.mrf.mxu0
        %v2824 = vadd.f32 0.0, %v2823
        %v2825 = vpop.f32.mrf.mxu0
        %2826 = vmatprep.mubr.bf16.mxu0 0
        %2827 = vmatmul.mubr.bf16.gmra.mxu0 %v2748
        %v2828 = vpop.f32.mrf.mxu0
        %v2829 = vadd.f32 0.0, %v2828
        %v2830 = vpop.f32.mrf.mxu0
        %v2831 = vpop.f32.mrf.mxu0
        %v2832 = vadd.f32 0.0, %v2831
        %v2833 = vpop.f32.mrf.mxu0
        %2834 = vmatprep.mubr.bf16.mxu0 0
        %2835 = vmatmul.mubr.bf16.gmra.mxu0 %v2751
        %v2836 = vpop.f32.mrf.mxu0
        %v2837 = vadd.f32 0.0, %v2836
        %v2838 = vpop.f32.mrf.mxu0
        %v2839 = vpop.f32.mrf.mxu0
        %v2840 = vadd.f32 0.0, %v2839
        %v2841 = vpop.f32.mrf.mxu0
        %2842 = vmatprep.mubr.bf16.mxu0 0
        %2843 = vmatmul.mubr.bf16.gmra.mxu0 %v2754
        %v2844 = vpop.f32.mrf.mxu0
        %v2845 = vadd.f32 0.0, %v2844
        %v2846 = vpop.f32.mrf.mxu0
        %v2847 = vpop.f32.mrf.mxu0
        %v2848 = vadd.f32 0.0, %v2847
        %v2849 = vpop.f32.mrf.mxu0
        %2850 = vmatprep.mubr.bf16.mxu0 0
        %2851 = vmatmul.mubr.bf16.gmra.mxu0 %v2757
        %v2852 = vpop.f32.mrf.mxu0
        %v2853 = vadd.f32 0.0, %v2852
        %v2854 = vpop.f32.mrf.mxu0
        %v2855 = vpop.f32.mrf.mxu0
        %v2856 = vadd.f32 0.0, %v2855
        %v2857 = vpop.f32.mrf.mxu0
        %2858 = vdwg.mxu0
        %v2859 = vadd.f32 %v2661, %v2797
        %v2860 = vadd.f32 %v2662, %v2800
        %v2861 = vadd.f32 %v2663, %v2805
        %v2862 = vadd.f32 %v2664, %v2808
        %v2863 = vadd.f32 %v2665, %v2813
        %v2864 = vadd.f32 %v2666, %v2816
        %v2865 = vadd.f32 %v2667, %v2821
        %v2866 = vadd.f32 %v2668, %v2824
        %v2867 = vadd.f32 %v2669, %v2829
        %v2868 = vadd.f32 %v2670, %v2832
        %v2869 = vadd.f32 %v2671, %v2837
        %v2870 = vadd.f32 %v2672, %v2840
        %v2871 = vadd.f32 %v2673, %v2845
        %v2872 = vadd.f32 %v2674, %v2848
        %v2873 = vadd.f32 %v2675, %v2853
        %v2874 = vadd.f32 %v2676, %v2856
        %v2875 = vld [vmem:[%s2677] sm:$0xf]
        %v2876 = vld [vmem:[%s2677 + $0x4] sm:$0xf]
        %v2877 = vld [vmem:[%s2677 + $0x8] sm:$0x1]
        %v2878 = vld [vmem:[%s2677 + $0xc] sm:$0xf]
        %v2879 = vld [vmem:[%s2677 + $0x10] sm:$0xf]
        %v2880 = vld [vmem:[%s2677 + $0x14] sm:$0x1]
        %v2881 = vld [vmem:[%s2677 + $0x18] sm:$0xf]
        %v2882 = vld [vmem:[%s2677 + $0x1c] sm:$0xf]
        %v2883 = vld [vmem:[%s2677 + $0x20] sm:$0x1]
        %v2884 = vld [vmem:[%s2677 + $0x24] sm:$0xf]
        %v2885 = vld [vmem:[%s2677 + $0x28] sm:$0xf]
        %v2886 = vld [vmem:[%s2677 + $0x2c] sm:$0x1]
        %v2887 = vld [vmem:[%s2677 + $0x30] sm:$0xf]
        %v2888 = vld [vmem:[%s2677 + $0x34] sm:$0xf]
        %v2889 = vld [vmem:[%s2677 + $0x38] sm:$0x1]
        %v2890 = vld [vmem:[%s2677 + $0x3c] sm:$0xf]
        %v2891 = vld [vmem:[%s2677 + $0x40] sm:$0xf]
        %v2892 = vld [vmem:[%s2677 + $0x44] sm:$0x1]
        %v2893 = vld [vmem:[%s2677 + $0x48] sm:$0xf]
        %v2894 = vld [vmem:[%s2677 + $0x4c] sm:$0xf]
        %v2895 = vld [vmem:[%s2677 + $0x50] sm:$0x1]
        %v2896 = vld [vmem:[%s2677 + $0x54] sm:$0xf]
        %v2897 = vld [vmem:[%s2677 + $0x58] sm:$0xf]
        %v2898 = vld [vmem:[%s2677 + $0x5c] sm:$0x1]
        %v2900 = vshrl.u32 %v2875, 16
        %v2902 = vrot.slane %v2900, 4
        %v2903 = vshll.u32 %v2875, 16
        %v2905 = vrot.slane %v2903, 5
        %v2906 = vor.u32 %v2902, %v2905
        %v2907 = vrot.slane %v2906, 4
        %v2909 = vshll.u32 %v2876, 16
        %v2911 = vrot.slane %v2909, 5
        %v2912 = vsel %vm1090, %v2907, %v2911
        %v2913 = vshrl.u32 %v2876, 16
        %v2915 = vrot.slane %v2913, 4
        %v2916 = vor.u32 %v2915, %v2911
        %v2917 = vrot.slane %v2916, 4
        %v2919 = vshll.u32 %v2877, 16
        %v2921 = vrot.slane %v2919, 5
        %v2922 = vsel %vm1090, %v2917, %v2921
        %v2924 = vshrl.u32 %v2878, 16
        %v2926 = vrot.slane %v2924, 4
        %v2927 = vshll.u32 %v2878, 16
        %v2929 = vrot.slane %v2927, 5
        %v2930 = vor.u32 %v2926, %v2929
        %v2931 = vrot.slane %v2930, 4
        %v2933 = vshll.u32 %v2879, 16
        %v2935 = vrot.slane %v2933, 5
        %v2936 = vsel %vm1090, %v2931, %v2935
        %v2937 = vshrl.u32 %v2879, 16
        %v2939 = vrot.slane %v2937, 4
        %v2940 = vor.u32 %v2939, %v2935
        %v2941 = vrot.slane %v2940, 4
        %v2943 = vshll.u32 %v2880, 16
        %v2945 = vrot.slane %v2943, 5
        %v2946 = vsel %vm1090, %v2941, %v2945
        %v2948 = vshrl.u32 %v2881, 16
        %v2950 = vrot.slane %v2948, 4
        %v2951 = vshll.u32 %v2881, 16
        %v2953 = vrot.slane %v2951, 5
        %v2954 = vor.u32 %v2950, %v2953
        %v2955 = vrot.slane %v2954, 4
        %v2957 = vshll.u32 %v2882, 16
        %v2959 = vrot.slane %v2957, 5
        %v2960 = vsel %vm1090, %v2955, %v2959
        %v2961 = vshrl.u32 %v2882, 16
        %v2963 = vrot.slane %v2961, 4
        %v2964 = vor.u32 %v2963, %v2959
        %v2965 = vrot.slane %v2964, 4
        %v2967 = vshll.u32 %v2883, 16
        %v2969 = vrot.slane %v2967, 5
        %v2970 = vsel %vm1090, %v2965, %v2969
        %v2972 = vshrl.u32 %v2884, 16
        %v2974 = vrot.slane %v2972, 4
        %v2975 = vshll.u32 %v2884, 16
        %v2977 = vrot.slane %v2975, 5
        %v2978 = vor.u32 %v2974, %v2977
        %v2979 = vrot.slane %v2978, 4
        %v2981 = vshll.u32 %v2885, 16
        %v2983 = vrot.slane %v2981, 5
        %v2984 = vsel %vm1090, %v2979, %v2983
        %v2985 = vshrl.u32 %v2885, 16
        %v2987 = vrot.slane %v2985, 4
        %v2988 = vor.u32 %v2987, %v2983
        %v2989 = vrot.slane %v2988, 4
        %v2991 = vshll.u32 %v2886, 16
        %v2993 = vrot.slane %v2991, 5
        %v2994 = vsel %vm1090, %v2989, %v2993
        %v2996 = vshrl.u32 %v2887, 16
        %v2998 = vrot.slane %v2996, 4
        %v2999 = vshll.u32 %v2887, 16
        %v3001 = vrot.slane %v2999, 5
        %v3002 = vor.u32 %v2998, %v3001
        %v3003 = vrot.slane %v3002, 4
        %v3005 = vshll.u32 %v2888, 16
        %v3007 = vrot.slane %v3005, 5
        %v3008 = vsel %vm1090, %v3003, %v3007
        %v3009 = vshrl.u32 %v2888, 16
        %v3011 = vrot.slane %v3009, 4
        %v3012 = vor.u32 %v3011, %v3007
        %v3013 = vrot.slane %v3012, 4
        %v3015 = vshll.u32 %v2889, 16
        %v3017 = vrot.slane %v3015, 5
        %v3018 = vsel %vm1090, %v3013, %v3017
        %v3020 = vshrl.u32 %v2890, 16
        %v3022 = vrot.slane %v3020, 4
        %v3023 = vshll.u32 %v2890, 16
        %v3025 = vrot.slane %v3023, 5
        %v3026 = vor.u32 %v3022, %v3025
        %v3027 = vrot.slane %v3026, 4
        %v3029 = vshll.u32 %v2891, 16
        %v3031 = vrot.slane %v3029, 5
        %v3032 = vsel %vm1090, %v3027, %v3031
        %v3033 = vshrl.u32 %v2891, 16
        %v3035 = vrot.slane %v3033, 4
        %v3036 = vor.u32 %v3035, %v3031
        %v3037 = vrot.slane %v3036, 4
        %v3039 = vshll.u32 %v2892, 16
        %v3041 = vrot.slane %v3039, 5
        %v3042 = vsel %vm1090, %v3037, %v3041
        %v3044 = vshrl.u32 %v2893, 16
        %v3046 = vrot.slane %v3044, 4
        %v3047 = vshll.u32 %v2893, 16
        %v3049 = vrot.slane %v3047, 5
        %v3050 = vor.u32 %v3046, %v3049
        %v3051 = vrot.slane %v3050, 4
        %v3053 = vshll.u32 %v2894, 16
        %v3055 = vrot.slane %v3053, 5
        %v3056 = vsel %vm1090, %v3051, %v3055
        %v3057 = vshrl.u32 %v2894, 16
        %v3059 = vrot.slane %v3057, 4
        %v3060 = vor.u32 %v3059, %v3055
        %v3061 = vrot.slane %v3060, 4
        %v3063 = vshll.u32 %v2895, 16
        %v3065 = vrot.slane %v3063, 5
        %v3066 = vsel %vm1090, %v3061, %v3065
        %v3068 = vshrl.u32 %v2896, 16
        %v3070 = vrot.slane %v3068, 4
        %v3071 = vshll.u32 %v2896, 16
        %v3073 = vrot.slane %v3071, 5
        %v3074 = vor.u32 %v3070, %v3073
        %v3075 = vrot.slane %v3074, 4
        %v3077 = vshll.u32 %v2897, 16
        %v3079 = vrot.slane %v3077, 5
        %v3080 = vsel %vm1090, %v3075, %v3079
        %v3081 = vshrl.u32 %v2897, 16
        %v3083 = vrot.slane %v3081, 4
        %v3084 = vor.u32 %v3083, %v3079
        %v3085 = vrot.slane %v3084, 4
        %v3087 = vshll.u32 %v2898, 16
        %v3089 = vrot.slane %v3087, 5
        %v3090 = vsel %vm1090, %v3085, %v3089
        %v3091 = vld [vmem:[%s5 + $0x1c] sm:$0xf]
        %v3092 = vunpack.c.l.b16 %v2912
        %v3093 = vunpack.c.l.b16 %v2922
        %v3094 = vunpack.c.l.b16 %v2936
        %v3095 = vunpack.c.l.b16 %v2946
        %v3096 = vunpack.c.l.b16 %v2960
        %v3097 = vunpack.c.l.b16 %v2970
        %v3098 = vunpack.c.l.b16 %v2984
        %v3099 = vunpack.c.l.b16 %v2994
        %v3100 = vunpack.c.l.b16 %v3008
        %v3101 = vunpack.c.l.b16 %v3018
        %v3102 = vunpack.c.l.b16 %v3032
        %v3103 = vunpack.c.l.b16 %v3042
        %v3104 = vunpack.c.l.b16 %v3056
        %v3105 = vunpack.c.l.b16 %v3066
        %v3106 = vunpack.c.l.b16 %v3080
        %v3107 = vunpack.c.l.b16 %v3090
        %v3108 = vpack.c.b16 %v3093, %v3092
        %v3109 = vpack.c.b16 %v3095, %v3094
        %v3110 = vpack.c.b16 %v3097, %v3096
        %v3111 = vpack.c.b16 %v3099, %v3098
        %v3112 = vpack.c.b16 %v3101, %v3100
        %v3113 = vpack.c.b16 %v3103, %v3102
        %v3114 = vpack.c.b16 %v3105, %v3104
        %v3115 = vpack.c.b16 %v3107, %v3106
        %v3117 = vsel %vm1308, %v3108, 0
        %v3120 = vsel %vm1308, %v3109, 0
        %v3123 = vsel %vm1308, %v3110, 0
        %v3126 = vsel %vm1308, %v3111, 0
        %v3129 = vsel %vm1308, %v3112, 0
        %v3132 = vsel %vm1308, %v3113, 0
        %v3135 = vsel %vm1308, %v3114, 0
        %v3138 = vsel %vm1308, %v3115, 0
        %v3141 = vsel %vm1333, %v3091, 0
        %3143 = vmatprep.subr.bf16.mxu0 0
        %3144 = vmatpush1.bf16.msra.mxu0 0
        %3145 = vmatprep.subr.bf16.mxu0 0
        %3146 = vmatpush1.bf16.msra.mxu0 0
        %3147 = vmatprep.subr.bf16.mxu0 0
        %3148 = vmatpush1.bf16.msra.mxu0 0
        %3149 = vmatprep.subr.bf16.mxu0 0
        %3150 = vmatpush1.bf16.msra.mxu0 0
        %3151 = vmatprep.subr.bf16.mxu0 0
        %3152 = vmatpush1.bf16.msra.mxu0 0
        %3153 = vmatprep.subr.bf16.mxu0 0
        %3154 = vmatpush1.bf16.msra.mxu0 0
        %3155 = vmatprep.subr.bf16.mxu0 0
        %3156 = vmatpush1.bf16.msra.mxu0 0
        %3157 = vmatprep.subr.bf16.mxu0 0
        %3158 = vmatpush1.bf16.msra.mxu0 %v3141
        %3159 = vmatprep.subr.bf16.mxu0 0
        %3160 = vmatpush2.bf16.msra.mxu0 0
        %3161 = vmatprep.subr.bf16.mxu0 0
        %3162 = vmatpush2.bf16.msra.mxu0 0
        %3163 = vmatprep.subr.bf16.mxu0 0
        %3164 = vmatpush2.bf16.msra.mxu0 0
        %3165 = vmatprep.subr.bf16.mxu0 0
        %3166 = vmatpush2.bf16.msra.mxu0 0
        %3167 = vmatprep.subr.bf16.mxu0 0
        %3168 = vmatpush2.bf16.msra.mxu0 0
        %3169 = vmatprep.subr.bf16.mxu0 0
        %3170 = vmatpush2.bf16.msra.mxu0 0
        %3171 = vmatprep.subr.bf16.mxu0 0
        %3172 = vmatpush2.bf16.msra.mxu0 0
        %3173 = vmatprep.subr.bf16.mxu0 0
        %3174 = vmatpush2.bf16.msra.mxu0 0
        %3175 = vmatprep.mubr.bf16.mxu0 0
        %3176 = vmatmul.mubr.bf16.gmra.mxu0 %v3117
        %v3177 = vpop.f32.mrf.mxu0
        %v3178 = vadd.f32 0.0, %v3177
        %v3179 = vpop.f32.mrf.mxu0
        %v3180 = vpop.f32.mrf.mxu0
        %v3181 = vadd.f32 0.0, %v3180
        %v3182 = vpop.f32.mrf.mxu0
        %3183 = vmatprep.mubr.bf16.mxu0 0
        %3184 = vmatmul.mubr.bf16.gmra.mxu0 %v3120
        %v3185 = vpop.f32.mrf.mxu0
        %v3186 = vadd.f32 0.0, %v3185
        %v3187 = vpop.f32.mrf.mxu0
        %v3188 = vpop.f32.mrf.mxu0
        %v3189 = vadd.f32 0.0, %v3188
        %v3190 = vpop.f32.mrf.mxu0
        %3191 = vmatprep.mubr.bf16.mxu0 0
        %3192 = vmatmul.mubr.bf16.gmra.mxu0 %v3123
        %v3193 = vpop.f32.mrf.mxu0
        %v3194 = vadd.f32 0.0, %v3193
        %v3195 = vpop.f32.mrf.mxu0
        %v3196 = vpop.f32.mrf.mxu0
        %v3197 = vadd.f32 0.0, %v3196
        %v3198 = vpop.f32.mrf.mxu0
        %3199 = vmatprep.mubr.bf16.mxu0 0
        %3200 = vmatmul.mubr.bf16.gmra.mxu0 %v3126
        %v3201 = vpop.f32.mrf.mxu0
        %v3202 = vadd.f32 0.0, %v3201
        %v3203 = vpop.f32.mrf.mxu0
        %v3204 = vpop.f32.mrf.mxu0
        %v3205 = vadd.f32 0.0, %v3204
        %v3206 = vpop.f32.mrf.mxu0
        %3207 = vmatprep.mubr.bf16.mxu0 0
        %3208 = vmatmul.mubr.bf16.gmra.mxu0 %v3129
        %v3209 = vpop.f32.mrf.mxu0
        %v3210 = vadd.f32 0.0, %v3209
        %v3211 = vpop.f32.mrf.mxu0
        %v3212 = vpop.f32.mrf.mxu0
        %v3213 = vadd.f32 0.0, %v3212
        %v3214 = vpop.f32.mrf.mxu0
        %3215 = vmatprep.mubr.bf16.mxu0 0
        %3216 = vmatmul.mubr.bf16.gmra.mxu0 %v3132
        %v3217 = vpop.f32.mrf.mxu0
        %v3218 = vadd.f32 0.0, %v3217
        %v3219 = vpop.f32.mrf.mxu0
        %v3220 = vpop.f32.mrf.mxu0
        %v3221 = vadd.f32 0.0, %v3220
        %v3222 = vpop.f32.mrf.mxu0
        %3223 = vmatprep.mubr.bf16.mxu0 0
        %3224 = vmatmul.mubr.bf16.gmra.mxu0 %v3135
        %v3225 = vpop.f32.mrf.mxu0
        %v3226 = vadd.f32 0.0, %v3225
        %v3227 = vpop.f32.mrf.mxu0
        %v3228 = vpop.f32.mrf.mxu0
        %v3229 = vadd.f32 0.0, %v3228
        %v3230 = vpop.f32.mrf.mxu0
        %3231 = vmatprep.mubr.bf16.mxu0 0
        %3232 = vmatmul.mubr.bf16.gmra.mxu0 %v3138
        %v3233 = vpop.f32.mrf.mxu0
        %v3234 = vadd.f32 0.0, %v3233
        %v3235 = vpop.f32.mrf.mxu0
        %v3236 = vpop.f32.mrf.mxu0
        %v3237 = vadd.f32 0.0, %v3236
        %v3238 = vpop.f32.mrf.mxu0
        %3239 = vdwg.mxu0
        %v3240 = vadd.f32 %v2859, %v3178
        %v3241 = vadd.f32 %v2860, %v3181
        %v3242 = vadd.f32 %v2861, %v3186
        %v3243 = vadd.f32 %v2862, %v3189
        %v3244 = vadd.f32 %v2863, %v3194
        %v3245 = vadd.f32 %v2864, %v3197
        %v3246 = vadd.f32 %v2865, %v3202
        %v3247 = vadd.f32 %v2866, %v3205
        %v3248 = vadd.f32 %v2867, %v3210
        %v3249 = vadd.f32 %v2868, %v3213
        %v3250 = vadd.f32 %v2869, %v3218
        %v3251 = vadd.f32 %v2870, %v3221
        %v3252 = vadd.f32 %v2871, %v3226
        %v3253 = vadd.f32 %v2872, %v3229
        %v3254 = vadd.f32 %v2873, %v3234
        %v3255 = vadd.f32 %v2874, %v3237
        %v3256 = vld [vmem:[%s2677] sm:$0xe]
        %v3257 = vld [vmem:[%s2677 + $0xc] sm:$0xe]
        %v3258 = vld [vmem:[%s2677 + $0x18] sm:$0xe]
        %v3259 = vld [vmem:[%s2677 + $0x24] sm:$0xe]
        %v3260 = vld [vmem:[%s2677 + $0x30] sm:$0xe]
        %v3261 = vld [vmem:[%s2677 + $0x3c] sm:$0xe]
        %v3262 = vld [vmem:[%s2677 + $0x48] sm:$0xe]
        %v3263 = vld [vmem:[%s2677 + $0x54] sm:$0xe]
        %v3288 = vrot.slane %v3256, 5
        %v3289 = vrot.slane %v3288, 4
        %v3290 = vrot.slane %v2876, 5
        %v3291 = vsel %vm1624, %v3289, %v3290
        %v3292 = vrot.slane %v3290, 4
        %v3293 = vrot.slane %v2877, 5
        %v3294 = vsel %vm1624, %v3292, %v3293
        %v3295 = vrot.slane %v3257, 5
        %v3296 = vrot.slane %v3295, 4
        %v3297 = vrot.slane %v2879, 5
        %v3298 = vsel %vm1624, %v3296, %v3297
        %v3299 = vrot.slane %v3297, 4
        %v3300 = vrot.slane %v2880, 5
        %v3301 = vsel %vm1624, %v3299, %v3300
        %v3302 = vrot.slane %v3258, 5
        %v3303 = vrot.slane %v3302, 4
        %v3304 = vrot.slane %v2882, 5
        %v3305 = vsel %vm1624, %v3303, %v3304
        %v3306 = vrot.slane %v3304, 4
        %v3307 = vrot.slane %v2883, 5
        %v3308 = vsel %vm1624, %v3306, %v3307
        %v3309 = vrot.slane %v3259, 5
        %v3310 = vrot.slane %v3309, 4
        %v3311 = vrot.slane %v2885, 5
        %v3312 = vsel %vm1624, %v3310, %v3311
        %v3313 = vrot.slane %v3311, 4
        %v3314 = vrot.slane %v2886, 5
        %v3315 = vsel %vm1624, %v3313, %v3314
        %v3316 = vrot.slane %v3260, 5
        %v3317 = vrot.slane %v3316, 4
        %v3318 = vrot.slane %v2888, 5
        %v3319 = vsel %vm1624, %v3317, %v3318
        %v3320 = vrot.slane %v3318, 4
        %v3321 = vrot.slane %v2889, 5
        %v3322 = vsel %vm1624, %v3320, %v3321
        %v3323 = vrot.slane %v3261, 5
        %v3324 = vrot.slane %v3323, 4
        %v3325 = vrot.slane %v2891, 5
        %v3326 = vsel %vm1624, %v3324, %v3325
        %v3327 = vrot.slane %v3325, 4
        %v3328 = vrot.slane %v2892, 5
        %v3329 = vsel %vm1624, %v3327, %v3328
        %v3330 = vrot.slane %v3262, 5
        %v3331 = vrot.slane %v3330, 4
        %v3332 = vrot.slane %v2894, 5
        %v3333 = vsel %vm1624, %v3331, %v3332
        %v3334 = vrot.slane %v3332, 4
        %v3335 = vrot.slane %v2895, 5
        %v3336 = vsel %vm1624, %v3334, %v3335
        %v3337 = vrot.slane %v3263, 5
        %v3338 = vrot.slane %v3337, 4
        %v3339 = vrot.slane %v2897, 5
        %v3340 = vsel %vm1624, %v3338, %v3339
        %v3341 = vrot.slane %v3339, 4
        %v3342 = vrot.slane %v2898, 5
        %v3343 = vsel %vm1624, %v3341, %v3342
        %v3344 = vld [vmem:[%s5 + $0x20] sm:$0xf]
        %v3345 = vunpack.c.l.b16 %v3291
        %v3346 = vunpack.c.l.b16 %v3294
        %v3347 = vunpack.c.l.b16 %v3298
        %v3348 = vunpack.c.l.b16 %v3301
        %v3349 = vunpack.c.l.b16 %v3305
        %v3350 = vunpack.c.l.b16 %v3308
        %v3351 = vunpack.c.l.b16 %v3312
        %v3352 = vunpack.c.l.b16 %v3315
        %v3353 = vunpack.c.l.b16 %v3319
        %v3354 = vunpack.c.l.b16 %v3322
        %v3355 = vunpack.c.l.b16 %v3326
        %v3356 = vunpack.c.l.b16 %v3329
        %v3357 = vunpack.c.l.b16 %v3333
        %v3358 = vunpack.c.l.b16 %v3336
        %v3359 = vunpack.c.l.b16 %v3340
        %v3360 = vunpack.c.l.b16 %v3343
        %v3361 = vpack.c.b16 %v3346, %v3345
        %v3362 = vpack.c.b16 %v3348, %v3347
        %v3363 = vpack.c.b16 %v3350, %v3349
        %v3364 = vpack.c.b16 %v3352, %v3351
        %v3365 = vpack.c.b16 %v3354, %v3353
        %v3366 = vpack.c.b16 %v3356, %v3355
        %v3367 = vpack.c.b16 %v3358, %v3357
        %v3368 = vpack.c.b16 %v3360, %v3359
        %v3370 = vsel %vm1308, %v3361, 0
        %v3373 = vsel %vm1308, %v3362, 0
        %v3376 = vsel %vm1308, %v3363, 0
        %v3379 = vsel %vm1308, %v3364, 0
        %v3382 = vsel %vm1308, %v3365, 0
        %v3385 = vsel %vm1308, %v3366, 0
        %v3388 = vsel %vm1308, %v3367, 0
        %v3391 = vsel %vm1308, %v3368, 0
        %v3394 = vsel %vm1333, %v3344, 0
        %3396 = vmatprep.subr.bf16.mxu0 0
        %3397 = vmatpush1.bf16.msra.mxu0 0
        %3398 = vmatprep.subr.bf16.mxu0 0
        %3399 = vmatpush1.bf16.msra.mxu0 0
        %3400 = vmatprep.subr.bf16.mxu0 0
        %3401 = vmatpush1.bf16.msra.mxu0 0
        %3402 = vmatprep.subr.bf16.mxu0 0
        %3403 = vmatpush1.bf16.msra.mxu0 0
        %3404 = vmatprep.subr.bf16.mxu0 0
        %3405 = vmatpush1.bf16.msra.mxu0 0
        %3406 = vmatprep.subr.bf16.mxu0 0
        %3407 = vmatpush1.bf16.msra.mxu0 0
        %3408 = vmatprep.subr.bf16.mxu0 0
        %3409 = vmatpush1.bf16.msra.mxu0 0
        %3410 = vmatprep.subr.bf16.mxu0 0
        %3411 = vmatpush1.bf16.msra.mxu0 %v3394
        %3412 = vmatprep.subr.bf16.mxu0 0
        %3413 = vmatpush2.bf16.msra.mxu0 0
        %3414 = vmatprep.subr.bf16.mxu0 0
        %3415 = vmatpush2.bf16.msra.mxu0 0
        %3416 = vmatprep.subr.bf16.mxu0 0
        %3417 = vmatpush2.bf16.msra.mxu0 0
        %3418 = vmatprep.subr.bf16.mxu0 0
        %3419 = vmatpush2.bf16.msra.mxu0 0
        %3420 = vmatprep.subr.bf16.mxu0 0
        %3421 = vmatpush2.bf16.msra.mxu0 0
        %3422 = vmatprep.subr.bf16.mxu0 0
        %3423 = vmatpush2.bf16.msra.mxu0 0
        %3424 = vmatprep.subr.bf16.mxu0 0
        %3425 = vmatpush2.bf16.msra.mxu0 0
        %3426 = vmatprep.subr.bf16.mxu0 0
        %3427 = vmatpush2.bf16.msra.mxu0 0
        %3428 = vmatprep.mubr.bf16.mxu0 0
        %3429 = vmatmul.mubr.bf16.gmra.mxu0 %v3370
        %v3430 = vpop.f32.mrf.mxu0
        %v3431 = vadd.f32 0.0, %v3430
        %v3432 = vpop.f32.mrf.mxu0
        %v3433 = vpop.f32.mrf.mxu0
        %v3434 = vadd.f32 0.0, %v3433
        %v3435 = vpop.f32.mrf.mxu0
        %3436 = vmatprep.mubr.bf16.mxu0 0
        %3437 = vmatmul.mubr.bf16.gmra.mxu0 %v3373
        %v3438 = vpop.f32.mrf.mxu0
        %v3439 = vadd.f32 0.0, %v3438
        %v3440 = vpop.f32.mrf.mxu0
        %v3441 = vpop.f32.mrf.mxu0
        %v3442 = vadd.f32 0.0, %v3441
        %v3443 = vpop.f32.mrf.mxu0
        %3444 = vmatprep.mubr.bf16.mxu0 0
        %3445 = vmatmul.mubr.bf16.gmra.mxu0 %v3376
        %v3446 = vpop.f32.mrf.mxu0
        %v3447 = vadd.f32 0.0, %v3446
        %v3448 = vpop.f32.mrf.mxu0
        %v3449 = vpop.f32.mrf.mxu0
        %v3450 = vadd.f32 0.0, %v3449
        %v3451 = vpop.f32.mrf.mxu0
        %3452 = vmatprep.mubr.bf16.mxu0 0
        %3453 = vmatmul.mubr.bf16.gmra.mxu0 %v3379
        %v3454 = vpop.f32.mrf.mxu0
        %v3455 = vadd.f32 0.0, %v3454
        %v3456 = vpop.f32.mrf.mxu0
        %v3457 = vpop.f32.mrf.mxu0
        %v3458 = vadd.f32 0.0, %v3457
        %v3459 = vpop.f32.mrf.mxu0
        %3460 = vmatprep.mubr.bf16.mxu0 0
        %3461 = vmatmul.mubr.bf16.gmra.mxu0 %v3382
        %v3462 = vpop.f32.mrf.mxu0
        %v3463 = vadd.f32 0.0, %v3462
        %v3464 = vpop.f32.mrf.mxu0
        %v3465 = vpop.f32.mrf.mxu0
        %v3466 = vadd.f32 0.0, %v3465
        %v3467 = vpop.f32.mrf.mxu0
        %3468 = vmatprep.mubr.bf16.mxu0 0
        %3469 = vmatmul.mubr.bf16.gmra.mxu0 %v3385
        %v3470 = vpop.f32.mrf.mxu0
        %v3471 = vadd.f32 0.0, %v3470
        %v3472 = vpop.f32.mrf.mxu0
        %v3473 = vpop.f32.mrf.mxu0
        %v3474 = vadd.f32 0.0, %v3473
        %v3475 = vpop.f32.mrf.mxu0
        %3476 = vmatprep.mubr.bf16.mxu0 0
        %3477 = vmatmul.mubr.bf16.gmra.mxu0 %v3388
        %v3478 = vpop.f32.mrf.mxu0
        %v3479 = vadd.f32 0.0, %v3478
        %v3480 = vpop.f32.mrf.mxu0
        %v3481 = vpop.f32.mrf.mxu0
        %v3482 = vadd.f32 0.0, %v3481
        %v3483 = vpop.f32.mrf.mxu0
        %3484 = vmatprep.mubr.bf16.mxu0 0
        %3485 = vmatmul.mubr.bf16.gmra.mxu0 %v3391
        %v3486 = vpop.f32.mrf.mxu0
        %v3487 = vadd.f32 0.0, %v3486
        %v3488 = vpop.f32.mrf.mxu0
        %v3489 = vpop.f32.mrf.mxu0
        %v3490 = vadd.f32 0.0, %v3489
        %v3491 = vpop.f32.mrf.mxu0
        %3492 = vdwg.mxu0
        %v3493 = vadd.f32 %v3240, %v3431
        %v3494 = vadd.f32 %v3241, %v3434
        %v3495 = vadd.f32 %v3242, %v3439
        %v3496 = vadd.f32 %v3243, %v3442
        %v3497 = vadd.f32 %v3244, %v3447
        %v3498 = vadd.f32 %v3245, %v3450
        %v3499 = vadd.f32 %v3246, %v3455
        %v3500 = vadd.f32 %v3247, %v3458
        %v3501 = vadd.f32 %v3248, %v3463
        %v3502 = vadd.f32 %v3249, %v3466
        %v3503 = vadd.f32 %v3250, %v3471
        %v3504 = vadd.f32 %v3251, %v3474
        %v3505 = vadd.f32 %v3252, %v3479
        %v3506 = vadd.f32 %v3253, %v3482
        %v3507 = vadd.f32 %v3254, %v3487
        %v3508 = vadd.f32 %v3255, %v3490
        %v3509 = vld [vmem:[%s6] sm:$0x1]
        %v3511 = vlaneseq
        %v3512 = vshrl.u32 %v3511, 7
        %v3513 = vsub.s32 0, %v3512
        %v3514 = vrot.slane %v3509, %v3513
        %v3516 = vmul.f32 %v3493, %v3514
        %v3517 = vmul.f32 %v3494, %v3514
        %v3518 = vmul.f32 %v3495, %v3514
        %v3519 = vmul.f32 %v3496, %v3514
        %v3520 = vmul.f32 %v3497, %v3514
        %v3521 = vmul.f32 %v3498, %v3514
        %v3522 = vmul.f32 %v3499, %v3514
        %v3523 = vmul.f32 %v3500, %v3514
        %v3524 = vmul.f32 %v3501, %v3514
        %v3525 = vmul.f32 %v3502, %v3514
        %v3526 = vmul.f32 %v3503, %v3514
        %v3527 = vmul.f32 %v3504, %v3514
        %v3528 = vmul.f32 %v3505, %v3514
        %v3529 = vmul.f32 %v3506, %v3514
        %v3530 = vmul.f32 %v3507, %v3514
        %v3531 = vmul.f32 %v3508, %v3514
        %v3532 = vld [vmem:[%s7] sm:$0x1]
        %v3534 = vlaneseq
        %v3535 = vshrl.u32 %v3534, 7
        %v3536 = vsub.s32 0, %v3535
        %v3537 = vrot.slane %v3532, %v3536
        %v3539 = vadd.f32 %v3516, %v3537
        %v3540 = vadd.f32 %v3517, %v3537
        %v3541 = vadd.f32 %v3518, %v3537
        %v3542 = vadd.f32 %v3519, %v3537
        %v3543 = vadd.f32 %v3520, %v3537
        %v3544 = vadd.f32 %v3521, %v3537
        %v3545 = vadd.f32 %v3522, %v3537
        %v3546 = vadd.f32 %v3523, %v3537
        %v3547 = vadd.f32 %v3524, %v3537
        %v3548 = vadd.f32 %v3525, %v3537
        %v3549 = vadd.f32 %v3526, %v3537
        %v3550 = vadd.f32 %v3527, %v3537
        %v3551 = vadd.f32 %v3528, %v3537
        %v3552 = vadd.f32 %v3529, %v3537
        %v3553 = vadd.f32 %v3530, %v3537
        %v3554 = vadd.f32 %v3531, %v3537
        %v3555 = vmax.f32 %v3539, 0.0
        %v3556 = vmax.f32 %v3540, 0.0
        %v3557 = vmax.f32 %v3541, 0.0
        %v3558 = vmax.f32 %v3542, 0.0
        %v3559 = vmax.f32 %v3543, 0.0
        %v3560 = vmax.f32 %v3544, 0.0
        %v3561 = vmax.f32 %v3545, 0.0
        %v3562 = vmax.f32 %v3546, 0.0
        %v3563 = vmax.f32 %v3547, 0.0
        %v3564 = vmax.f32 %v3548, 0.0
        %v3565 = vmax.f32 %v3549, 0.0
        %v3566 = vmax.f32 %v3550, 0.0
        %v3567 = vmax.f32 %v3551, 0.0
        %v3568 = vmax.f32 %v3552, 0.0
        %v3569 = vmax.f32 %v3553, 0.0
        %v3570 = vmax.f32 %v3554, 0.0
        %v3571 = vpack.c.bf16 %v3556, %v3555
        %v3572 = vpack.c.bf16 %v3558, %v3557
        %v3573 = vpack.c.bf16 %v3560, %v3559
        %v3574 = vpack.c.bf16 %v3562, %v3561
        %v3575 = vpack.c.bf16 %v3564, %v3563
        %v3576 = vpack.c.bf16 %v3566, %v3565
        %v3577 = vpack.c.bf16 %v3568, %v3567
        %v3578 = vpack.c.bf16 %v3570, %v3569
        %v3579 = vld [vmem:[%s8] sm:$0x3]
        %v3580 = vld [vmem:[%s9] sm:$0xf]
        %3582 = vset.pattern.permute.xlu0 0
        %3583 = vperm.xlu0 %3582, %v3580
        %v3584 = vpop.permute.xlu0 %3583
        %vm3586 = vcmask 130048
        %v3588 = vsel %vm3586, %v3579, 0
        %v3591 = vsel %vm3586, %v3571, 0
        %v3594 = vsel %vm3586, %v3572, 0
        %v3597 = vsel %vm3586, %v3573, 0
        %v3600 = vsel %vm3586, %v3574, 0
        %v3603 = vsel %vm3586, %v3575, 0
        %v3606 = vsel %vm3586, %v3576, 0
        %v3609 = vsel %vm3586, %v3577, 0
        %v3612 = vsel %vm3586, %v3578, 0
        %3614 = vmatprep.subr.bf16.mxu0 0
        %3615 = vmatpush1.bf16.xpose.msra.mxu0 %v3612
        %3616 = vmatprep.subr.bf16.mxu0 0
        %3617 = vmatpush1.bf16.xpose.msra.mxu0 %v3609
        %3618 = vmatprep.subr.bf16.mxu0 0
        %3619 = vmatpush1.bf16.xpose.msra.mxu0 %v3606
        %3620 = vmatprep.subr.bf16.mxu0 0
        %3621 = vmatpush1.bf16.xpose.msra.mxu0 %v3603
        %3622 = vmatprep.subr.bf16.mxu0 0
        %3623 = vmatpush1.bf16.xpose.msra.mxu0 %v3600
        %3624 = vmatprep.subr.bf16.mxu0 0
        %3625 = vmatpush1.bf16.xpose.msra.mxu0 %v3597
        %3626 = vmatprep.subr.bf16.mxu0 0
        %3627 = vmatpush1.bf16.xpose.msra.mxu0 %v3594
        %3628 = vmatprep.subr.bf16.mxu0 0
        %3629 = vmatpush1.bf16.xpose.msra.mxu0 %v3591
        %3630 = vmatprep.subr.bf16.mxu0 0
        %3631 = vmatpush2.bf16.xpose.msra.mxu0 0
        %3632 = vmatprep.subr.bf16.mxu0 0
        %3633 = vmatpush2.bf16.xpose.msra.mxu0 0
        %3634 = vmatprep.subr.bf16.mxu0 0
        %3635 = vmatpush2.bf16.xpose.msra.mxu0 0
        %3636 = vmatprep.subr.bf16.mxu0 0
        %3637 = vmatpush2.bf16.xpose.msra.mxu0 0
        %3638 = vmatprep.subr.bf16.mxu0 0
        %3639 = vmatpush2.bf16.xpose.msra.mxu0 0
        %3640 = vmatprep.subr.bf16.mxu0 0
        %3641 = vmatpush2.bf16.xpose.msra.mxu0 0
        %3642 = vmatprep.subr.bf16.mxu0 0
        %3643 = vmatpush2.bf16.xpose.msra.mxu0 0
        %3644 = vmatprep.subr.bf16.mxu0 0
        %3645 = vmatpush2.bf16.xpose.msra.mxu0 0
        %3646 = vmatprep.mubr.bf16.mxu0 0
        %3647 = vmatmul.mubr.bf16.gmra.mxu0 %v3588
        %v3648 = vpop.f32.mrf.mxu0
        %v3649 = vadd.f32 %v3584, %v3648
        %v3650 = vpop.f32.mrf.mxu0
        %v3651 = vpop.f32.mrf.mxu0
        %v3652 = vpop.f32.mrf.mxu0
        %3653 = vdwg.mxu0
        %3654 = vst [vmem:[%s469] sm:$0xf] %v3649
        %s3655 = sand.u32 %s293, 1
        %s3656 = scalar_lea.sflag [#allocation4], %s3655
        %s3657 = sand.u32 %s293, 1
        %s3658 = smul.addr %s3657, 4
        %s3659 = scalar_lea.vmem [#allocation3], %s3658
        // Predicated region
        $region77: #{tpu_custom_call.1} parent=59 // pred_check
          %p3660 = pneg %p303
        $region78: #{tpu_custom_call.1} parent=59 // pred_check_branch
          %3662 = sbr.rel (%p3660) target = $region80
        $region79: #{tpu_custom_call.1} parent=59 // pred_region
          %s3664 = ssub.s32 64, 64
          %3665 = vsyncadd %s3656, %s3664
          %s3666 = smul.addr %s28, 2
          %s3667 = sadd.s32 %s29, %s3666
          %s3668 = smul.addr %s3667, 64
          %s3669 = scalar_lea.hbm %s10, %s3668
          %s3671 = sshll.u32 %s3659, 4
          %s3672 = int_to_ptr.vmem [resolvable:$true] %s3671
          %3674 = dma.vmem_to_hbm [thread:$0]  %s3672, 64, %s3669, %s3656
        $region80: #{tpu_custom_call.1} parent=59 // pred_fallthru
          _
      $region60: #{tpu_custom_call.1} parent=5 // pred_fallthru
        _
      %p3675 = scmp.le.s32.totalorder 2, %s19
      // Predicated region
      $region81: #{tpu_custom_call.1} parent=5 // pred_check
        %p3676 = pneg %p3675
      $region82: #{tpu_custom_call.1} parent=5 // pred_check_branch
        %3678 = sbr.rel (%p3676) target = $region84
      $region83: #{tpu_custom_call.1} parent=5 // pred_region
        %s3679 = ssub.s32 %s19, 2
        // Predicated region
        $region85: #{tpu_custom_call.1} parent=83 // pred_check
          %p3680 = pneg %p309
        $region86: #{tpu_custom_call.1} parent=83 // pred_check_branch
          %3682 = sbr.rel (%p3680) target = $region88
        $region87: #{tpu_custom_call.1} parent=83 // pred_region
          %s3683 = sand.u32 %s294, 1
          %s3684 = scalar_lea.sflag [#allocation4], %s3683
          %s3685 = sand.u32 %s294, 1
          %s3686 = smul.addr %s3685, 4
          %s3687 = scalar_lea.vmem [#allocation3], %s3686
          %3688 = dma.done %s3684, 64
        $region88: #{tpu_custom_call.1} parent=83 // pred_fallthru
          _
      $region84: #{tpu_custom_call.1} parent=5 // pred_fallthru
        _
    $region6: #{tpu_custom_call.1} parent=1 // loop_footer
      %s23 = sadd.s32 1, %s19
    $region7: #{tpu_custom_call.1} parent=1 // loop_footer_branch
      %18 = sbr.rel target = $region3
    $region8: #{tpu_custom_call.1} parent=1 // loop_exit
      _
    %3689 = vsyncpa [#allocation4], 1
    %s3690 = scalar_lea.sflag [#allocation4], 1
    %3691 = vsyncpa %s3690, 1

</llo_original>
